<compile_context>
chip_gen: v7x
topology: tpu7x:2x2x1
jax: 0.10.0
libtpu: 0.0.40
codegen_flags: <defaults>
</compile_context>

<pallas_src>
import functools

import jax
import jax.numpy as jnp
import numpy as np
from jax.experimental import pallas as pl
from jax.experimental.pallas import tpu as pltpu

RES_LAYERS = 4
FUSION_DIM = 256
PRED0_DIM = 256
PRED1_DIM = 64
OUT_CH = 2
OUT_CH_PAD = 8        # sublane-aligned output channel count


# ------------------------------ fused kernel -------------------------------- #

def _gcn_fused_kernel(n_actual,
                      a_ref, x_ref,
                      hw_ref, hb_ref,
                      rw_ref, rb_ref,
                      fpw_ref, fb_ref,
                      p0g_ref, p0b_ref,
                      p1w_ref, p1b_ref,
                      p2w_ref, p2b_ref,
                      o_ref,
                      state_ref):
    """One batch slice.  Everything channels-first: (C, N_pad).  MXU operands are
    bf16; accumulation and the elementwise epilogue are f32."""
    bf16 = jnp.bfloat16
    S = hw_ref.shape[0]
    a = a_ref[...]                        # (Np, Np) bf16, symmetric normalized adjacency

    def aggregate(h_bf):                  # A_hat @ H  ==  Hcf @ A_hat (A symmetric)
        return jnp.dot(h_bf, a, preferred_element_type=jnp.float32)

    # GraphSAGE head (dropout == identity in eval mode).  Aggregate first: F < S, so
    # the dominant N^2 matmul runs with K=F instead of K=S.
    t = aggregate(x_ref[...])                                              # (F, Np) f32
    h = jnp.dot(hw_ref[...], t.astype(bf16),
                preferred_element_type=jnp.float32)                        # (S, Np)
    h = jnp.maximum(h + hb_ref[...], 0.0)
    state_ref[pl.ds(0, S), :] = h.astype(bf16)

    # Residual GraphSAGE layers; each writes straight into its slice of the
    # concatenated state buffer (no concat copies, no HBM writebacks).
    for i in range(RES_LAYERS):
        wh = jnp.dot(rw_ref[i], h.astype(bf16),
                     preferred_element_type=jnp.float32)                   # (S, Np)
        y = aggregate(wh.astype(bf16))
        h = jnp.maximum(y + rb_ref[i], 0.0) + h
        state_ref[pl.ds((i + 1) * S, S), :] = h.astype(bf16)

    state = state_ref[...]                                                 # (cat, Np) bf16

    # fusion conv1d (k=1) and prediction[0]'s state-part share the same (cat, Np)
    # RHS -> one fused (2*FUSION_DIM, cat) @ (cat, Np) matmul, split by rows.
    big = jnp.dot(fpw_ref[...], state, preferred_element_type=jnp.float32)  # (512, Np)

    fus = big[:FUSION_DIM, :] + fb_ref[...]
    if n_actual < fus.shape[1]:
        # padded node columns hold ReLU(bias) garbage -> mask before the global max
        col = jax.lax.broadcasted_iota(jnp.int32, fus.shape, 1)
        fus = jnp.where(col < n_actual, fus, jnp.finfo(jnp.float32).min)
    g = jnp.max(fus, axis=1, keepdims=True)                                # (256, 1)

    # prediction[0]: g is node-constant, so W_g @ g is a single per-batch bias column.
    gb = jnp.dot(p0g_ref[...], g.astype(bf16),
                 preferred_element_type=jnp.float32)                       # (256, 1)
    y = jnp.maximum(big[FUSION_DIM:, :] + gb + p0b_ref[...], 0.0)          # (256, Np)

    # prediction[1] & [2] (output channels zero-padded 2 -> 8 for full-sublane stores)
    y = jnp.maximum(
        jnp.dot(p1w_ref[...], y.astype(bf16),
                preferred_element_type=jnp.float32) + p1b_ref[...], 0.0)   # (64, Np)
    o_ref[...] = jnp.dot(p2w_ref[...], y.astype(bf16),
                         preferred_element_type=jnp.float32) + p2b_ref[...]


# ------------------------------- wrapper ------------------------------------ #

def gcn_forward(x, a_hat, params, *, lane_multiple=128, single_buffer_invariants=True):
    """x: (B, feature_dim, N) channels-first; a_hat: (N, N) symmetric normalized
    adjacency (D^-1/2 (A+I) D^-1/2, i.e. DGL norm='both') -> (B, 2, N)."""
    B, F, N = x.shape
    S = params["head_w"].shape[0]
    cat = S * (RES_LAYERS + 1)
    Np = ((N + lane_multiple - 1) // lane_multiple) * lane_multiple
    bf16 = jnp.bfloat16

    # lane-dense node padding (zeros never reach real columns through A_hat)
    a_p = jnp.pad(a_hat.astype(bf16), ((0, Np - N), (0, Np - N)))
    x_p = jnp.pad(x.astype(bf16), ((0, 0), (0, 0), (0, Np - N)))

    # host-side weight packing (bf16 MXU operands, f32 biases)
    fp_w = jnp.concatenate([params["fusion_w"], params["p0_ws"]], axis=0).astype(bf16)
    p2_w = jnp.pad(params["p2_w"], ((0, OUT_CH_PAD - OUT_CH), (0, 0))).astype(bf16)
    p2_b = jnp.pad(params["p2_b"], ((0, OUT_CH_PAD - OUT_CH), (0, 0)))

    def invariant(shape):
        # Batch-invariant operand: constant index_map -> single-buffer it.
        idx = lambda b: (0,) * len(shape)
        if single_buffer_invariants:
            return pl.BlockSpec(shape, idx, pipeline_mode=pl.Buffered(1))
        return pl.BlockSpec(shape, idx)

    def per_batch(c, n):   # (B, c, n) -> kernel sees one (c, n) slice per grid step
        return pl.BlockSpec((pl.Squeezed(), c, n), lambda b: (b, 0, 0))

    in_specs = [
        invariant((Np, Np)),                                              # a_hat
        per_batch(F, Np),                                                 # x
        invariant((S, F)), invariant((S, 1)),                             # head
        invariant((RES_LAYERS, S, S)), invariant((RES_LAYERS, S, 1)),     # residual stack
        invariant((2 * FUSION_DIM, cat)), invariant((FUSION_DIM, 1)),     # fusion | pred0.state
        invariant((PRED0_DIM, FUSION_DIM)), invariant((PRED0_DIM, 1)),    # pred0 (g part, bias)
        invariant((PRED1_DIM, PRED0_DIM)), invariant((PRED1_DIM, 1)),     # pred1
        invariant((OUT_CH_PAD, PRED1_DIM)), invariant((OUT_CH_PAD, 1)),   # pred2 (padded)
    ]

    # rough cost / VMEM sizing
    flops = 2 * B * (F * Np * Np + S * F * Np
                     + RES_LAYERS * (S * S * Np + S * Np * Np)
                     + 2 * FUSION_DIM * cat * Np
                     + PRED0_DIM * FUSION_DIM
                     + PRED1_DIM * PRED0_DIM * Np + OUT_CH_PAD * PRED1_DIM * Np)
    weight_bytes = 2 * (S * F + RES_LAYERS * S * S + 2 * FUSION_DIM * cat
                        + PRED0_DIM * FUSION_DIM + PRED1_DIM * PRED0_DIM
                        + OUT_CH_PAD * PRED1_DIM)
    bias_bytes = 4 * (S + RES_LAYERS * S + FUSION_DIM + PRED0_DIM + PRED1_DIM + OUT_CH_PAD)
    bytes_accessed = (2 * Np * Np + 2 * B * F * Np + 4 * B * OUT_CH_PAD * Np
                      + weight_bytes + bias_bytes)
    inv_bufs = 1 if single_buffer_invariants else 2
    vmem_est = (inv_bufs * (2 * Np * Np + weight_bytes + bias_bytes)
                + 2 * 2 * F * Np             # x block, double-buffered, bf16
                + 2 * 4 * OUT_CH_PAD * Np    # out block, double-buffered, f32
                + 2 * cat * Np               # state scratch, bf16
                + 4 * (2 * FUSION_DIM + 2 * cat) * Np)   # f32 intermediates headroom
    # 64 MiB cap keeps the limit legal on v7x; beyond that, row-tile A_hat instead.
    vmem_limit = int(min(64 << 20, max(32 << 20, 2 * vmem_est)))

    out = pl.pallas_call(
        functools.partial(_gcn_fused_kernel, N),
        out_shape=jax.ShapeDtypeStruct((B, OUT_CH_PAD, Np), jnp.float32),
        grid=(B,),
        in_specs=in_specs,
        out_specs=per_batch(OUT_CH_PAD, Np),
        scratch_shapes=[pltpu.VMEM((cat, Np), bf16)],
        compiler_params=pltpu.CompilerParams(
            dimension_semantics=("parallel",),      # batches independent (feeds v7x's 2 TCs)
            vmem_limit_bytes=vmem_limit),
        cost_estimate=pl.CostEstimate(flops=int(flops), transcendentals=0,
                                      bytes_accessed=int(bytes_accessed)),
    )(a_p, x_p,
      params["head_w"].astype(bf16), params["head_b"],
      params["res_w"].astype(bf16), params["res_b"],
      fp_w, params["fusion_b"],
      params["p0_wg"].astype(bf16), params["p0_b"],
      params["p1_w"].astype(bf16), params["p1_b"],
      p2_w, p2_b)

    return out[:, :OUT_CH, :N]


# ------------------------------ params / reference -------------------------- #

def init_params(key, feature_dim, state_dim):
    ks = iter(jax.random.split(key, 32))

    def lin(cout, cin):
        w = 0.1 * jax.random.normal(next(ks), (cout, cin), jnp.float32)
        b = 0.1 * jax.random.normal(next(ks), (cout, 1), jnp.float32)
        return w, b

    p = {}
    p["head_w"], p["head_b"] = lin(state_dim, feature_dim)
    rw, rb = [], []
    for _ in range(RES_LAYERS):
        w, b = lin(state_dim, state_dim)
        rw.append(w)
        rb.append(b)
    p["res_w"] = jnp.stack(rw)          # (4, S, S)
    p["res_b"] = jnp.stack(rb)          # (4, S, 1)
    cat = state_dim * (RES_LAYERS + 1)
    p["fusion_w"], p["fusion_b"] = lin(FUSION_DIM, cat)
    p["p0_wg"] = 0.1 * jax.random.normal(next(ks), (PRED0_DIM, FUSION_DIM), jnp.float32)
    p["p0_ws"] = 0.1 * jax.random.normal(next(ks), (PRED0_DIM, cat), jnp.float32)
    p["p0_b"] = 0.1 * jax.random.normal(next(ks), (PRED0_DIM, 1), jnp.float32)
    p["p1_w"], p["p1_b"] = lin(PRED1_DIM, PRED0_DIM)
    p["p2_w"], p["p2_b"] = lin(OUT_CH, PRED1_DIM)
    return p


def reference_forward(x, a_hat, params, mxu_dtype=jnp.bfloat16):
    """Pure-JAX reference mirroring the PyTorch GCN forward (eval mode), channels
    first.  mxu_dtype=bf16 mirrors the kernel's MXU operand precision (accumulation
    stays f32); pass jnp.float32 for the exact full-f32 PyTorch numerics."""
    f32 = jnp.float32
    c = lambda t: t.astype(mxu_dtype)
    A = c(a_hat)

    def agg(h):     # A_hat @ H   (channels-first: H @ A_hat^T)
        return jnp.einsum("bck,jk->bcj", c(h), A, preferred_element_type=f32)

    def mix(w, h):  # W @ H       (GraphConv weight / conv1d with kernel size 1)
        return jnp.einsum("oc,bcn->bon", c(w), c(h), preferred_element_type=f32)

    b = lambda v: v.reshape(1, -1, 1)

    # head GraphSAGE (aggregate-then-mix, as in the kernel; identical in exact arith.)
    h = jnp.maximum(mix(params["head_w"], agg(x)) + b(params["head_b"]), 0.0)
    states = [h]
    for i in range(RES_LAYERS):
        h = jnp.maximum(agg(mix(params["res_w"][i], h)) + b(params["res_b"][i]), 0.0) + h
        states.append(h)
    state = jnp.concatenate(states, axis=1)                     # (B, cat, N)

    fp_w = jnp.concatenate([params["fusion_w"], params["p0_ws"]], axis=0)
    big = mix(fp_w, state)                                      # (B, 512, N)
    fus = big[:, :FUSION_DIM, :] + b(params["fusion_b"])
    g = jnp.max(fus, axis=2, keepdims=True)                     # (B, 256, 1)
    gb = jnp.einsum("oc,bcx->box", c(params["p0_wg"]), c(g), preferred_element_type=f32)
    y = jnp.maximum(big[:, FUSION_DIM:, :] + gb + b(params["p0_b"]), 0.0)
    y = jnp.maximum(mix(params["p1_w"], y) + b(params["p1_b"]), 0.0)
    return mix(params["p2_w"], y) + b(params["p2_b"])           # (B, 2, N)


# --------------------------------- main -------------------------------------- #

if __name__ == "__main__":
    B, N = 2, 16          # batch (slices), graph nodes
    feature_dim = 8       # input feature dim
    state_dim = 16        # GCN state dim

    key = jax.random.PRNGKey(0)
    kx, kg, kp = jax.random.split(key, 3)

    # input x in PyTorch layout (B, feature_dim, N)
    x = jax.random.normal(kx, (B, feature_dim, N), jnp.float32)

    # deterministic synthetic graph -> symmetric adjacency, normalized D^-1/2 (A+I) D^-1/2
    adj = (jax.random.uniform(kg, (N, N)) < 0.3).astype(jnp.float32)
    adj = jnp.maximum(adj, adj.T)
    adj = adj + jnp.eye(N, dtype=jnp.float32)
    deg = jnp.sum(adj, axis=1)
    d_inv_sqrt = 1.0 / jnp.sqrt(deg)
    a_hat = adj * d_inv_sqrt[:, None] * d_inv_sqrt[None, :]

    params = init_params(kp, feature_dim, state_dim)

    try:
        fwd = jax.jit(gcn_forward)
        out = jax.block_until_ready(fwd(x, a_hat, params))
    except Exception:
        # Fallback if this Pallas build rejects single-buffered (pl.Buffered(1))
        # invariant operands: retry with default double-buffering (perf-only change).
        fwd = jax.jit(functools.partial(gcn_forward, single_buffer_invariants=False))
        out = jax.block_until_ready(fwd(x, a_hat, params))

    # Reference mirrors the kernel's bf16 MXU operands (f32 accumulation); pure f32
    # PyTorch numerics differ from this only by bf16 operand rounding.
    ref = reference_forward(x, a_hat, params)
    np.testing.assert_allclose(np.asarray(out), np.asarray(ref), rtol=5e-3, atol=5e-3)
    assert out.shape == (B, 2, N)

    print("KERNEL_OK")
</pallas_src>

<mosaic_0001>
module attributes {stable_mosaic.version = 11 : i64} {
  func.func @_gcn_fused_kernel(%arg0: i32, %arg1: memref<128x128xbf16, #tpu.memory_space<vmem>>, %arg2: memref<1x8x128xbf16, #tpu.memory_space<vmem>>, %arg3: memref<16x8xbf16, #tpu.memory_space<vmem>>, %arg4: memref<16x1xf32, #tpu.memory_space<vmem>>, %arg5: memref<4x16x16xbf16, #tpu.memory_space<vmem>>, %arg6: memref<4x16x1xf32, #tpu.memory_space<vmem>>, %arg7: memref<512x80xbf16, #tpu.memory_space<vmem>>, %arg8: memref<256x1xf32, #tpu.memory_space<vmem>>, %arg9: memref<256x256xbf16, #tpu.memory_space<vmem>>, %arg10: memref<256x1xf32, #tpu.memory_space<vmem>>, %arg11: memref<64x256xbf16, #tpu.memory_space<vmem>>, %arg12: memref<64x1xf32, #tpu.memory_space<vmem>>, %arg13: memref<8x64xbf16, #tpu.memory_space<vmem>>, %arg14: memref<8x1xf32, #tpu.memory_space<vmem>>, %arg15: memref<1x8x128xf32, #tpu.memory_space<vmem>>, %arg16: memref<80x128xbf16, #tpu.memory_space<vmem>>) attributes {dimension_semantics = [#tpu.dimension_semantics<parallel>], iteration_bounds = array<i64: 2>, scalar_prefetch = 0 : i64, scratch_operands = 1 : i64, tpu.core_type = #tpu.core_type<tc>, window_params = [{pipeline_mode = #tpu.pipeline_mode<synchronous>, transform_indices = @transform_0, window_bounds = array<i64: 128, 128>}, {transform_indices = @transform_1, window_bounds = array<i64: 1, 8, 128>}, {pipeline_mode = #tpu.pipeline_mode<synchronous>, transform_indices = @transform_2, window_bounds = array<i64: 16, 8>}, {pipeline_mode = #tpu.pipeline_mode<synchronous>, transform_indices = @transform_3, window_bounds = array<i64: 16, 1>}, {pipeline_mode = #tpu.pipeline_mode<synchronous>, transform_indices = @transform_4, window_bounds = array<i64: 4, 16, 16>}, {pipeline_mode = #tpu.pipeline_mode<synchronous>, transform_indices = @transform_5, window_bounds = array<i64: 4, 16, 1>}, {pipeline_mode = #tpu.pipeline_mode<synchronous>, transform_indices = @transform_6, window_bounds = array<i64: 512, 80>}, {pipeline_mode = #tpu.pipeline_mode<synchronous>, transform_indices = @transform_7, window_bounds = array<i64: 256, 1>}, {pipeline_mode = #tpu.pipeline_mode<synchronous>, transform_indices = @transform_8, window_bounds = array<i64: 256, 256>}, {pipeline_mode = #tpu.pipeline_mode<synchronous>, transform_indices = @transform_9, window_bounds = array<i64: 256, 1>}, {pipeline_mode = #tpu.pipeline_mode<synchronous>, transform_indices = @transform_10, window_bounds = array<i64: 64, 256>}, {pipeline_mode = #tpu.pipeline_mode<synchronous>, transform_indices = @transform_11, window_bounds = array<i64: 64, 1>}, {pipeline_mode = #tpu.pipeline_mode<synchronous>, transform_indices = @transform_12, window_bounds = array<i64: 8, 64>}, {pipeline_mode = #tpu.pipeline_mode<synchronous>, transform_indices = @transform_13, window_bounds = array<i64: 8, 1>}, {transform_indices = @transform_14, window_bounds = array<i64: 1, 8, 128>}]} {
    %c0 = arith.constant 0 : index
    %c0_0 = arith.constant 0 : index
    %0 = vector.load %arg1[%c0, %c0_0] : memref<128x128xbf16, #tpu.memory_space<vmem>>, vector<128x128xbf16>
    %c0_1 = arith.constant 0 : index
    %c0_2 = arith.constant 0 : index
    %c0_3 = arith.constant 0 : index
    %1 = vector.load %arg2[%c0_1, %c0_2, %c0_3] : memref<1x8x128xbf16, #tpu.memory_space<vmem>>, vector<1x8x128xbf16>
    %2 = vector.shape_cast %1 : vector<1x8x128xbf16> to vector<8x128xbf16>
    %cst = arith.constant dense<0.000000e+00> : vector<8x128xf32>
    %3 = tpu.matmul %2, %0, %cst {dimension_numbers = #tpu.dot_dimension_numbers<[1], [0], [0], [1], [0, 0, 1, 1], [], []>} : vector<8x128xbf16>, vector<128x128xbf16>, vector<8x128xf32> -> vector<8x128xf32>
    %c0_4 = arith.constant 0 : index
    %c0_5 = arith.constant 0 : index
    %4 = vector.load %arg3[%c0_4, %c0_5] : memref<16x8xbf16, #tpu.memory_space<vmem>>, vector<16x8xbf16>
    %5 = arith.truncf %3 : vector<8x128xf32> to vector<8x128xbf16>
    %cst_6 = arith.constant dense<0.000000e+00> : vector<16x128xf32>
    %6 = tpu.matmul %4, %5, %cst_6 {dimension_numbers = #tpu.dot_dimension_numbers<[1], [0], [0], [1], [0, 0, 1, 1], [], []>} : vector<16x8xbf16>, vector<8x128xbf16>, vector<16x128xf32> -> vector<16x128xf32>
    %c0_7 = arith.constant 0 : index
    %c0_8 = arith.constant 0 : index
    %7 = vector.load %arg4[%c0_7, %c0_8] : memref<16x1xf32, #tpu.memory_space<vmem>>, vector<16x1xf32>
    %8 = vector.broadcast %7 : vector<16x1xf32> to vector<16x128xf32>
    %9 = arith.addf %6, %8 : vector<16x128xf32>
    %cst_9 = arith.constant 0.000000e+00 : f32
    %10 = vector.broadcast %cst_9 : f32 to vector<16x128xf32>
    %11 = arith.maximumf %9, %10 : vector<16x128xf32>
    %12 = arith.truncf %11 : vector<16x128xf32> to vector<16x128xbf16>
    %c0_10 = arith.constant 0 : index
    %c0_11 = arith.constant 0 : index
    %13 = vector.load %arg16[%c0_10, %c0_11] : memref<80x128xbf16, #tpu.memory_space<vmem>>, vector<16x128xbf16>
    tpu.vector_store %arg16[%c0_10, %c0_11], %12 {strides = array<i32>} : memref<80x128xbf16, #tpu.memory_space<vmem>>, vector<16x128xbf16>,
    %c0_12 = arith.constant 0 : index
    %c0_13 = arith.constant 0 : index
    %c0_14 = arith.constant 0 : index
    %14 = vector.load %arg5[%c0_12, %c0_13, %c0_14] : memref<4x16x16xbf16, #tpu.memory_space<vmem>>, vector<1x16x16xbf16>
    %15 = vector.shape_cast %14 : vector<1x16x16xbf16> to vector<16x16xbf16>
    %16 = arith.truncf %11 : vector<16x128xf32> to vector<16x128xbf16>
    %cst_15 = arith.constant dense<0.000000e+00> : vector<16x128xf32>
    %17 = tpu.matmul %15, %16, %cst_15 {dimension_numbers = #tpu.dot_dimension_numbers<[1], [0], [0], [1], [0, 0, 1, 1], [], []>} : vector<16x16xbf16>, vector<16x128xbf16>, vector<16x128xf32> -> vector<16x128xf32>
    %18 = arith.truncf %17 : vector<16x128xf32> to vector<16x128xbf16>
    %cst_16 = arith.constant dense<0.000000e+00> : vector<16x128xf32>
    %19 = tpu.matmul %18, %0, %cst_16 {dimension_numbers = #tpu.dot_dimension_numbers<[1], [0], [0], [1], [0, 0, 1, 1], [], []>} : vector<16x128xbf16>, vector<128x128xbf16>, vector<16x128xf32> -> vector<16x128xf32>
    %c0_17 = arith.constant 0 : index
    %c0_18 = arith.constant 0 : index
    %c0_19 = arith.constant 0 : index
    %20 = vector.load %arg6[%c0_17, %c0_18, %c0_19] : memref<4x16x1xf32, #tpu.memory_space<vmem>>, vector<1x16x1xf32>
    %21 = vector.shape_cast %20 : vector<1x16x1xf32> to vector<16x1xf32>
    %22 = vector.broadcast %21 : vector<16x1xf32> to vector<16x128xf32>
    %23 = arith.addf %19, %22 : vector<16x128xf32>
    %cst_20 = arith.constant 0.000000e+00 : f32
    %24 = vector.broadcast %cst_20 : f32 to vector<16x128xf32>
    %25 = arith.maximumf %23, %24 : vector<16x128xf32>
    %26 = arith.addf %25, %11 : vector<16x128xf32>
    %27 = arith.truncf %26 : vector<16x128xf32> to vector<16x128xbf16>
    %c16 = arith.constant 16 : index
    %c0_21 = arith.constant 0 : index
    %28 = vector.load %arg16[%c16, %c0_21] : memref<80x128xbf16, #tpu.memory_space<vmem>>, vector<16x128xbf16>
    tpu.vector_store %arg16[%c16, %c0_21], %27 {strides = array<i32>} : memref<80x128xbf16, #tpu.memory_space<vmem>>, vector<16x128xbf16>,
    %c1 = arith.constant 1 : index
    %c0_22 = arith.constant 0 : index
    %c0_23 = arith.constant 0 : index
    %29 = vector.load %arg5[%c1, %c0_22, %c0_23] : memref<4x16x16xbf16, #tpu.memory_space<vmem>>, vector<1x16x16xbf16>
    %30 = vector.shape_cast %29 : vector<1x16x16xbf16> to vector<16x16xbf16>
    %31 = arith.truncf %26 : vector<16x128xf32> to vector<16x128xbf16>
    %cst_24 = arith.constant dense<0.000000e+00> : vector<16x128xf32>
    %32 = tpu.matmul %30, %31, %cst_24 {dimension_numbers = #tpu.dot_dimension_numbers<[1], [0], [0], [1], [0, 0, 1, 1], [], []>} : vector<16x16xbf16>, vector<16x128xbf16>, vector<16x128xf32> -> vector<16x128xf32>
    %33 = arith.truncf %32 : vector<16x128xf32> to vector<16x128xbf16>
    %cst_25 = arith.constant dense<0.000000e+00> : vector<16x128xf32>
    %34 = tpu.matmul %33, %0, %cst_25 {dimension_numbers = #tpu.dot_dimension_numbers<[1], [0], [0], [1], [0, 0, 1, 1], [], []>} : vector<16x128xbf16>, vector<128x128xbf16>, vector<16x128xf32> -> vector<16x128xf32>
    %c1_26 = arith.constant 1 : index
    %c0_27 = arith.constant 0 : index
    %c0_28 = arith.constant 0 : index
    %35 = vector.load %arg6[%c1_26, %c0_27, %c0_28] : memref<4x16x1xf32, #tpu.memory_space<vmem>>, vector<1x16x1xf32>
    %36 = vector.shape_cast %35 : vector<1x16x1xf32> to vector<16x1xf32>
    %37 = vector.broadcast %36 : vector<16x1xf32> to vector<16x128xf32>
    %38 = arith.addf %34, %37 : vector<16x128xf32>
    %cst_29 = arith.constant 0.000000e+00 : f32
    %39 = vector.broadcast %cst_29 : f32 to vector<16x128xf32>
    %40 = arith.maximumf %38, %39 : vector<16x128xf32>
    %41 = arith.addf %40, %26 : vector<16x128xf32>
    %42 = arith.truncf %41 : vector<16x128xf32> to vector<16x128xbf16>
    %c32 = arith.constant 32 : index
    %c0_30 = arith.constant 0 : index
    %43 = vector.load %arg16[%c32, %c0_30] : memref<80x128xbf16, #tpu.memory_space<vmem>>, vector<16x128xbf16>
    tpu.vector_store %arg16[%c32, %c0_30], %42 {strides = array<i32>} : memref<80x128xbf16, #tpu.memory_space<vmem>>, vector<16x128xbf16>,
    %c2 = arith.constant 2 : index
    %c0_31 = arith.constant 0 : index
    %c0_32 = arith.constant 0 : index
    %44 = vector.load %arg5[%c2, %c0_31, %c0_32] : memref<4x16x16xbf16, #tpu.memory_space<vmem>>, vector<1x16x16xbf16>
    %45 = vector.shape_cast %44 : vector<1x16x16xbf16> to vector<16x16xbf16>
    %46 = arith.truncf %41 : vector<16x128xf32> to vector<16x128xbf16>
    %cst_33 = arith.constant dense<0.000000e+00> : vector<16x128xf32>
    %47 = tpu.matmul %45, %46, %cst_33 {dimension_numbers = #tpu.dot_dimension_numbers<[1], [0], [0], [1], [0, 0, 1, 1], [], []>} : vector<16x16xbf16>, vector<16x128xbf16>, vector<16x128xf32> -> vector<16x128xf32>
    %48 = arith.truncf %47 : vector<16x128xf32> to vector<16x128xbf16>
    %cst_34 = arith.constant dense<0.000000e+00> : vector<16x128xf32>
    %49 = tpu.matmul %48, %0, %cst_34 {dimension_numbers = #tpu.dot_dimension_numbers<[1], [0], [0], [1], [0, 0, 1, 1], [], []>} : vector<16x128xbf16>, vector<128x128xbf16>, vector<16x128xf32> -> vector<16x128xf32>
    %c2_35 = arith.constant 2 : index
    %c0_36 = arith.constant 0 : index
    %c0_37 = arith.constant 0 : index
    %50 = vector.load %arg6[%c2_35, %c0_36, %c0_37] : memref<4x16x1xf32, #tpu.memory_space<vmem>>, vector<1x16x1xf32>
    %51 = vector.shape_cast %50 : vector<1x16x1xf32> to vector<16x1xf32>
    %52 = vector.broadcast %51 : vector<16x1xf32> to vector<16x128xf32>
    %53 = arith.addf %49, %52 : vector<16x128xf32>
    %cst_38 = arith.constant 0.000000e+00 : f32
    %54 = vector.broadcast %cst_38 : f32 to vector<16x128xf32>
    %55 = arith.maximumf %53, %54 : vector<16x128xf32>
    %56 = arith.addf %55, %41 : vector<16x128xf32>
    %57 = arith.truncf %56 : vector<16x128xf32> to vector<16x128xbf16>
    %c48 = arith.constant 48 : index
    %c0_39 = arith.constant 0 : index
    %58 = vector.load %arg16[%c48, %c0_39] : memref<80x128xbf16, #tpu.memory_space<vmem>>, vector<16x128xbf16>
    tpu.vector_store %arg16[%c48, %c0_39], %57 {strides = array<i32>} : memref<80x128xbf16, #tpu.memory_space<vmem>>, vector<16x128xbf16>,
    %c3 = arith.constant 3 : index
    %c0_40 = arith.constant 0 : index
    %c0_41 = arith.constant 0 : index
    %59 = vector.load %arg5[%c3, %c0_40, %c0_41] : memref<4x16x16xbf16, #tpu.memory_space<vmem>>, vector<1x16x16xbf16>
    %60 = vector.shape_cast %59 : vector<1x16x16xbf16> to vector<16x16xbf16>
    %61 = arith.truncf %56 : vector<16x128xf32> to vector<16x128xbf16>
    %cst_42 = arith.constant dense<0.000000e+00> : vector<16x128xf32>
    %62 = tpu.matmul %60, %61, %cst_42 {dimension_numbers = #tpu.dot_dimension_numbers<[1], [0], [0], [1], [0, 0, 1, 1], [], []>} : vector<16x16xbf16>, vector<16x128xbf16>, vector<16x128xf32> -> vector<16x128xf32>
    %63 = arith.truncf %62 : vector<16x128xf32> to vector<16x128xbf16>
    %cst_43 = arith.constant dense<0.000000e+00> : vector<16x128xf32>
    %64 = tpu.matmul %63, %0, %cst_43 {dimension_numbers = #tpu.dot_dimension_numbers<[1], [0], [0], [1], [0, 0, 1, 1], [], []>} : vector<16x128xbf16>, vector<128x128xbf16>, vector<16x128xf32> -> vector<16x128xf32>
    %c3_44 = arith.constant 3 : index
    %c0_45 = arith.constant 0 : index
    %c0_46 = arith.constant 0 : index
    %65 = vector.load %arg6[%c3_44, %c0_45, %c0_46] : memref<4x16x1xf32, #tpu.memory_space<vmem>>, vector<1x16x1xf32>
    %66 = vector.shape_cast %65 : vector<1x16x1xf32> to vector<16x1xf32>
    %67 = vector.broadcast %66 : vector<16x1xf32> to vector<16x128xf32>
    %68 = arith.addf %64, %67 : vector<16x128xf32>
    %cst_47 = arith.constant 0.000000e+00 : f32
    %69 = vector.broadcast %cst_47 : f32 to vector<16x128xf32>
    %70 = arith.maximumf %68, %69 : vector<16x128xf32>
    %71 = arith.addf %70, %56 : vector<16x128xf32>
    %72 = arith.truncf %71 : vector<16x128xf32> to vector<16x128xbf16>
    %c64 = arith.constant 64 : index
    %c0_48 = arith.constant 0 : index
    %73 = vector.load %arg16[%c64, %c0_48] : memref<80x128xbf16, #tpu.memory_space<vmem>>, vector<16x128xbf16>
    tpu.vector_store %arg16[%c64, %c0_48], %72 {strides = array<i32>} : memref<80x128xbf16, #tpu.memory_space<vmem>>, vector<16x128xbf16>,
    %c0_49 = arith.constant 0 : index
    %c0_50 = arith.constant 0 : index
    %74 = vector.load %arg16[%c0_49, %c0_50] : memref<80x128xbf16, #tpu.memory_space<vmem>>, vector<80x128xbf16>
    %c0_51 = arith.constant 0 : index
    %c0_52 = arith.constant 0 : index
    %75 = vector.load %arg7[%c0_51, %c0_52] : memref<512x80xbf16, #tpu.memory_space<vmem>>, vector<512x80xbf16>
    %cst_53 = arith.constant dense<0.000000e+00> : vector<512x128xf32>
    %76 = tpu.matmul %75, %74, %cst_53 {dimension_numbers = #tpu.dot_dimension_numbers<[1], [0], [0], [1], [0, 0, 1, 1], [], []>} : vector<512x80xbf16>, vector<80x128xbf16>, vector<512x128xf32> -> vector<512x128xf32>
    %77 = vector.extract_strided_slice %76 {offsets = [0, 0], sizes = [256, 128], strides = [1, 1]} : vector<512x128xf32> to vector<256x128xf32>
    %c0_54 = arith.constant 0 : index
    %c0_55 = arith.constant 0 : index
    %78 = vector.load %arg8[%c0_54, %c0_55] : memref<256x1xf32, #tpu.memory_space<vmem>>, vector<256x1xf32>
    %79 = vector.broadcast %78 : vector<256x1xf32> to vector<256x128xf32>
    %80 = arith.addf %77, %79 : vector<256x128xf32>
    %81 = tpu.iota {dimensions = array<i32: 1>} : vector<256x128xi32>
    %c16_i32 = arith.constant 16 : i32
    %82 = vector.broadcast %c16_i32 : i32 to vector<256x128xi32>
    %83 = arith.cmpi slt, %81, %82 : vector<256x128xi32>
    %cst_56 = arith.constant -3.40282347E+38 : f32
    %84 = vector.broadcast %cst_56 : f32 to vector<256x128xf32>
    %85 = arith.select %83, %80, %84 : vector<256x128xi1>, vector<256x128xf32>
    %cst_57 = arith.constant dense<0xFF800000> : vector<256xf32>
    %86 = vector.multi_reduction <maximumf>, %85, %cst_57 [1] : vector<256x128xf32> to vector<256xf32>
    %87 = vector.shape_cast %86 : vector<256xf32> to vector<256x1xf32>
    %c0_58 = arith.constant 0 : index
    %c0_59 = arith.constant 0 : index
    %88 = vector.load %arg9[%c0_58, %c0_59] : memref<256x256xbf16, #tpu.memory_space<vmem>>, vector<256x256xbf16>
    %89 = arith.truncf %87 : vector<256x1xf32> to vector<256x1xbf16>
    %cst_60 = arith.constant dense<0.000000e+00> : vector<256x1xf32>
    %90 = tpu.matmul %88, %89, %cst_60 {dimension_numbers = #tpu.dot_dimension_numbers<[1], [0], [0], [1], [0, 0, 1, 1], [], []>} : vector<256x256xbf16>, vector<256x1xbf16>, vector<256x1xf32> -> vector<256x1xf32>
    %91 = vector.extract_strided_slice %76 {offsets = [256, 0], sizes = [256, 128], strides = [1, 1]} : vector<512x128xf32> to vector<256x128xf32>
    %92 = vector.broadcast %90 : vector<256x1xf32> to vector<256x128xf32>
    %93 = arith.addf %91, %92 : vector<256x128xf32>
    %c0_61 = arith.constant 0 : index
    %c0_62 = arith.constant 0 : index
    %94 = vector.load %arg10[%c0_61, %c0_62] : memref<256x1xf32, #tpu.memory_space<vmem>>, vector<256x1xf32>
    %95 = vector.broadcast %94 : vector<256x1xf32> to vector<256x128xf32>
    %96 = arith.addf %93, %95 : vector<256x128xf32>
    %cst_63 = arith.constant 0.000000e+00 : f32
    %97 = vector.broadcast %cst_63 : f32 to vector<256x128xf32>
    %98 = arith.maximumf %96, %97 : vector<256x128xf32>
    %c0_64 = arith.constant 0 : index
    %c0_65 = arith.constant 0 : index
    %99 = vector.load %arg11[%c0_64, %c0_65] : memref<64x256xbf16, #tpu.memory_space<vmem>>, vector<64x256xbf16>
    %100 = arith.truncf %98 : vector<256x128xf32> to vector<256x128xbf16>
    %cst_66 = arith.constant dense<0.000000e+00> : vector<64x128xf32>
    %101 = tpu.matmul %99, %100, %cst_66 {dimension_numbers = #tpu.dot_dimension_numbers<[1], [0], [0], [1], [0, 0, 1, 1], [], []>} : vector<64x256xbf16>, vector<256x128xbf16>, vector<64x128xf32> -> vector<64x128xf32>
    %c0_67 = arith.constant 0 : index
    %c0_68 = arith.constant 0 : index
    %102 = vector.load %arg12[%c0_67, %c0_68] : memref<64x1xf32, #tpu.memory_space<vmem>>, vector<64x1xf32>
    %103 = vector.broadcast %102 : vector<64x1xf32> to vector<64x128xf32>
    %104 = arith.addf %101, %103 : vector<64x128xf32>
    %cst_69 = arith.constant 0.000000e+00 : f32
    %105 = vector.broadcast %cst_69 : f32 to vector<64x128xf32>
    %106 = arith.maximumf %104, %105 : vector<64x128xf32>
    %c0_70 = arith.constant 0 : index
    %c0_71 = arith.constant 0 : index
    %107 = vector.load %arg13[%c0_70, %c0_71] : memref<8x64xbf16, #tpu.memory_space<vmem>>, vector<8x64xbf16>
    %108 = arith.truncf %106 : vector<64x128xf32> to vector<64x128xbf16>
    %cst_72 = arith.constant dense<0.000000e+00> : vector<8x128xf32>
    %109 = tpu.matmul %107, %108, %cst_72 {dimension_numbers = #tpu.dot_dimension_numbers<[1], [0], [0], [1], [0, 0, 1, 1], [], []>} : vector<8x64xbf16>, vector<64x128xbf16>, vector<8x128xf32> -> vector<8x128xf32>
    %c0_73 = arith.constant 0 : index
    %c0_74 = arith.constant 0 : index
    %110 = vector.load %arg14[%c0_73, %c0_74] : memref<8x1xf32, #tpu.memory_space<vmem>>, vector<8x1xf32>
    %111 = vector.broadcast %110 : vector<8x1xf32> to vector<8x128xf32>
    %112 = arith.addf %109, %111 : vector<8x128xf32>
    %c0_75 = arith.constant 0 : index
    %c0_76 = arith.constant 0 : index
    %c0_77 = arith.constant 0 : index
    %113 = vector.load %arg15[%c0_75, %c0_76, %c0_77] : memref<1x8x128xf32, #tpu.memory_space<vmem>>, vector<1x8x128xf32>
    %114 = vector.shape_cast %113 : vector<1x8x128xf32> to vector<8x128xf32>
    %115 = vector.shape_cast %112 : vector<8x128xf32> to vector<1x8x128xf32>
    tpu.vector_store %arg15[%c0_75, %c0_76, %c0_77], %115 {strides = array<i32>} : memref<1x8x128xf32, #tpu.memory_space<vmem>>, vector<1x8x128xf32>,
    return
  }
  func.func @transform_0(%arg0: i32) -> (i32, i32) {
    %c0_i32 = arith.constant 0 : i32
    %c0_i32_0 = arith.constant 0 : i32
    %c0_i32_1 = arith.constant 0 : i32
    return %c0_i32, %c0_i32_0 : i32, i32
  }
  func.func @transform_1(%arg0: i32) -> (i32, i32, i32) {
    %c0_i32 = arith.constant 0 : i32
    %c0_i32_0 = arith.constant 0 : i32
    %c0_i32_1 = arith.constant 0 : i32
    return %arg0, %c0_i32, %c0_i32_0 : i32, i32, i32
  }
  func.func @transform_2(%arg0: i32) -> (i32, i32) {
    %c0_i32 = arith.constant 0 : i32
    %c0_i32_0 = arith.constant 0 : i32
    %c0_i32_1 = arith.constant 0 : i32
    return %c0_i32, %c0_i32_0 : i32, i32
  }
  func.func @transform_3(%arg0: i32) -> (i32, i32) {
    %c0_i32 = arith.constant 0 : i32
    %c0_i32_0 = arith.constant 0 : i32
    %c0_i32_1 = arith.constant 0 : i32
    return %c0_i32, %c0_i32_0 : i32, i32
  }
  func.func @transform_4(%arg0: i32) -> (i32, i32, i32) {
    %c0_i32 = arith.constant 0 : i32
    %c0_i32_0 = arith.constant 0 : i32
    %c0_i32_1 = arith.constant 0 : i32
    %c0_i32_2 = arith.constant 0 : i32
    return %c0_i32, %c0_i32_0, %c0_i32_1 : i32, i32, i32
  }
  func.func @transform_5(%arg0: i32) -> (i32, i32, i32) {
    %c0_i32 = arith.constant 0 : i32
    %c0_i32_0 = arith.constant 0 : i32
    %c0_i32_1 = arith.constant 0 : i32
    %c0_i32_2 = arith.constant 0 : i32
    return %c0_i32, %c0_i32_0, %c0_i32_1 : i32, i32, i32
  }
  func.func @transform_6(%arg0: i32) -> (i32, i32) {
    %c0_i32 = arith.constant 0 : i32
    %c0_i32_0 = arith.constant 0 : i32
    %c0_i32_1 = arith.constant 0 : i32
    return %c0_i32, %c0_i32_0 : i32, i32
  }
  func.func @transform_7(%arg0: i32) -> (i32, i32) {
    %c0_i32 = arith.constant 0 : i32
    %c0_i32_0 = arith.constant 0 : i32
    %c0_i32_1 = arith.constant 0 : i32
    return %c0_i32, %c0_i32_0 : i32, i32
  }
  func.func @transform_8(%arg0: i32) -> (i32, i32) {
    %c0_i32 = arith.constant 0 : i32
    %c0_i32_0 = arith.constant 0 : i32
    %c0_i32_1 = arith.constant 0 : i32
    return %c0_i32, %c0_i32_0 : i32, i32
  }
  func.func @transform_9(%arg0: i32) -> (i32, i32) {
    %c0_i32 = arith.constant 0 : i32
    %c0_i32_0 = arith.constant 0 : i32
    %c0_i32_1 = arith.constant 0 : i32
    return %c0_i32, %c0_i32_0 : i32, i32
  }
  func.func @transform_10(%arg0: i32) -> (i32, i32) {
    %c0_i32 = arith.constant 0 : i32
    %c0_i32_0 = arith.constant 0 : i32
    %c0_i32_1 = arith.constant 0 : i32
    return %c0_i32, %c0_i32_0 : i32, i32
  }
  func.func @transform_11(%arg0: i32) -> (i32, i32) {
    %c0_i32 = arith.constant 0 : i32
    %c0_i32_0 = arith.constant 0 : i32
    %c0_i32_1 = arith.constant 0 : i32
    return %c0_i32, %c0_i32_0 : i32, i32
  }
  func.func @transform_12(%arg0: i32) -> (i32, i32) {
    %c0_i32 = arith.constant 0 : i32
    %c0_i32_0 = arith.constant 0 : i32
    %c0_i32_1 = arith.constant 0 : i32
    return %c0_i32, %c0_i32_0 : i32, i32
  }
  func.func @transform_13(%arg0: i32) -> (i32, i32) {
    %c0_i32 = arith.constant 0 : i32
    %c0_i32_0 = arith.constant 0 : i32
    %c0_i32_1 = arith.constant 0 : i32
    return %c0_i32, %c0_i32_0 : i32, i32
  }
  func.func @transform_14(%arg0: i32) -> (i32, i32, i32) {
    %c0_i32 = arith.constant 0 : i32
    %c0_i32_0 = arith.constant 0 : i32
    %c0_i32_1 = arith.constant 0 : i32
    return %arg0, %c0_i32, %c0_i32_0 : i32, i32, i32
  }
}

module attributes {stable_mosaic.version = 11 : i64} {
  func.func @_gcn_fused_kernel(%arg0: i32, %arg1: memref<128x128xbf16, #tpu.memory_space<vmem>>, %arg2: memref<1x8x128xbf16, #tpu.memory_space<vmem>>, %arg3: memref<16x8xbf16, #tpu.memory_space<vmem>>, %arg4: memref<16x1xf32, #tpu.memory_space<vmem>>, %arg5: memref<4x16x16xbf16, #tpu.memory_space<vmem>>, %arg6: memref<4x16x1xf32, #tpu.memory_space<vmem>>, %arg7: memref<512x80xbf16, #tpu.memory_space<vmem>>, %arg8: memref<256x1xf32, #tpu.memory_space<vmem>>, %arg9: memref<256x256xbf16, #tpu.memory_space<vmem>>, %arg10: memref<256x1xf32, #tpu.memory_space<vmem>>, %arg11: memref<64x256xbf16, #tpu.memory_space<vmem>>, %arg12: memref<64x1xf32, #tpu.memory_space<vmem>>, %arg13: memref<8x64xbf16, #tpu.memory_space<vmem>>, %arg14: memref<8x1xf32, #tpu.memory_space<vmem>>, %arg15: memref<1x8x128xf32, #tpu.memory_space<vmem>>, %arg16: memref<80x128xbf16, #tpu.memory_space<vmem>>) attributes {dimension_semantics = [#tpu.dimension_semantics<parallel>], iteration_bounds = array<i64: 2>, scalar_prefetch = 0 : i64, scratch_operands = 1 : i64, tpu.core_type = #tpu.core_type<tc>, window_params = [{pipeline_mode = #tpu.pipeline_mode<synchronous>, transform_indices = @transform_0, window_bounds = array<i64: 128, 128>}, {transform_indices = @transform_1, window_bounds = array<i64: 1, 8, 128>}, {pipeline_mode = #tpu.pipeline_mode<synchronous>, transform_indices = @transform_2, window_bounds = array<i64: 16, 8>}, {pipeline_mode = #tpu.pipeline_mode<synchronous>, transform_indices = @transform_3, window_bounds = array<i64: 16, 1>}, {pipeline_mode = #tpu.pipeline_mode<synchronous>, transform_indices = @transform_4, window_bounds = array<i64: 4, 16, 16>}, {pipeline_mode = #tpu.pipeline_mode<synchronous>, transform_indices = @transform_5, window_bounds = array<i64: 4, 16, 1>}, {pipeline_mode = #tpu.pipeline_mode<synchronous>, transform_indices = @transform_6, window_bounds = array<i64: 512, 80>}, {pipeline_mode = #tpu.pipeline_mode<synchronous>, transform_indices = @transform_7, window_bounds = array<i64: 256, 1>}, {pipeline_mode = #tpu.pipeline_mode<synchronous>, transform_indices = @transform_8, window_bounds = array<i64: 256, 256>}, {pipeline_mode = #tpu.pipeline_mode<synchronous>, transform_indices = @transform_9, window_bounds = array<i64: 256, 1>}, {pipeline_mode = #tpu.pipeline_mode<synchronous>, transform_indices = @transform_10, window_bounds = array<i64: 64, 256>}, {pipeline_mode = #tpu.pipeline_mode<synchronous>, transform_indices = @transform_11, window_bounds = array<i64: 64, 1>}, {pipeline_mode = #tpu.pipeline_mode<synchronous>, transform_indices = @transform_12, window_bounds = array<i64: 8, 64>}, {pipeline_mode = #tpu.pipeline_mode<synchronous>, transform_indices = @transform_13, window_bounds = array<i64: 8, 1>}, {transform_indices = @transform_14, window_bounds = array<i64: 1, 8, 128>}]} {
    %c0 = arith.constant 0 : index
    %c0_0 = arith.constant 0 : index
    %0 = vector.load %arg1[%c0, %c0_0] : memref<128x128xbf16, #tpu.memory_space<vmem>>, vector<128x128xbf16>
    %c0_1 = arith.constant 0 : index
    %c0_2 = arith.constant 0 : index
    %c0_3 = arith.constant 0 : index
    %1 = vector.load %arg2[%c0_1, %c0_2, %c0_3] : memref<1x8x128xbf16, #tpu.memory_space<vmem>>, vector<1x8x128xbf16>
    %2 = vector.shape_cast %1 : vector<1x8x128xbf16> to vector<8x128xbf16>
    %cst = arith.constant dense<0.000000e+00> : vector<8x128xf32>
    %3 = tpu.matmul %2, %0, %cst {dimension_numbers = #tpu.dot_dimension_numbers<[1], [0], [0], [1], [0, 0, 1, 1], [], []>} : vector<8x128xbf16>, vector<128x128xbf16>, vector<8x128xf32> -> vector<8x128xf32>
    %c0_4 = arith.constant 0 : index
    %c0_5 = arith.constant 0 : index
    %4 = vector.load %arg3[%c0_4, %c0_5] : memref<16x8xbf16, #tpu.memory_space<vmem>>, vector<16x8xbf16>
    %5 = arith.truncf %3 : vector<8x128xf32> to vector<8x128xbf16>
    %cst_6 = arith.constant dense<0.000000e+00> : vector<16x128xf32>
    %6 = tpu.matmul %4, %5, %cst_6 {dimension_numbers = #tpu.dot_dimension_numbers<[1], [0], [0], [1], [0, 0, 1, 1], [], []>} : vector<16x8xbf16>, vector<8x128xbf16>, vector<16x128xf32> -> vector<16x128xf32>
    %c0_7 = arith.constant 0 : index
    %c0_8 = arith.constant 0 : index
    %7 = vector.load %arg4[%c0_7, %c0_8] : memref<16x1xf32, #tpu.memory_space<vmem>>, vector<16x1xf32>
    %8 = vector.broadcast %7 : vector<16x1xf32> to vector<16x128xf32>
    %9 = arith.addf %6, %8 : vector<16x128xf32>
    %cst_9 = arith.constant 0.000000e+00 : f32
    %10 = vector.broadcast %cst_9 : f32 to vector<16x128xf32>
    %11 = arith.maximumf %9, %10 : vector<16x128xf32>
    %12 = arith.truncf %11 : vector<16x128xf32> to vector<16x128xbf16>
    %c0_10 = arith.constant 0 : index
    %c0_11 = arith.constant 0 : index
    %13 = vector.load %arg16[%c0_10, %c0_11] : memref<80x128xbf16, #tpu.memory_space<vmem>>, vector<16x128xbf16>
    tpu.vector_store %arg16[%c0_10, %c0_11], %12 {strides = array<i32>} : memref<80x128xbf16, #tpu.memory_space<vmem>>, vector<16x128xbf16>,
    %c0_12 = arith.constant 0 : index
    %c0_13 = arith.constant 0 : index
    %c0_14 = arith.constant 0 : index
    %14 = vector.load %arg5[%c0_12, %c0_13, %c0_14] : memref<4x16x16xbf16, #tpu.memory_space<vmem>>, vector<1x16x16xbf16>
    %15 = vector.shape_cast %14 : vector<1x16x16xbf16> to vector<16x16xbf16>
    %16 = arith.truncf %11 : vector<16x128xf32> to vector<16x128xbf16>
    %cst_15 = arith.constant dense<0.000000e+00> : vector<16x128xf32>
    %17 = tpu.matmul %15, %16, %cst_15 {dimension_numbers = #tpu.dot_dimension_numbers<[1], [0], [0], [1], [0, 0, 1, 1], [], []>} : vector<16x16xbf16>, vector<16x128xbf16>, vector<16x128xf32> -> vector<16x128xf32>
    %18 = arith.truncf %17 : vector<16x128xf32> to vector<16x128xbf16>
    %cst_16 = arith.constant dense<0.000000e+00> : vector<16x128xf32>
    %19 = tpu.matmul %18, %0, %cst_16 {dimension_numbers = #tpu.dot_dimension_numbers<[1], [0], [0], [1], [0, 0, 1, 1], [], []>} : vector<16x128xbf16>, vector<128x128xbf16>, vector<16x128xf32> -> vector<16x128xf32>
    %c0_17 = arith.constant 0 : index
    %c0_18 = arith.constant 0 : index
    %c0_19 = arith.constant 0 : index
    %20 = vector.load %arg6[%c0_17, %c0_18, %c0_19] : memref<4x16x1xf32, #tpu.memory_space<vmem>>, vector<1x16x1xf32>
    %21 = vector.shape_cast %20 : vector<1x16x1xf32> to vector<16x1xf32>
    %22 = vector.broadcast %21 : vector<16x1xf32> to vector<16x128xf32>
    %23 = arith.addf %19, %22 : vector<16x128xf32>
    %cst_20 = arith.constant 0.000000e+00 : f32
    %24 = vector.broadcast %cst_20 : f32 to vector<16x128xf32>
    %25 = arith.maximumf %23, %24 : vector<16x128xf32>
    %26 = arith.addf %25, %11 : vector<16x128xf32>
    %27 = arith.truncf %26 : vector<16x128xf32> to vector<16x128xbf16>
    %c16 = arith.constant 16 : index
    %c0_21 = arith.constant 0 : index
    %28 = vector.load %arg16[%c16, %c0_21] : memref<80x128xbf16, #tpu.memory_space<vmem>>, vector<16x128xbf16>
    tpu.vector_store %arg16[%c16, %c0_21], %27 {strides = array<i32>} : memref<80x128xbf16, #tpu.memory_space<vmem>>, vector<16x128xbf16>,
    %c1 = arith.constant 1 : index
    %c0_22 = arith.constant 0 : index
    %c0_23 = arith.constant 0 : index
    %29 = vector.load %arg5[%c1, %c0_22, %c0_23] : memref<4x16x16xbf16, #tpu.memory_space<vmem>>, vector<1x16x16xbf16>
    %30 = vector.shape_cast %29 : vector<1x16x16xbf16> to vector<16x16xbf16>
    %31 = arith.truncf %26 : vector<16x128xf32> to vector<16x128xbf16>
    %cst_24 = arith.constant dense<0.000000e+00> : vector<16x128xf32>
    %32 = tpu.matmul %30, %31, %cst_24 {dimension_numbers = #tpu.dot_dimension_numbers<[1], [0], [0], [1], [0, 0, 1, 1], [], []>} : vector<16x16xbf16>, vector<16x128xbf16>, vector<16x128xf32> -> vector<16x128xf32>
    %33 = arith.truncf %32 : vector<16x128xf32> to vector<16x128xbf16>
    %cst_25 = arith.constant dense<0.000000e+00> : vector<16x128xf32>
    %34 = tpu.matmul %33, %0, %cst_25 {dimension_numbers = #tpu.dot_dimension_numbers<[1], [0], [0], [1], [0, 0, 1, 1], [], []>} : vector<16x128xbf16>, vector<128x128xbf16>, vector<16x128xf32> -> vector<16x128xf32>
    %c1_26 = arith.constant 1 : index
    %c0_27 = arith.constant 0 : index
    %c0_28 = arith.constant 0 : index
    %35 = vector.load %arg6[%c1_26, %c0_27, %c0_28] : memref<4x16x1xf32, #tpu.memory_space<vmem>>, vector<1x16x1xf32>
    %36 = vector.shape_cast %35 : vector<1x16x1xf32> to vector<16x1xf32>
    %37 = vector.broadcast %36 : vector<16x1xf32> to vector<16x128xf32>
    %38 = arith.addf %34, %37 : vector<16x128xf32>
    %cst_29 = arith.constant 0.000000e+00 : f32
    %39 = vector.broadcast %cst_29 : f32 to vector<16x128xf32>
    %40 = arith.maximumf %38, %39 : vector<16x128xf32>
    %41 = arith.addf %40, %26 : vector<16x128xf32>
    %42 = arith.truncf %41 : vector<16x128xf32> to vector<16x128xbf16>
    %c32 = arith.constant 32 : index
    %c0_30 = arith.constant 0 : index
    %43 = vector.load %arg16[%c32, %c0_30] : memref<80x128xbf16, #tpu.memory_space<vmem>>, vector<16x128xbf16>
    tpu.vector_store %arg16[%c32, %c0_30], %42 {strides = array<i32>} : memref<80x128xbf16, #tpu.memory_space<vmem>>, vector<16x128xbf16>,
    %c2 = arith.constant 2 : index
    %c0_31 = arith.constant 0 : index
    %c0_32 = arith.constant 0 : index
    %44 = vector.load %arg5[%c2, %c0_31, %c0_32] : memref<4x16x16xbf16, #tpu.memory_space<vmem>>, vector<1x16x16xbf16>
    %45 = vector.shape_cast %44 : vector<1x16x16xbf16> to vector<16x16xbf16>
    %46 = arith.truncf %41 : vector<16x128xf32> to vector<16x128xbf16>
    %cst_33 = arith.constant dense<0.000000e+00> : vector<16x128xf32>
    %47 = tpu.matmul %45, %46, %cst_33 {dimension_numbers = #tpu.dot_dimension_numbers<[1], [0], [0], [1], [0, 0, 1, 1], [], []>} : vector<16x16xbf16>, vector<16x128xbf16>, vector<16x128xf32> -> vector<16x128xf32>
    %48 = arith.truncf %47 : vector<16x128xf32> to vector<16x128xbf16>
    %cst_34 = arith.constant dense<0.000000e+00> : vector<16x128xf32>
    %49 = tpu.matmul %48, %0, %cst_34 {dimension_numbers = #tpu.dot_dimension_numbers<[1], [0], [0], [1], [0, 0, 1, 1], [], []>} : vector<16x128xbf16>, vector<128x128xbf16>, vector<16x128xf32> -> vector<16x128xf32>
    %c2_35 = arith.constant 2 : index
    %c0_36 = arith.constant 0 : index
    %c0_37 = arith.constant 0 : index
    %50 = vector.load %arg6[%c2_35, %c0_36, %c0_37] : memref<4x16x1xf32, #tpu.memory_space<vmem>>, vector<1x16x1xf32>
    %51 = vector.shape_cast %50 : vector<1x16x1xf32> to vector<16x1xf32>
    %52 = vector.broadcast %51 : vector<16x1xf32> to vector<16x128xf32>
    %53 = arith.addf %49, %52 : vector<16x128xf32>
    %cst_38 = arith.constant 0.000000e+00 : f32
    %54 = vector.broadcast %cst_38 : f32 to vector<16x128xf32>
    %55 = arith.maximumf %53, %54 : vector<16x128xf32>
    %56 = arith.addf %55, %41 : vector<16x128xf32>
    %57 = arith.truncf %56 : vector<16x128xf32> to vector<16x128xbf16>
    %c48 = arith.constant 48 : index
    %c0_39 = arith.constant 0 : index
    %58 = vector.load %arg16[%c48, %c0_39] : memref<80x128xbf16, #tpu.memory_space<vmem>>, vector<16x128xbf16>
    tpu.vector_store %arg16[%c48, %c0_39], %57 {strides = array<i32>} : memref<80x128xbf16, #tpu.memory_space<vmem>>, vector<16x128xbf16>,
    %c3 = arith.constant 3 : index
    %c0_40 = arith.constant 0 : index
    %c0_41 = arith.constant 0 : index
    %59 = vector.load %arg5[%c3, %c0_40, %c0_41] : memref<4x16x16xbf16, #tpu.memory_space<vmem>>, vector<1x16x16xbf16>
    %60 = vector.shape_cast %59 : vector<1x16x16xbf16> to vector<16x16xbf16>
    %61 = arith.truncf %56 : vector<16x128xf32> to vector<16x128xbf16>
    %cst_42 = arith.constant dense<0.000000e+00> : vector<16x128xf32>
    %62 = tpu.matmul %60, %61, %cst_42 {dimension_numbers = #tpu.dot_dimension_numbers<[1], [0], [0], [1], [0, 0, 1, 1], [], []>} : vector<16x16xbf16>, vector<16x128xbf16>, vector<16x128xf32> -> vector<16x128xf32>
    %63 = arith.truncf %62 : vector<16x128xf32> to vector<16x128xbf16>
    %cst_43 = arith.constant dense<0.000000e+00> : vector<16x128xf32>
    %64 = tpu.matmul %63, %0, %cst_43 {dimension_numbers = #tpu.dot_dimension_numbers<[1], [0], [0], [1], [0, 0, 1, 1], [], []>} : vector<16x128xbf16>, vector<128x128xbf16>, vector<16x128xf32> -> vector<16x128xf32>
    %c3_44 = arith.constant 3 : index
    %c0_45 = arith.constant 0 : index
    %c0_46 = arith.constant 0 : index
    %65 = vector.load %arg6[%c3_44, %c0_45, %c0_46] : memref<4x16x1xf32, #tpu.memory_space<vmem>>, vector<1x16x1xf32>
    %66 = vector.shape_cast %65 : vector<1x16x1xf32> to vector<16x1xf32>
    %67 = vector.broadcast %66 : vector<16x1xf32> to vector<16x128xf32>
    %68 = arith.addf %64, %67 : vector<16x128xf32>
    %cst_47 = arith.constant 0.000000e+00 : f32
    %69 = vector.broadcast %cst_47 : f32 to vector<16x128xf32>
    %70 = arith.maximumf %68, %69 : vector<16x128xf32>
    %71 = arith.addf %70, %56 : vector<16x128xf32>
    %72 = arith.truncf %71 : vector<16x128xf32> to vector<16x128xbf16>
    %c64 = arith.constant 64 : index
    %c0_48 = arith.constant 0 : index
    %73 = vector.load %arg16[%c64, %c0_48] : memref<80x128xbf16, #tpu.memory_space<vmem>>, vector<16x128xbf16>
    tpu.vector_store %arg16[%c64, %c0_48], %72 {strides = array<i32>} : memref<80x128xbf16, #tpu.memory_space<vmem>>, vector<16x128xbf16>,
    %c0_49 = arith.constant 0 : index
    %c0_50 = arith.constant 0 : index
    %74 = vector.load %arg16[%c0_49, %c0_50] : memref<80x128xbf16, #tpu.memory_space<vmem>>, vector<80x128xbf16>
    %c0_51 = arith.constant 0 : index
    %c0_52 = arith.constant 0 : index
    %75 = vector.load %arg7[%c0_51, %c0_52] : memref<512x80xbf16, #tpu.memory_space<vmem>>, vector<512x80xbf16>
    %cst_53 = arith.constant dense<0.000000e+00> : vector<512x128xf32>
    %76 = tpu.matmul %75, %74, %cst_53 {dimension_numbers = #tpu.dot_dimension_numbers<[1], [0], [0], [1], [0, 0, 1, 1], [], []>} : vector<512x80xbf16>, vector<80x128xbf16>, vector<512x128xf32> -> vector<512x128xf32>
    %77 = vector.extract_strided_slice %76 {offsets = [0, 0], sizes = [256, 128], strides = [1, 1]} : vector<512x128xf32> to vector<256x128xf32>
    %c0_54 = arith.constant 0 : index
    %c0_55 = arith.constant 0 : index
    %78 = vector.load %arg8[%c0_54, %c0_55] : memref<256x1xf32, #tpu.memory_space<vmem>>, vector<256x1xf32>
    %79 = vector.broadcast %78 : vector<256x1xf32> to vector<256x128xf32>
    %80 = arith.addf %77, %79 : vector<256x128xf32>
    %81 = tpu.iota {dimensions = array<i32: 1>} : vector<256x128xi32>
    %c16_i32 = arith.constant 16 : i32
    %82 = vector.broadcast %c16_i32 : i32 to vector<256x128xi32>
    %83 = arith.cmpi slt, %81, %82 : vector<256x128xi32>
    %cst_56 = arith.constant -3.40282347E+38 : f32
    %84 = vector.broadcast %cst_56 : f32 to vector<256x128xf32>
    %85 = arith.select %83, %80, %84 : vector<256x128xi1>, vector<256x128xf32>
    %cst_57 = arith.constant dense<0xFF800000> : vector<256xf32>
    %86 = vector.multi_reduction <maximumf>, %85, %cst_57 [1] : vector<256x128xf32> to vector<256xf32>
    %87 = vector.shape_cast %86 : vector<256xf32> to vector<256x1xf32>
    %c0_58 = arith.constant 0 : index
    %c0_59 = arith.constant 0 : index
    %88 = vector.load %arg9[%c0_58, %c0_59] : memref<256x256xbf16, #tpu.memory_space<vmem>>, vector<256x256xbf16>
    %89 = arith.truncf %87 : vector<256x1xf32> to vector<256x1xbf16>
    %cst_60 = arith.constant dense<0.000000e+00> : vector<256x1xf32>
    %90 = tpu.matmul %88, %89, %cst_60 {dimension_numbers = #tpu.dot_dimension_numbers<[1], [0], [0], [1], [0, 0, 1, 1], [], []>} : vector<256x256xbf16>, vector<256x1xbf16>, vector<256x1xf32> -> vector<256x1xf32>
    %91 = vector.extract_strided_slice %76 {offsets = [256, 0], sizes = [256, 128], strides = [1, 1]} : vector<512x128xf32> to vector<256x128xf32>
    %92 = vector.broadcast %90 : vector<256x1xf32> to vector<256x128xf32>
    %93 = arith.addf %91, %92 : vector<256x128xf32>
    %c0_61 = arith.constant 0 : index
    %c0_62 = arith.constant 0 : index
    %94 = vector.load %arg10[%c0_61, %c0_62] : memref<256x1xf32, #tpu.memory_space<vmem>>, vector<256x1xf32>
    %95 = vector.broadcast %94 : vector<256x1xf32> to vector<256x128xf32>
    %96 = arith.addf %93, %95 : vector<256x128xf32>
    %cst_63 = arith.constant 0.000000e+00 : f32
    %97 = vector.broadcast %cst_63 : f32 to vector<256x128xf32>
    %98 = arith.maximumf %96, %97 : vector<256x128xf32>
    %c0_64 = arith.constant 0 : index
    %c0_65 = arith.constant 0 : index
    %99 = vector.load %arg11[%c0_64, %c0_65] : memref<64x256xbf16, #tpu.memory_space<vmem>>, vector<64x256xbf16>
    %100 = arith.truncf %98 : vector<256x128xf32> to vector<256x128xbf16>
    %cst_66 = arith.constant dense<0.000000e+00> : vector<64x128xf32>
    %101 = tpu.matmul %99, %100, %cst_66 {dimension_numbers = #tpu.dot_dimension_numbers<[1], [0], [0], [1], [0, 0, 1, 1], [], []>} : vector<64x256xbf16>, vector<256x128xbf16>, vector<64x128xf32> -> vector<64x128xf32>
    %c0_67 = arith.constant 0 : index
    %c0_68 = arith.constant 0 : index
    %102 = vector.load %arg12[%c0_67, %c0_68] : memref<64x1xf32, #tpu.memory_space<vmem>>, vector<64x1xf32>
    %103 = vector.broadcast %102 : vector<64x1xf32> to vector<64x128xf32>
    %104 = arith.addf %101, %103 : vector<64x128xf32>
    %cst_69 = arith.constant 0.000000e+00 : f32
    %105 = vector.broadcast %cst_69 : f32 to vector<64x128xf32>
    %106 = arith.maximumf %104, %105 : vector<64x128xf32>
    %c0_70 = arith.constant 0 : index
    %c0_71 = arith.constant 0 : index
    %107 = vector.load %arg13[%c0_70, %c0_71] : memref<8x64xbf16, #tpu.memory_space<vmem>>, vector<8x64xbf16>
    %108 = arith.truncf %106 : vector<64x128xf32> to vector<64x128xbf16>
    %cst_72 = arith.constant dense<0.000000e+00> : vector<8x128xf32>
    %109 = tpu.matmul %107, %108, %cst_72 {dimension_numbers = #tpu.dot_dimension_numbers<[1], [0], [0], [1], [0, 0, 1, 1], [], []>} : vector<8x64xbf16>, vector<64x128xbf16>, vector<8x128xf32> -> vector<8x128xf32>
    %c0_73 = arith.constant 0 : index
    %c0_74 = arith.constant 0 : index
    %110 = vector.load %arg14[%c0_73, %c0_74] : memref<8x1xf32, #tpu.memory_space<vmem>>, vector<8x1xf32>
    %111 = vector.broadcast %110 : vector<8x1xf32> to vector<8x128xf32>
    %112 = arith.addf %109, %111 : vector<8x128xf32>
    %c0_75 = arith.constant 0 : index
    %c0_76 = arith.constant 0 : index
    %c0_77 = arith.constant 0 : index
    %113 = vector.load %arg15[%c0_75, %c0_76, %c0_77] : memref<1x8x128xf32, #tpu.memory_space<vmem>>, vector<1x8x128xf32>
    %114 = vector.shape_cast %113 : vector<1x8x128xf32> to vector<8x128xf32>
    %115 = vector.shape_cast %112 : vector<8x128xf32> to vector<1x8x128xf32>
    tpu.vector_store %arg15[%c0_75, %c0_76, %c0_77], %115 {strides = array<i32>} : memref<1x8x128xf32, #tpu.memory_space<vmem>>, vector<1x8x128xf32>,
    return
  }
  func.func @transform_0(%arg0: i32) -> (i32, i32) {
    %c0_i32 = arith.constant 0 : i32
    %c0_i32_0 = arith.constant 0 : i32
    %c0_i32_1 = arith.constant 0 : i32
    return %c0_i32, %c0_i32_0 : i32, i32
  }
  func.func @transform_1(%arg0: i32) -> (i32, i32, i32) {
    %c0_i32 = arith.constant 0 : i32
    %c0_i32_0 = arith.constant 0 : i32
    %c0_i32_1 = arith.constant 0 : i32
    return %arg0, %c0_i32, %c0_i32_0 : i32, i32, i32
  }
  func.func @transform_2(%arg0: i32) -> (i32, i32) {
    %c0_i32 = arith.constant 0 : i32
    %c0_i32_0 = arith.constant 0 : i32
    %c0_i32_1 = arith.constant 0 : i32
    return %c0_i32, %c0_i32_0 : i32, i32
  }
  func.func @transform_3(%arg0: i32) -> (i32, i32) {
    %c0_i32 = arith.constant 0 : i32
    %c0_i32_0 = arith.constant 0 : i32
    %c0_i32_1 = arith.constant 0 : i32
    return %c0_i32, %c0_i32_0 : i32, i32
  }
  func.func @transform_4(%arg0: i32) -> (i32, i32, i32) {
    %c0_i32 = arith.constant 0 : i32
    %c0_i32_0 = arith.constant 0 : i32
    %c0_i32_1 = arith.constant 0 : i32
    %c0_i32_2 = arith.constant 0 : i32
    return %c0_i32, %c0_i32_0, %c0_i32_1 : i32, i32, i32
  }
  func.func @transform_5(%arg0: i32) -> (i32, i32, i32) {
    %c0_i32 = arith.constant 0 : i32
    %c0_i32_0 = arith.constant 0 : i32
    %c0_i32_1 = arith.constant 0 : i32
    %c0_i32_2 = arith.constant 0 : i32
    return %c0_i32, %c0_i32_0, %c0_i32_1 : i32, i32, i32
  }
  func.func @transform_6(%arg0: i32) -> (i32, i32) {
    %c0_i32 = arith.constant 0 : i32
    %c0_i32_0 = arith.constant 0 : i32
    %c0_i32_1 = arith.constant 0 : i32
    return %c0_i32, %c0_i32_0 : i32, i32
  }
  func.func @transform_7(%arg0: i32) -> (i32, i32) {
    %c0_i32 = arith.constant 0 : i32
    %c0_i32_0 = arith.constant 0 : i32
    %c0_i32_1 = arith.constant 0 : i32
    return %c0_i32, %c0_i32_0 : i32, i32
  }
  func.func @transform_8(%arg0: i32) -> (i32, i32) {
    %c0_i32 = arith.constant 0 : i32
    %c0_i32_0 = arith.constant 0 : i32
    %c0_i32_1 = arith.constant 0 : i32
    return %c0_i32, %c0_i32_0 : i32, i32
  }
  func.func @transform_9(%arg0: i32) -> (i32, i32) {
    %c0_i32 = arith.constant 0 : i32
    %c0_i32_0 = arith.constant 0 : i32
    %c0_i32_1 = arith.constant 0 : i32
    return %c0_i32, %c0_i32_0 : i32, i32
  }
  func.func @transform_10(%arg0: i32) -> (i32, i32) {
    %c0_i32 = arith.constant 0 : i32
    %c0_i32_0 = arith.constant 0 : i32
    %c0_i32_1 = arith.constant 0 : i32
    return %c0_i32, %c0_i32_0 : i32, i32
  }
  func.func @transform_11(%arg0: i32) -> (i32, i32) {
    %c0_i32 = arith.constant 0 : i32
    %c0_i32_0 = arith.constant 0 : i32
    %c0_i32_1 = arith.constant 0 : i32
    return %c0_i32, %c0_i32_0 : i32, i32
  }
  func.func @transform_12(%arg0: i32) -> (i32, i32) {
    %c0_i32 = arith.constant 0 : i32
    %c0_i32_0 = arith.constant 0 : i32
    %c0_i32_1 = arith.constant 0 : i32
    return %c0_i32, %c0_i32_0 : i32, i32
  }
  func.func @transform_13(%arg0: i32) -> (i32, i32) {
    %c0_i32 = arith.constant 0 : i32
    %c0_i32_0 = arith.constant 0 : i32
    %c0_i32_1 = arith.constant 0 : i32
    return %c0_i32, %c0_i32_0 : i32, i32
  }
  func.func @transform_14(%arg0: i32) -> (i32, i32, i32) {
    %c0_i32 = arith.constant 0 : i32
    %c0_i32_0 = arith.constant 0 : i32
    %c0_i32_1 = arith.constant 0 : i32
    return %arg0, %c0_i32, %c0_i32_0 : i32, i32, i32
  }
}

</mosaic_0001>

<llo_original>
// kernel: gcn_forward.1
$region0: #{gcn_forward.1}
  #allocation0 [shape = 'u32[]', space=smem, size = 0x4, offset = 0x4, fixed_abs, tag = 'smem constant byte address 0x4 - core index']
  #allocation1 [shape = 'u32[144,128]{1,0:T(1,128)}', space=vmem, size = 0x12000, scoped, tag = 'internal scratch']
  #allocation2 [shape = 'bf16[80,128]{1,0:T(16,128)(2,1)}', space=vmem, size = 0x5000, scoped, tag = 'scratch operand']
  %s0 = inlined_call_operand.vmem [shape: bf16[128,128], index: 0, kind: input, shape index: {}]
  %s1 = inlined_call_operand.vmem [shape: bf16[2,8,128], index: 1, kind: input, shape index: {}]
  %s2 = inlined_call_operand.vmem [shape: bf16[16,8], index: 2, kind: input, shape index: {}]
  %s3 = inlined_call_operand.vmem [shape: f32[16,1], index: 3, kind: input, shape index: {}]
  %s4 = inlined_call_operand.vmem [shape: bf16[4,16,16], index: 4, kind: input, shape index: {}]
  %s5 = inlined_call_operand.vmem [shape: f32[4,16,1], index: 5, kind: input, shape index: {}]
  %s6 = inlined_call_operand.vmem [shape: bf16[512,80], index: 6, kind: input, shape index: {}]
  %s7 = inlined_call_operand.vmem [shape: f32[256,1], index: 7, kind: input, shape index: {}]
  %s8 = inlined_call_operand.vmem [shape: bf16[256,256], index: 8, kind: input, shape index: {}]
  %s9 = inlined_call_operand.vmem [shape: f32[256,1], index: 9, kind: input, shape index: {}]
  %s10 = inlined_call_operand.vmem [shape: bf16[64,256], index: 10, kind: input, shape index: {}]
  %s11 = inlined_call_operand.vmem [shape: f32[64,1], index: 11, kind: input, shape index: {}]
  %s12 = inlined_call_operand.vmem [shape: bf16[8,64], index: 12, kind: input, shape index: {}]
  %s13 = inlined_call_operand.vmem [shape: f32[8,1], index: 13, kind: input, shape index: {}]
  %s14 = inlined_call_operand.vmem [shape: f32[2,8,128], index: 14, kind: output, shape index: {}]
  %s15 = sld [smem:[#allocation0]]
  $region89: #{gcn_forward.1} parent=0
    _
  %s17 = ssub.s32 1, %s15
  %s18 = scalar_select 0, %s17, %s15
  loop: start=0, step=1, limit=4
  $region2: #{gcn_forward.1} parent=0 // loop_pre_header
    _
  $region3: #{gcn_forward.1} parent=0 // loop_header
    %s20 = sphi 0, %s24
    %p21 = scmp.ge.s32.totalorder %s20, 4
    %s28 = sphi 0, %s28
    %s30 = sphi 0, %s28
    %s31 = sphi 0, %s30
    %s45 = sphi 0, %s31
    %s51 = sphi 0, %s53
    %s54 = sphi 0, %s51
    %s55 = sphi 0, %s54
    %s71 = sphi 0, %s55
    %s75 = sphi 0, %s75
    %s77 = sphi 0, %s75
    %s78 = sphi 0, %s77
    %s92 = sphi 0, %s78
    %s96 = sphi 0, %s96
    %s98 = sphi 0, %s96
    %s99 = sphi 0, %s98
    %s113 = sphi 0, %s99
    %s117 = sphi 0, %s117
    %s119 = sphi 0, %s117
    %s120 = sphi 0, %s119
    %s134 = sphi 0, %s120
    %s138 = sphi 0, %s138
    %s140 = sphi 0, %s138
    %s141 = sphi 0, %s140
    %s155 = sphi 0, %s141
    %s159 = sphi 0, %s159
    %s161 = sphi 0, %s159
    %s162 = sphi 0, %s161
    %s176 = sphi 0, %s162
    %s180 = sphi 0, %s180
    %s182 = sphi 0, %s180
    %s183 = sphi 0, %s182
    %s197 = sphi 0, %s183
    %s201 = sphi 0, %s201
    %s203 = sphi 0, %s201
    %s204 = sphi 0, %s203
    %s218 = sphi 0, %s204
    %s222 = sphi 0, %s222
    %s224 = sphi 0, %s222
    %s225 = sphi 0, %s224
    %s239 = sphi 0, %s225
    %s243 = sphi 0, %s243
    %s245 = sphi 0, %s243
    %s246 = sphi 0, %s245
    %s260 = sphi 0, %s246
    %s264 = sphi 0, %s264
    %s266 = sphi 0, %s264
    %s267 = sphi 0, %s266
    %s281 = sphi 0, %s267
    %s285 = sphi 0, %s285
    %s287 = sphi 0, %s285
    %s288 = sphi 0, %s287
    %s302 = sphi 0, %s288
    %s306 = sphi 0, %s306
    %s308 = sphi 0, %s306
    %s309 = sphi 0, %s308
    %s323 = sphi 0, %s309
    %s329 = sphi 0, %s331
    %s332 = sphi 0, %s329
    %s333 = sphi 0, %s332
    %s349 = sphi 0, %s333
  $region4: #{gcn_forward.1} parent=0 // loop_header_branch
    %23 = sbr.rel (%p21) target = $region8
  $region5: #{gcn_forward.1} parent=0 // loop_body
    %s25 = ssub.s32 %s20, 1
    %s26 = ssub.s32 %s20, 2
    %s27 = sadd.s32 %s20, 1
    %s29 = sadd.s32 %s28, 1
    %p32 = scmp.eq.s32.totalorder %s20, 1
    %p33 = scmp.ne.s32.totalorder %s28, %s30
    %p34 = scmp.eq.s32.totalorder %s20, 0
    %p35 = por %p33, %p34
    %p36 = scmp.ne.s32.totalorder %s28, %s30
    %p37 = scmp.eq.s32.totalorder %s25, 1
    %p38 = por %p36, %p37
    %p39 = scmp.ne.s32.totalorder %s30, %s31
    %p40 = scmp.eq.s32.totalorder %s25, 0
    %p41 = por %p39, %p40
    %p42 = scmp.ne.s32.totalorder %s30, %s31
    %p43 = scmp.eq.s32.totalorder %s26, 1
    %p44 = por %p42, %p43
    %p46 = scmp.ne.s32.totalorder %s31, %s45
    %p47 = scmp.eq.s32.totalorder %s26, 0
    %p48 = por %p46, %p47
    %s49 = ssub.s32 %s20, %s27
    %p50 = scmp.eq.s32.totalorder %s49, 0
    %s52 = sadd.s32 %s51, 1
    %s53 = scalar_select %p50, %s51, %s52
    %p56 = pneg %p50
    %p57 = scmp.eq.s32.totalorder %s20, 1
    %p58 = por %p56, %p57
    %p59 = scmp.ne.s32.totalorder %s51, %s54
    %p60 = scmp.eq.s32.totalorder %s20, 0
    %p61 = por %p59, %p60
    %p62 = scmp.ne.s32.totalorder %s51, %s54
    %p63 = scmp.eq.s32.totalorder %s25, 1
    %p64 = por %p62, %p63
    %p65 = scmp.ne.s32.totalorder %s54, %s55
    %p66 = scmp.eq.s32.totalorder %s25, 0
    %p67 = por %p65, %p66
    %p68 = scmp.ne.s32.totalorder %s54, %s55
    %p69 = scmp.eq.s32.totalorder %s26, 1
    %p70 = por %p68, %p69
    %p72 = scmp.ne.s32.totalorder %s55, %s71
    %p73 = scmp.eq.s32.totalorder %s26, 0
    %p74 = por %p72, %p73
    %s76 = sadd.s32 %s75, 1
    %p79 = scmp.eq.s32.totalorder %s20, 1
    %p80 = scmp.ne.s32.totalorder %s75, %s77
    %p81 = scmp.eq.s32.totalorder %s20, 0
    %p82 = por %p80, %p81
    %p83 = scmp.ne.s32.totalorder %s75, %s77
    %p84 = scmp.eq.s32.totalorder %s25, 1
    %p85 = por %p83, %p84
    %p86 = scmp.ne.s32.totalorder %s77, %s78
    %p87 = scmp.eq.s32.totalorder %s25, 0
    %p88 = por %p86, %p87
    %p89 = scmp.ne.s32.totalorder %s77, %s78
    %p90 = scmp.eq.s32.totalorder %s26, 1
    %p91 = por %p89, %p90
    %p93 = scmp.ne.s32.totalorder %s78, %s92
    %p94 = scmp.eq.s32.totalorder %s26, 0
    %p95 = por %p93, %p94
    %s97 = sadd.s32 %s96, 1
    %p100 = scmp.eq.s32.totalorder %s20, 1
    %p101 = scmp.ne.s32.totalorder %s96, %s98
    %p102 = scmp.eq.s32.totalorder %s20, 0
    %p103 = por %p101, %p102
    %p104 = scmp.ne.s32.totalorder %s96, %s98
    %p105 = scmp.eq.s32.totalorder %s25, 1
    %p106 = por %p104, %p105
    %p107 = scmp.ne.s32.totalorder %s98, %s99
    %p108 = scmp.eq.s32.totalorder %s25, 0
    %p109 = por %p107, %p108
    %p110 = scmp.ne.s32.totalorder %s98, %s99
    %p111 = scmp.eq.s32.totalorder %s26, 1
    %p112 = por %p110, %p111
    %p114 = scmp.ne.s32.totalorder %s99, %s113
    %p115 = scmp.eq.s32.totalorder %s26, 0
    %p116 = por %p114, %p115
    %s118 = sadd.s32 %s117, 1
    %p121 = scmp.eq.s32.totalorder %s20, 1
    %p122 = scmp.ne.s32.totalorder %s117, %s119
    %p123 = scmp.eq.s32.totalorder %s20, 0
    %p124 = por %p122, %p123
    %p125 = scmp.ne.s32.totalorder %s117, %s119
    %p126 = scmp.eq.s32.totalorder %s25, 1
    %p127 = por %p125, %p126
    %p128 = scmp.ne.s32.totalorder %s119, %s120
    %p129 = scmp.eq.s32.totalorder %s25, 0
    %p130 = por %p128, %p129
    %p131 = scmp.ne.s32.totalorder %s119, %s120
    %p132 = scmp.eq.s32.totalorder %s26, 1
    %p133 = por %p131, %p132
    %p135 = scmp.ne.s32.totalorder %s120, %s134
    %p136 = scmp.eq.s32.totalorder %s26, 0
    %p137 = por %p135, %p136
    %s139 = sadd.s32 %s138, 1
    %p142 = scmp.eq.s32.totalorder %s20, 1
    %p143 = scmp.ne.s32.totalorder %s138, %s140
    %p144 = scmp.eq.s32.totalorder %s20, 0
    %p145 = por %p143, %p144
    %p146 = scmp.ne.s32.totalorder %s138, %s140
    %p147 = scmp.eq.s32.totalorder %s25, 1
    %p148 = por %p146, %p147
    %p149 = scmp.ne.s32.totalorder %s140, %s141
    %p150 = scmp.eq.s32.totalorder %s25, 0
    %p151 = por %p149, %p150
    %p152 = scmp.ne.s32.totalorder %s140, %s141
    %p153 = scmp.eq.s32.totalorder %s26, 1
    %p154 = por %p152, %p153
    %p156 = scmp.ne.s32.totalorder %s141, %s155
    %p157 = scmp.eq.s32.totalorder %s26, 0
    %p158 = por %p156, %p157
    %s160 = sadd.s32 %s159, 1
    %p163 = scmp.eq.s32.totalorder %s20, 1
    %p164 = scmp.ne.s32.totalorder %s159, %s161
    %p165 = scmp.eq.s32.totalorder %s20, 0
    %p166 = por %p164, %p165
    %p167 = scmp.ne.s32.totalorder %s159, %s161
    %p168 = scmp.eq.s32.totalorder %s25, 1
    %p169 = por %p167, %p168
    %p170 = scmp.ne.s32.totalorder %s161, %s162
    %p171 = scmp.eq.s32.totalorder %s25, 0
    %p172 = por %p170, %p171
    %p173 = scmp.ne.s32.totalorder %s161, %s162
    %p174 = scmp.eq.s32.totalorder %s26, 1
    %p175 = por %p173, %p174
    %p177 = scmp.ne.s32.totalorder %s162, %s176
    %p178 = scmp.eq.s32.totalorder %s26, 0
    %p179 = por %p177, %p178
    %s181 = sadd.s32 %s180, 1
    %p184 = scmp.eq.s32.totalorder %s20, 1
    %p185 = scmp.ne.s32.totalorder %s180, %s182
    %p186 = scmp.eq.s32.totalorder %s20, 0
    %p187 = por %p185, %p186
    %p188 = scmp.ne.s32.totalorder %s180, %s182
    %p189 = scmp.eq.s32.totalorder %s25, 1
    %p190 = por %p188, %p189
    %p191 = scmp.ne.s32.totalorder %s182, %s183
    %p192 = scmp.eq.s32.totalorder %s25, 0
    %p193 = por %p191, %p192
    %p194 = scmp.ne.s32.totalorder %s182, %s183
    %p195 = scmp.eq.s32.totalorder %s26, 1
    %p196 = por %p194, %p195
    %p198 = scmp.ne.s32.totalorder %s183, %s197
    %p199 = scmp.eq.s32.totalorder %s26, 0
    %p200 = por %p198, %p199
    %s202 = sadd.s32 %s201, 1
    %p205 = scmp.eq.s32.totalorder %s20, 1
    %p206 = scmp.ne.s32.totalorder %s201, %s203
    %p207 = scmp.eq.s32.totalorder %s20, 0
    %p208 = por %p206, %p207
    %p209 = scmp.ne.s32.totalorder %s201, %s203
    %p210 = scmp.eq.s32.totalorder %s25, 1
    %p211 = por %p209, %p210
    %p212 = scmp.ne.s32.totalorder %s203, %s204
    %p213 = scmp.eq.s32.totalorder %s25, 0
    %p214 = por %p212, %p213
    %p215 = scmp.ne.s32.totalorder %s203, %s204
    %p216 = scmp.eq.s32.totalorder %s26, 1
    %p217 = por %p215, %p216
    %p219 = scmp.ne.s32.totalorder %s204, %s218
    %p220 = scmp.eq.s32.totalorder %s26, 0
    %p221 = por %p219, %p220
    %s223 = sadd.s32 %s222, 1
    %p226 = scmp.eq.s32.totalorder %s20, 1
    %p227 = scmp.ne.s32.totalorder %s222, %s224
    %p228 = scmp.eq.s32.totalorder %s20, 0
    %p229 = por %p227, %p228
    %p230 = scmp.ne.s32.totalorder %s222, %s224
    %p231 = scmp.eq.s32.totalorder %s25, 1
    %p232 = por %p230, %p231
    %p233 = scmp.ne.s32.totalorder %s224, %s225
    %p234 = scmp.eq.s32.totalorder %s25, 0
    %p235 = por %p233, %p234
    %p236 = scmp.ne.s32.totalorder %s224, %s225
    %p237 = scmp.eq.s32.totalorder %s26, 1
    %p238 = por %p236, %p237
    %p240 = scmp.ne.s32.totalorder %s225, %s239
    %p241 = scmp.eq.s32.totalorder %s26, 0
    %p242 = por %p240, %p241
    %s244 = sadd.s32 %s243, 1
    %p247 = scmp.eq.s32.totalorder %s20, 1
    %p248 = scmp.ne.s32.totalorder %s243, %s245
    %p249 = scmp.eq.s32.totalorder %s20, 0
    %p250 = por %p248, %p249
    %p251 = scmp.ne.s32.totalorder %s243, %s245
    %p252 = scmp.eq.s32.totalorder %s25, 1
    %p253 = por %p251, %p252
    %p254 = scmp.ne.s32.totalorder %s245, %s246
    %p255 = scmp.eq.s32.totalorder %s25, 0
    %p256 = por %p254, %p255
    %p257 = scmp.ne.s32.totalorder %s245, %s246
    %p258 = scmp.eq.s32.totalorder %s26, 1
    %p259 = por %p257, %p258
    %p261 = scmp.ne.s32.totalorder %s246, %s260
    %p262 = scmp.eq.s32.totalorder %s26, 0
    %p263 = por %p261, %p262
    %s265 = sadd.s32 %s264, 1
    %p268 = scmp.eq.s32.totalorder %s20, 1
    %p269 = scmp.ne.s32.totalorder %s264, %s266
    %p270 = scmp.eq.s32.totalorder %s20, 0
    %p271 = por %p269, %p270
    %p272 = scmp.ne.s32.totalorder %s264, %s266
    %p273 = scmp.eq.s32.totalorder %s25, 1
    %p274 = por %p272, %p273
    %p275 = scmp.ne.s32.totalorder %s266, %s267
    %p276 = scmp.eq.s32.totalorder %s25, 0
    %p277 = por %p275, %p276
    %p278 = scmp.ne.s32.totalorder %s266, %s267
    %p279 = scmp.eq.s32.totalorder %s26, 1
    %p280 = por %p278, %p279
    %p282 = scmp.ne.s32.totalorder %s267, %s281
    %p283 = scmp.eq.s32.totalorder %s26, 0
    %p284 = por %p282, %p283
    %s286 = sadd.s32 %s285, 1
    %p289 = scmp.eq.s32.totalorder %s20, 1
    %p290 = scmp.ne.s32.totalorder %s285, %s287
    %p291 = scmp.eq.s32.totalorder %s20, 0
    %p292 = por %p290, %p291
    %p293 = scmp.ne.s32.totalorder %s285, %s287
    %p294 = scmp.eq.s32.totalorder %s25, 1
    %p295 = por %p293, %p294
    %p296 = scmp.ne.s32.totalorder %s287, %s288
    %p297 = scmp.eq.s32.totalorder %s25, 0
    %p298 = por %p296, %p297
    %p299 = scmp.ne.s32.totalorder %s287, %s288
    %p300 = scmp.eq.s32.totalorder %s26, 1
    %p301 = por %p299, %p300
    %p303 = scmp.ne.s32.totalorder %s288, %s302
    %p304 = scmp.eq.s32.totalorder %s26, 0
    %p305 = por %p303, %p304
    %s307 = sadd.s32 %s306, 1
    %p310 = scmp.eq.s32.totalorder %s20, 1
    %p311 = scmp.ne.s32.totalorder %s306, %s308
    %p312 = scmp.eq.s32.totalorder %s20, 0
    %p313 = por %p311, %p312
    %p314 = scmp.ne.s32.totalorder %s306, %s308
    %p315 = scmp.eq.s32.totalorder %s25, 1
    %p316 = por %p314, %p315
    %p317 = scmp.ne.s32.totalorder %s308, %s309
    %p318 = scmp.eq.s32.totalorder %s25, 0
    %p319 = por %p317, %p318
    %p320 = scmp.ne.s32.totalorder %s308, %s309
    %p321 = scmp.eq.s32.totalorder %s26, 1
    %p322 = por %p320, %p321
    %p324 = scmp.ne.s32.totalorder %s309, %s323
    %p325 = scmp.eq.s32.totalorder %s26, 0
    %p326 = por %p324, %p325
    %s327 = ssub.s32 %s20, %s27
    %p328 = scmp.eq.s32.totalorder %s327, 0
    %s330 = sadd.s32 %s329, 1
    %s331 = scalar_select %p328, %s329, %s330
    %p334 = pneg %p328
    %p335 = scmp.eq.s32.totalorder %s20, 1
    %p336 = por %p334, %p335
    %p337 = scmp.ne.s32.totalorder %s329, %s332
    %p338 = scmp.eq.s32.totalorder %s20, 0
    %p339 = por %p337, %p338
    %p340 = scmp.ne.s32.totalorder %s329, %s332
    %p341 = scmp.eq.s32.totalorder %s25, 1
    %p342 = por %p340, %p341
    %p343 = scmp.ne.s32.totalorder %s332, %s333
    %p344 = scmp.eq.s32.totalorder %s25, 0
    %p345 = por %p343, %p344
    %p346 = scmp.ne.s32.totalorder %s332, %s333
    %p347 = scmp.eq.s32.totalorder %s26, 1
    %p348 = por %p346, %p347
    %p350 = scmp.ne.s32.totalorder %s333, %s349
    %p351 = scmp.eq.s32.totalorder %s26, 0
    %p352 = por %p350, %p351
    %p353 = scmp.le.s32.totalorder 1, %s20
    %p354 = scmp.lt.s32.totalorder %s20, 3
    %p355 = pnand %p353, %p354
    %p356 = pneg %p355
    // Predicated region
    $region9: #{gcn_forward.1} parent=5 // pred_check
      _
    $region10: #{gcn_forward.1} parent=5 // pred_check_branch
      %358 = sbr.rel (%p355) target = $region12
    $region11: #{gcn_forward.1} parent=5 // pred_region
      %s359 = ssub.s32 %s20, 1
      // Predicated region
      $region13: #{gcn_forward.1} parent=11 // pred_check
        %p360 = pneg %p41
      $region14: #{gcn_forward.1} parent=11 // pred_check_branch
        %362 = sbr.rel (%p360) target = $region16
      $region15: #{gcn_forward.1} parent=11 // pred_region
        _
      $region16: #{gcn_forward.1} parent=11 // pred_fallthru
        _
      // Predicated region
      $region17: #{gcn_forward.1} parent=11 // pred_check
        %p363 = pneg %p88
      $region18: #{gcn_forward.1} parent=11 // pred_check_branch
        %365 = sbr.rel (%p363) target = $region20
      $region19: #{gcn_forward.1} parent=11 // pred_region
        _
      $region20: #{gcn_forward.1} parent=11 // pred_fallthru
        _
      // Predicated region
      $region21: #{gcn_forward.1} parent=11 // pred_check
        %p366 = pneg %p109
      $region22: #{gcn_forward.1} parent=11 // pred_check_branch
        %368 = sbr.rel (%p366) target = $region24
      $region23: #{gcn_forward.1} parent=11 // pred_region
        _
      $region24: #{gcn_forward.1} parent=11 // pred_fallthru
        _
      // Predicated region
      $region25: #{gcn_forward.1} parent=11 // pred_check
        %p369 = pneg %p130
      $region26: #{gcn_forward.1} parent=11 // pred_check_branch
        %371 = sbr.rel (%p369) target = $region28
      $region27: #{gcn_forward.1} parent=11 // pred_region
        _
      $region28: #{gcn_forward.1} parent=11 // pred_fallthru
        _
      // Predicated region
      $region29: #{gcn_forward.1} parent=11 // pred_check
        %p372 = pneg %p151
      $region30: #{gcn_forward.1} parent=11 // pred_check_branch
        %374 = sbr.rel (%p372) target = $region32
      $region31: #{gcn_forward.1} parent=11 // pred_region
        _
      $region32: #{gcn_forward.1} parent=11 // pred_fallthru
        _
      // Predicated region
      $region33: #{gcn_forward.1} parent=11 // pred_check
        %p375 = pneg %p172
      $region34: #{gcn_forward.1} parent=11 // pred_check_branch
        %377 = sbr.rel (%p375) target = $region36
      $region35: #{gcn_forward.1} parent=11 // pred_region
        _
      $region36: #{gcn_forward.1} parent=11 // pred_fallthru
        _
      // Predicated region
      $region37: #{gcn_forward.1} parent=11 // pred_check
        %p378 = pneg %p193
      $region38: #{gcn_forward.1} parent=11 // pred_check_branch
        %380 = sbr.rel (%p378) target = $region40
      $region39: #{gcn_forward.1} parent=11 // pred_region
        _
      $region40: #{gcn_forward.1} parent=11 // pred_fallthru
        _
      // Predicated region
      $region41: #{gcn_forward.1} parent=11 // pred_check
        %p381 = pneg %p214
      $region42: #{gcn_forward.1} parent=11 // pred_check_branch
        %383 = sbr.rel (%p381) target = $region44
      $region43: #{gcn_forward.1} parent=11 // pred_region
        _
      $region44: #{gcn_forward.1} parent=11 // pred_fallthru
        _
      // Predicated region
      $region45: #{gcn_forward.1} parent=11 // pred_check
        %p384 = pneg %p235
      $region46: #{gcn_forward.1} parent=11 // pred_check_branch
        %386 = sbr.rel (%p384) target = $region48
      $region47: #{gcn_forward.1} parent=11 // pred_region
        _
      $region48: #{gcn_forward.1} parent=11 // pred_fallthru
        _
      // Predicated region
      $region49: #{gcn_forward.1} parent=11 // pred_check
        %p387 = pneg %p256
      $region50: #{gcn_forward.1} parent=11 // pred_check_branch
        %389 = sbr.rel (%p387) target = $region52
      $region51: #{gcn_forward.1} parent=11 // pred_region
        _
      $region52: #{gcn_forward.1} parent=11 // pred_fallthru
        _
      // Predicated region
      $region53: #{gcn_forward.1} parent=11 // pred_check
        %p390 = pneg %p277
      $region54: #{gcn_forward.1} parent=11 // pred_check_branch
        %392 = sbr.rel (%p390) target = $region56
      $region55: #{gcn_forward.1} parent=11 // pred_region
        _
      $region56: #{gcn_forward.1} parent=11 // pred_fallthru
        _
      // Predicated region
      $region57: #{gcn_forward.1} parent=11 // pred_check
        %p393 = pneg %p298
      $region58: #{gcn_forward.1} parent=11 // pred_check_branch
        %395 = sbr.rel (%p393) target = $region60
      $region59: #{gcn_forward.1} parent=11 // pred_region
        _
      $region60: #{gcn_forward.1} parent=11 // pred_fallthru
        _
      // Predicated region
      $region61: #{gcn_forward.1} parent=11 // pred_check
        %p396 = pneg %p319
      $region62: #{gcn_forward.1} parent=11 // pred_check_branch
        %398 = sbr.rel (%p396) target = $region64
      $region63: #{gcn_forward.1} parent=11 // pred_region
        _
      $region64: #{gcn_forward.1} parent=11 // pred_fallthru
        _
    $region12: #{gcn_forward.1} parent=5 // pred_fallthru
      _
    %p399 = scmp.lt.s32.totalorder %s20, 2
    // Predicated region
    $region65: #{gcn_forward.1} parent=5 // pred_check
      %p400 = pneg %p399
    $region66: #{gcn_forward.1} parent=5 // pred_check_branch
      %402 = sbr.rel (%p400) target = $region68
    $region67: #{gcn_forward.1} parent=5 // pred_region
      // Predicated region
      $region69: #{gcn_forward.1} parent=67 // pred_check
        %p403 = pneg %p61
      $region70: #{gcn_forward.1} parent=67 // pred_check_branch
        %405 = sbr.rel (%p403) target = $region72
      $region71: #{gcn_forward.1} parent=67 // pred_region
        %p406 = scmp.lt.s32.totalorder %s20, 1
        %s407 = scalar_select %p406, %s20, 1
        %s408 = smul.addr %s407, 4
        %s409 = scalar_lea.vmem %s1, %s408
      $region72: #{gcn_forward.1} parent=67 // pred_fallthru
        _
    $region68: #{gcn_forward.1} parent=5 // pred_fallthru
      _
    %p410 = scmp.le.s32.totalorder 1, %s20
    %p411 = scmp.lt.s32.totalorder %s20, 3
    %p412 = pnand %p410, %p411
    %p413 = pneg %p412
    // Predicated region
    $region73: #{gcn_forward.1} parent=5 // pred_check
      _
    $region74: #{gcn_forward.1} parent=5 // pred_check_branch
      %415 = sbr.rel (%p412) target = $region76
    $region75: #{gcn_forward.1} parent=5 // pred_region
      %s416 = ssub.s32 %s20, 1
      %p417 = pneg %p41
      %p418 = pneg %p38
      %p419 = scmp.lt.s32.totalorder %s25, 1
      %s420 = scalar_select %p419, %s25, 1
      %s421 = smul.addr %s420, 4
      %s422 = scalar_lea.vmem %s1, %s421
      %p423 = pneg %p67
      %p424 = pneg %p64
      %p425 = pneg %p88
      %p426 = pneg %p85
      %p427 = pneg %p109
      %p428 = pneg %p106
      %p429 = pneg %p130
      %p430 = pneg %p127
      %p431 = pneg %p151
      %p432 = pneg %p148
      %p433 = pneg %p172
      %p434 = pneg %p169
      %p435 = pneg %p193
      %p436 = pneg %p190
      %p437 = pneg %p214
      %p438 = pneg %p211
      %p439 = pneg %p235
      %p440 = pneg %p232
      %p441 = pneg %p256
      %p442 = pneg %p253
      %p443 = pneg %p277
      %p444 = pneg %p274
      %p445 = pneg %p298
      %p446 = pneg %p295
      %p447 = pneg %p319
      %p448 = pneg %p316
      %p449 = pneg %p345
      %p450 = pneg %p342
      %p451 = scmp.lt.s32.totalorder %s25, 1
      %s452 = scalar_select %p451, %s25, 1
      %s453 = smul.addr %s452, 8
      %s454 = scalar_lea.vmem %s14, %s453
      %p455 = scmp.lt.s32.totalorder %s25, 1
      %s456 = scalar_select %p455, %s25, 1
      %s457 = smul.addr %s456, 4
      %s458 = scalar_lea.vmem %s1, %s457
      %p459 = scmp.lt.s32.totalorder %s25, 1
      %s460 = scalar_select %p459, %s25, 1
      %s461 = smul.addr %s460, 8
      %s462 = scalar_lea.vmem %s14, %s461
      %v464 = vld [vmem:[%s0] sm:$0xf]
      %v465 = vld [vmem:[%s0 + $0x4] sm:$0xf]
      %v466 = vld [vmem:[%s0 + $0x8] sm:$0xf]
      %v467 = vld [vmem:[%s0 + $0xc] sm:$0xf]
      %v468 = vld [vmem:[%s0 + $0x10] sm:$0xf]
      %v469 = vld [vmem:[%s0 + $0x14] sm:$0xf]
      %v470 = vld [vmem:[%s0 + $0x18] sm:$0xf]
      %v471 = vld [vmem:[%s0 + $0x1c] sm:$0xf]
      %v472 = vld [vmem:[%s0 + $0x20] sm:$0xf]
      %v473 = vld [vmem:[%s0 + $0x24] sm:$0xf]
      %v474 = vld [vmem:[%s0 + $0x28] sm:$0xf]
      %v475 = vld [vmem:[%s0 + $0x2c] sm:$0xf]
      %v476 = vld [vmem:[%s0 + $0x30] sm:$0xf]
      %v477 = vld [vmem:[%s0 + $0x34] sm:$0xf]
      %v478 = vld [vmem:[%s0 + $0x38] sm:$0xf]
      %v479 = vld [vmem:[%s0 + $0x3c] sm:$0xf]
      %v480 = vld [vmem:[%s458] sm:$0xf]
      %v497 = vunpack.c.l.b16 %v464
      %v498 = vunpack.c.l.b16 %v465
      %v499 = vunpack.c.l.b16 %v466
      %v500 = vunpack.c.l.b16 %v467
      %v501 = vunpack.c.l.b16 %v468
      %v502 = vunpack.c.l.b16 %v469
      %v503 = vunpack.c.l.b16 %v470
      %v504 = vunpack.c.l.b16 %v471
      %v505 = vunpack.c.l.b16 %v472
      %v506 = vunpack.c.l.b16 %v473
      %v507 = vunpack.c.l.b16 %v474
      %v508 = vunpack.c.l.b16 %v475
      %v509 = vunpack.c.l.b16 %v476
      %v510 = vunpack.c.l.b16 %v477
      %v511 = vunpack.c.l.b16 %v478
      %v512 = vunpack.c.l.b16 %v479
      %v513 = vpack.c.b16 %v498, %v497
      %v514 = vpack.c.b16 %v500, %v499
      %v515 = vpack.c.b16 %v502, %v501
      %v516 = vpack.c.b16 %v504, %v503
      %v517 = vpack.c.b16 %v506, %v505
      %v518 = vpack.c.b16 %v508, %v507
      %v519 = vpack.c.b16 %v510, %v509
      %v520 = vpack.c.b16 %v512, %v511
      %529 = vmatprep.subr.bf16.mxu0 0
      %530 = vmatpush1.bf16.msra.mxu0 %v513
      %531 = vmatprep.subr.bf16.mxu0 0
      %532 = vmatpush1.bf16.msra.mxu0 %v514
      %533 = vmatprep.subr.bf16.mxu0 0
      %534 = vmatpush1.bf16.msra.mxu0 %v515
      %535 = vmatprep.subr.bf16.mxu0 0
      %536 = vmatpush1.bf16.msra.mxu0 %v516
      %537 = vmatprep.subr.bf16.mxu0 0
      %538 = vmatpush1.bf16.msra.mxu0 %v517
      %539 = vmatprep.subr.bf16.mxu0 0
      %540 = vmatpush1.bf16.msra.mxu0 %v518
      %541 = vmatprep.subr.bf16.mxu0 0
      %542 = vmatpush1.bf16.msra.mxu0 %v519
      %543 = vmatprep.subr.bf16.mxu0 0
      %544 = vmatpush1.bf16.msra.mxu0 %v520
      %545 = vmatprep.subr.bf16.mxu0 0
      %546 = vmatpush1.bf16.msra.mxu0 0
      %547 = vmatprep.subr.bf16.mxu0 0
      %548 = vmatpush1.bf16.msra.mxu0 0
      %549 = vmatprep.subr.bf16.mxu0 0
      %550 = vmatpush1.bf16.msra.mxu0 0
      %551 = vmatprep.subr.bf16.mxu0 0
      %552 = vmatpush1.bf16.msra.mxu0 0
      %553 = vmatprep.subr.bf16.mxu0 0
      %554 = vmatpush1.bf16.msra.mxu0 0
      %555 = vmatprep.subr.bf16.mxu0 0
      %556 = vmatpush1.bf16.msra.mxu0 0
      %557 = vmatprep.subr.bf16.mxu0 0
      %558 = vmatpush1.bf16.msra.mxu0 0
      %559 = vmatprep.subr.bf16.mxu0 0
      %560 = vmatpush1.bf16.msra.mxu0 0
      %561 = vmatprep.mubr.bf16.mxu0 0
      %562 = vmatmul.mubr.bf16.gmra.mrb[0].mxu0 %v480
      %v563 = vpop.f32.mrb[0].mxu0
      %v564 = vadd.f32 0.0, %v563
      %v565 = vpop.f32.mrb[0].mxu0
      %v566 = vpop.f32.mrb[0].mxu0
      %v567 = vpop.f32.mrb[0].mxu0
      %568 = vdwg.mxu0
      %v569 = vld [vmem:[%s2] sm:$0xf]
      %v570 = vld [vmem:[%s2 + $0x4] sm:$0xf]
      %v571 = vpack.c.bf16 %v564, %v564
      %v572 = vld [vmem:[%s3] sm:$0xff]
      %v573 = vld [vmem:[%s3 + $0x8] sm:$0xff]
      %575 = vset.pattern.permute.xlu0 0
      %576 = vperm.xlu0 %575, %v572
      %v577 = vpop.permute.xlu0 %576
      %580 = vset.pattern.permute.xlu0 0
      %581 = vperm.xlu0 %580, %v573
      %v582 = vpop.permute.xlu0 %581
      %v586 = vunpack.c.l.b16 %v569
      %v587 = vunpack.c.l.b16 %v570
      %v588 = vpack.c.b16 %v587, %v586
      %vm589 = vcmask 64512
      %v591 = vsel %vm589, %v588, 0
      %vm593 = vcmask 1043456
      %v595 = vsel %vm593, %v571, 0
      %597 = vmatprep.subr.bf16.mxu0 0
      %598 = vmatpush1.bf16.msra.mxu0 %v595
      %599 = vmatprep.subr.bf16.mxu0 0
      %600 = vmatpush1.bf16.msra.mxu0 0
      %601 = vmatprep.subr.bf16.mxu0 0
      %602 = vmatpush1.bf16.msra.mxu0 0
      %603 = vmatprep.subr.bf16.mxu0 0
      %604 = vmatpush1.bf16.msra.mxu0 0
      %605 = vmatprep.subr.bf16.mxu0 0
      %606 = vmatpush1.bf16.msra.mxu0 0
      %607 = vmatprep.subr.bf16.mxu0 0
      %608 = vmatpush1.bf16.msra.mxu0 0
      %609 = vmatprep.subr.bf16.mxu0 0
      %610 = vmatpush1.bf16.msra.mxu0 0
      %611 = vmatprep.subr.bf16.mxu0 0
      %612 = vmatpush1.bf16.msra.mxu0 0
      %613 = vmatprep.subr.bf16.mxu0 0
      %614 = vmatpush1.bf16.msra.mxu0 0
      %615 = vmatprep.subr.bf16.mxu0 0
      %616 = vmatpush1.bf16.msra.mxu0 0
      %617 = vmatprep.subr.bf16.mxu0 0
      %618 = vmatpush1.bf16.msra.mxu0 0
      %619 = vmatprep.subr.bf16.mxu0 0
      %620 = vmatpush1.bf16.msra.mxu0 0
      %621 = vmatprep.subr.bf16.mxu0 0
      %622 = vmatpush1.bf16.msra.mxu0 0
      %623 = vmatprep.subr.bf16.mxu0 0
      %624 = vmatpush1.bf16.msra.mxu0 0
      %625 = vmatprep.subr.bf16.mxu0 0
      %626 = vmatpush1.bf16.msra.mxu0 0
      %627 = vmatprep.subr.bf16.mxu0 0
      %628 = vmatpush1.bf16.msra.mxu0 0
      %629 = vmatprep.mubr.bf16.mxu0 0
      %630 = vmatmul.mubr.bf16.gmra.mrb[0].mxu0 %v591
      %v631 = vpop.f32.mrb[0].mxu0
      %v632 = vadd.f32 %v577, %v631
      %v633 = vpop.f32.mrb[0].mxu0
      %v634 = vpop.f32.mrb[0].mxu0
      %v635 = vadd.f32 %v582, %v634
      %v636 = vpop.f32.mrb[0].mxu0
      %637 = vdwg.mxu0
      %v638 = vmax.f32 %v632, 0.0
      %v639 = vmax.f32 %v635, 0.0
      %v640 = vpack.c.bf16 %v639, %v638
      %641 = vst [vmem:[#allocation2] sm:$0xff] %v640
      %v642 = vld [vmem:[%s4] sm:$0xf]
      %v643 = vld [vmem:[%s4 + $0x4] sm:$0xf]
      %v646 = vunpack.c.l.b16 %v642
      %v647 = vunpack.c.l.b16 %v643
      %v648 = vpack.c.b16 %v647, %v646
      %vm649 = vcmask 130048
      %v651 = vsel %vm649, %v648, 0
      %653 = vmatprep.subr.bf16.mxu0 0
      %654 = vmatpush1.bf16.msra.mxu0 %v640
      %655 = vmatprep.subr.bf16.mxu0 0
      %656 = vmatpush1.bf16.msra.mxu0 0
      %657 = vmatprep.subr.bf16.mxu0 0
      %658 = vmatpush1.bf16.msra.mxu0 0
      %659 = vmatprep.subr.bf16.mxu0 0
      %660 = vmatpush1.bf16.msra.mxu0 0
      %661 = vmatprep.subr.bf16.mxu0 0
      %662 = vmatpush1.bf16.msra.mxu0 0
      %663 = vmatprep.subr.bf16.mxu0 0
      %664 = vmatpush1.bf16.msra.mxu0 0
      %665 = vmatprep.subr.bf16.mxu0 0
      %666 = vmatpush1.bf16.msra.mxu0 0
      %667 = vmatprep.subr.bf16.mxu0 0
      %668 = vmatpush1.bf16.msra.mxu0 0
      %669 = vmatprep.subr.bf16.mxu0 0
      %670 = vmatpush1.bf16.msra.mxu0 0
      %671 = vmatprep.subr.bf16.mxu0 0
      %672 = vmatpush1.bf16.msra.mxu0 0
      %673 = vmatprep.subr.bf16.mxu0 0
      %674 = vmatpush1.bf16.msra.mxu0 0
      %675 = vmatprep.subr.bf16.mxu0 0
      %676 = vmatpush1.bf16.msra.mxu0 0
      %677 = vmatprep.subr.bf16.mxu0 0
      %678 = vmatpush1.bf16.msra.mxu0 0
      %679 = vmatprep.subr.bf16.mxu0 0
      %680 = vmatpush1.bf16.msra.mxu0 0
      %681 = vmatprep.subr.bf16.mxu0 0
      %682 = vmatpush1.bf16.msra.mxu0 0
      %683 = vmatprep.subr.bf16.mxu0 0
      %684 = vmatpush1.bf16.msra.mxu0 0
      %685 = vmatprep.mubr.bf16.mxu0 0
      %686 = vmatmul.mubr.bf16.gmra.mrb[0].mxu0 %v651
      %v687 = vpop.f32.mrb[0].mxu0
      %v688 = vadd.f32 0.0, %v687
      %v689 = vpop.f32.mrb[0].mxu0
      %v690 = vpop.f32.mrb[0].mxu0
      %v691 = vadd.f32 0.0, %v690
      %v692 = vpop.f32.mrb[0].mxu0
      %693 = vdwg.mxu0
      %v694 = vpack.c.bf16 %v691, %v688
      %v695 = vld [vmem:[%s5] sm:$0xff]
      %v696 = vld [vmem:[%s5 + $0x8] sm:$0xff]
      %698 = vset.pattern.permute.xlu0 0
      %699 = vperm.xlu0 %698, %v695
      %v700 = vpop.permute.xlu0 %699
      %703 = vset.pattern.permute.xlu0 0
      %704 = vperm.xlu0 %703, %v696
      %v705 = vpop.permute.xlu0 %704
      %707 = vmatprep.subr.bf16.mxu0 0
      %708 = vmatpush1.bf16.msra.mxu0 %v513
      %709 = vmatprep.subr.bf16.mxu0 0
      %710 = vmatpush1.bf16.msra.mxu0 %v514
      %711 = vmatprep.subr.bf16.mxu0 0
      %712 = vmatpush1.bf16.msra.mxu0 %v515
      %713 = vmatprep.subr.bf16.mxu0 0
      %714 = vmatpush1.bf16.msra.mxu0 %v516
      %715 = vmatprep.subr.bf16.mxu0 0
      %716 = vmatpush1.bf16.msra.mxu0 %v517
      %717 = vmatprep.subr.bf16.mxu0 0
      %718 = vmatpush1.bf16.msra.mxu0 %v518
      %719 = vmatprep.subr.bf16.mxu0 0
      %720 = vmatpush1.bf16.msra.mxu0 %v519
      %721 = vmatprep.subr.bf16.mxu0 0
      %722 = vmatpush1.bf16.msra.mxu0 %v520
      %723 = vmatprep.subr.bf16.mxu0 0
      %724 = vmatpush1.bf16.msra.mxu0 0
      %725 = vmatprep.subr.bf16.mxu0 0
      %726 = vmatpush1.bf16.msra.mxu0 0
      %727 = vmatprep.subr.bf16.mxu0 0
      %728 = vmatpush1.bf16.msra.mxu0 0
      %729 = vmatprep.subr.bf16.mxu0 0
      %730 = vmatpush1.bf16.msra.mxu0 0
      %731 = vmatprep.subr.bf16.mxu0 0
      %732 = vmatpush1.bf16.msra.mxu0 0
      %733 = vmatprep.subr.bf16.mxu0 0
      %734 = vmatpush1.bf16.msra.mxu0 0
      %735 = vmatprep.subr.bf16.mxu0 0
      %736 = vmatpush1.bf16.msra.mxu0 0
      %737 = vmatprep.subr.bf16.mxu0 0
      %738 = vmatpush1.bf16.msra.mxu0 0
      %739 = vmatprep.mubr.bf16.mxu0 0
      %740 = vmatmul.mubr.bf16.gmra.mrb[0].mxu0 %v694
      %v741 = vpop.f32.mrb[0].mxu0
      %v742 = vadd.f32 %v700, %v741
      %v743 = vpop.f32.mrb[0].mxu0
      %v744 = vpop.f32.mrb[0].mxu0
      %v745 = vadd.f32 %v705, %v744
      %v746 = vpop.f32.mrb[0].mxu0
      %747 = vdwg.mxu0
      %v748 = vmax.f32 %v742, 0.0
      %v749 = vmax.f32 %v745, 0.0
      %v750 = vadd.f32 %v748, %v638
      %v751 = vadd.f32 %v749, %v639
      %v752 = vpack.c.bf16 %v751, %v750
      %753 = vst [vmem:[#allocation2 + $0x8] sm:$0xff] %v752
      %s754 = scalar_lea.vmem %s4, 8
      %v755 = vld [vmem:[%s754] sm:$0xf]
      %v756 = vld [vmem:[%s754 + $0x4] sm:$0xf]
      %v759 = vunpack.c.l.b16 %v755
      %v760 = vunpack.c.l.b16 %v756
      %v761 = vpack.c.b16 %v760, %v759
      %v763 = vsel %vm649, %v761, 0
      %765 = vmatprep.subr.bf16.mxu0 0
      %766 = vmatpush1.bf16.msra.mxu0 %v752
      %767 = vmatprep.subr.bf16.mxu0 0
      %768 = vmatpush1.bf16.msra.mxu0 0
      %769 = vmatprep.subr.bf16.mxu0 0
      %770 = vmatpush1.bf16.msra.mxu0 0
      %771 = vmatprep.subr.bf16.mxu0 0
      %772 = vmatpush1.bf16.msra.mxu0 0
      %773 = vmatprep.subr.bf16.mxu0 0
      %774 = vmatpush1.bf16.msra.mxu0 0
      %775 = vmatprep.subr.bf16.mxu0 0
      %776 = vmatpush1.bf16.msra.mxu0 0
      %777 = vmatprep.subr.bf16.mxu0 0
      %778 = vmatpush1.bf16.msra.mxu0 0
      %779 = vmatprep.subr.bf16.mxu0 0
      %780 = vmatpush1.bf16.msra.mxu0 0
      %781 = vmatprep.subr.bf16.mxu0 0
      %782 = vmatpush1.bf16.msra.mxu0 0
      %783 = vmatprep.subr.bf16.mxu0 0
      %784 = vmatpush1.bf16.msra.mxu0 0
      %785 = vmatprep.subr.bf16.mxu0 0
      %786 = vmatpush1.bf16.msra.mxu0 0
      %787 = vmatprep.subr.bf16.mxu0 0
      %788 = vmatpush1.bf16.msra.mxu0 0
      %789 = vmatprep.subr.bf16.mxu0 0
      %790 = vmatpush1.bf16.msra.mxu0 0
      %791 = vmatprep.subr.bf16.mxu0 0
      %792 = vmatpush1.bf16.msra.mxu0 0
      %793 = vmatprep.subr.bf16.mxu0 0
      %794 = vmatpush1.bf16.msra.mxu0 0
      %795 = vmatprep.subr.bf16.mxu0 0
      %796 = vmatpush1.bf16.msra.mxu0 0
      %797 = vmatprep.mubr.bf16.mxu0 0
      %798 = vmatmul.mubr.bf16.gmra.mrb[0].mxu0 %v763
      %v799 = vpop.f32.mrb[0].mxu0
      %v800 = vadd.f32 0.0, %v799
      %v801 = vpop.f32.mrb[0].mxu0
      %v802 = vpop.f32.mrb[0].mxu0
      %v803 = vadd.f32 0.0, %v802
      %v804 = vpop.f32.mrb[0].mxu0
      %805 = vdwg.mxu0
      %v806 = vpack.c.bf16 %v803, %v800
      %s807 = scalar_lea.vmem %s5, 16
      %v808 = vld [vmem:[%s807] sm:$0xff]
      %v809 = vld [vmem:[%s807 + $0x8] sm:$0xff]
      %811 = vset.pattern.permute.xlu0 0
      %812 = vperm.xlu0 %811, %v808
      %v813 = vpop.permute.xlu0 %812
      %816 = vset.pattern.permute.xlu0 0
      %817 = vperm.xlu0 %816, %v809
      %v818 = vpop.permute.xlu0 %817
      %820 = vmatprep.subr.bf16.mxu0 0
      %821 = vmatpush1.bf16.msra.mxu0 %v513
      %822 = vmatprep.subr.bf16.mxu0 0
      %823 = vmatpush1.bf16.msra.mxu0 %v514
      %824 = vmatprep.subr.bf16.mxu0 0
      %825 = vmatpush1.bf16.msra.mxu0 %v515
      %826 = vmatprep.subr.bf16.mxu0 0
      %827 = vmatpush1.bf16.msra.mxu0 %v516
      %828 = vmatprep.subr.bf16.mxu0 0
      %829 = vmatpush1.bf16.msra.mxu0 %v517
      %830 = vmatprep.subr.bf16.mxu0 0
      %831 = vmatpush1.bf16.msra.mxu0 %v518
      %832 = vmatprep.subr.bf16.mxu0 0
      %833 = vmatpush1.bf16.msra.mxu0 %v519
      %834 = vmatprep.subr.bf16.mxu0 0
      %835 = vmatpush1.bf16.msra.mxu0 %v520
      %836 = vmatprep.subr.bf16.mxu0 0
      %837 = vmatpush1.bf16.msra.mxu0 0
      %838 = vmatprep.subr.bf16.mxu0 0
      %839 = vmatpush1.bf16.msra.mxu0 0
      %840 = vmatprep.subr.bf16.mxu0 0
      %841 = vmatpush1.bf16.msra.mxu0 0
      %842 = vmatprep.subr.bf16.mxu0 0
      %843 = vmatpush1.bf16.msra.mxu0 0
      %844 = vmatprep.subr.bf16.mxu0 0
      %845 = vmatpush1.bf16.msra.mxu0 0
      %846 = vmatprep.subr.bf16.mxu0 0
      %847 = vmatpush1.bf16.msra.mxu0 0
      %848 = vmatprep.subr.bf16.mxu0 0
      %849 = vmatpush1.bf16.msra.mxu0 0
      %850 = vmatprep.subr.bf16.mxu0 0
      %851 = vmatpush1.bf16.msra.mxu0 0
      %852 = vmatprep.mubr.bf16.mxu0 0
      %853 = vmatmul.mubr.bf16.gmra.mrb[0].mxu0 %v806
      %v854 = vpop.f32.mrb[0].mxu0
      %v855 = vadd.f32 %v813, %v854
      %v856 = vpop.f32.mrb[0].mxu0
      %v857 = vpop.f32.mrb[0].mxu0
      %v858 = vadd.f32 %v818, %v857
      %v859 = vpop.f32.mrb[0].mxu0
      %860 = vdwg.mxu0
      %v861 = vmax.f32 %v855, 0.0
      %v862 = vmax.f32 %v858, 0.0
      %v863 = vadd.f32 %v861, %v750
      %v864 = vadd.f32 %v862, %v751
      %v865 = vpack.c.bf16 %v864, %v863
      %866 = vst [vmem:[#allocation2 + $0x10] sm:$0xff] %v865
      %s867 = scalar_lea.vmem %s4, 16
      %v868 = vld [vmem:[%s867] sm:$0xf]
      %v869 = vld [vmem:[%s867 + $0x4] sm:$0xf]
      %v872 = vunpack.c.l.b16 %v868
      %v873 = vunpack.c.l.b16 %v869
      %v874 = vpack.c.b16 %v873, %v872
      %v876 = vsel %vm649, %v874, 0
      %878 = vmatprep.subr.bf16.mxu0 0
      %879 = vmatpush1.bf16.msra.mxu0 %v865
      %880 = vmatprep.subr.bf16.mxu0 0
      %881 = vmatpush1.bf16.msra.mxu0 0
      %882 = vmatprep.subr.bf16.mxu0 0
      %883 = vmatpush1.bf16.msra.mxu0 0
      %884 = vmatprep.subr.bf16.mxu0 0
      %885 = vmatpush1.bf16.msra.mxu0 0
      %886 = vmatprep.subr.bf16.mxu0 0
      %887 = vmatpush1.bf16.msra.mxu0 0
      %888 = vmatprep.subr.bf16.mxu0 0
      %889 = vmatpush1.bf16.msra.mxu0 0
      %890 = vmatprep.subr.bf16.mxu0 0
      %891 = vmatpush1.bf16.msra.mxu0 0
      %892 = vmatprep.subr.bf16.mxu0 0
      %893 = vmatpush1.bf16.msra.mxu0 0
      %894 = vmatprep.subr.bf16.mxu0 0
      %895 = vmatpush1.bf16.msra.mxu0 0
      %896 = vmatprep.subr.bf16.mxu0 0
      %897 = vmatpush1.bf16.msra.mxu0 0
      %898 = vmatprep.subr.bf16.mxu0 0
      %899 = vmatpush1.bf16.msra.mxu0 0
      %900 = vmatprep.subr.bf16.mxu0 0
      %901 = vmatpush1.bf16.msra.mxu0 0
      %902 = vmatprep.subr.bf16.mxu0 0
      %903 = vmatpush1.bf16.msra.mxu0 0
      %904 = vmatprep.subr.bf16.mxu0 0
      %905 = vmatpush1.bf16.msra.mxu0 0
      %906 = vmatprep.subr.bf16.mxu0 0
      %907 = vmatpush1.bf16.msra.mxu0 0
      %908 = vmatprep.subr.bf16.mxu0 0
      %909 = vmatpush1.bf16.msra.mxu0 0
      %910 = vmatprep.mubr.bf16.mxu0 0
      %911 = vmatmul.mubr.bf16.gmra.mrb[0].mxu0 %v876
      %v912 = vpop.f32.mrb[0].mxu0
      %v913 = vadd.f32 0.0, %v912
      %v914 = vpop.f32.mrb[0].mxu0
      %v915 = vpop.f32.mrb[0].mxu0
      %v916 = vadd.f32 0.0, %v915
      %v917 = vpop.f32.mrb[0].mxu0
      %918 = vdwg.mxu0
      %v919 = vpack.c.bf16 %v916, %v913
      %s920 = scalar_lea.vmem %s5, 32
      %v921 = vld [vmem:[%s920] sm:$0xff]
      %v922 = vld [vmem:[%s920 + $0x8] sm:$0xff]
      %924 = vset.pattern.permute.xlu0 0
      %925 = vperm.xlu0 %924, %v921
      %v926 = vpop.permute.xlu0 %925
      %929 = vset.pattern.permute.xlu0 0
      %930 = vperm.xlu0 %929, %v922
      %v931 = vpop.permute.xlu0 %930
      %933 = vmatprep.subr.bf16.mxu0 0
      %934 = vmatpush1.bf16.msra.mxu0 %v513
      %935 = vmatprep.subr.bf16.mxu0 0
      %936 = vmatpush1.bf16.msra.mxu0 %v514
      %937 = vmatprep.subr.bf16.mxu0 0
      %938 = vmatpush1.bf16.msra.mxu0 %v515
      %939 = vmatprep.subr.bf16.mxu0 0
      %940 = vmatpush1.bf16.msra.mxu0 %v516
      %941 = vmatprep.subr.bf16.mxu0 0
      %942 = vmatpush1.bf16.msra.mxu0 %v517
      %943 = vmatprep.subr.bf16.mxu0 0
      %944 = vmatpush1.bf16.msra.mxu0 %v518
      %945 = vmatprep.subr.bf16.mxu0 0
      %946 = vmatpush1.bf16.msra.mxu0 %v519
      %947 = vmatprep.subr.bf16.mxu0 0
      %948 = vmatpush1.bf16.msra.mxu0 %v520
      %949 = vmatprep.subr.bf16.mxu0 0
      %950 = vmatpush1.bf16.msra.mxu0 0
      %951 = vmatprep.subr.bf16.mxu0 0
      %952 = vmatpush1.bf16.msra.mxu0 0
      %953 = vmatprep.subr.bf16.mxu0 0
      %954 = vmatpush1.bf16.msra.mxu0 0
      %955 = vmatprep.subr.bf16.mxu0 0
      %956 = vmatpush1.bf16.msra.mxu0 0
      %957 = vmatprep.subr.bf16.mxu0 0
      %958 = vmatpush1.bf16.msra.mxu0 0
      %959 = vmatprep.subr.bf16.mxu0 0
      %960 = vmatpush1.bf16.msra.mxu0 0
      %961 = vmatprep.subr.bf16.mxu0 0
      %962 = vmatpush1.bf16.msra.mxu0 0
      %963 = vmatprep.subr.bf16.mxu0 0
      %964 = vmatpush1.bf16.msra.mxu0 0
      %965 = vmatprep.mubr.bf16.mxu0 0
      %966 = vmatmul.mubr.bf16.gmra.mrb[0].mxu0 %v919
      %v967 = vpop.f32.mrb[0].mxu0
      %v968 = vadd.f32 %v926, %v967
      %v969 = vpop.f32.mrb[0].mxu0
      %v970 = vpop.f32.mrb[0].mxu0
      %v971 = vadd.f32 %v931, %v970
      %v972 = vpop.f32.mrb[0].mxu0
      %973 = vdwg.mxu0
      %v974 = vmax.f32 %v968, 0.0
      %v975 = vmax.f32 %v971, 0.0
      %v976 = vadd.f32 %v974, %v863
      %v977 = vadd.f32 %v975, %v864
      %v978 = vpack.c.bf16 %v977, %v976
      %979 = vst [vmem:[#allocation2 + $0x18] sm:$0xff] %v978
      %s980 = scalar_lea.vmem %s4, 24
      %v981 = vld [vmem:[%s980] sm:$0xf]
      %v982 = vld [vmem:[%s980 + $0x4] sm:$0xf]
      %v985 = vunpack.c.l.b16 %v981
      %v986 = vunpack.c.l.b16 %v982
      %v987 = vpack.c.b16 %v986, %v985
      %v989 = vsel %vm649, %v987, 0
      %991 = vmatprep.subr.bf16.mxu0 0
      %992 = vmatpush1.bf16.msra.mxu0 %v978
      %993 = vmatprep.subr.bf16.mxu0 0
      %994 = vmatpush1.bf16.msra.mxu0 0
      %995 = vmatprep.subr.bf16.mxu0 0
      %996 = vmatpush1.bf16.msra.mxu0 0
      %997 = vmatprep.subr.bf16.mxu0 0
      %998 = vmatpush1.bf16.msra.mxu0 0
      %999 = vmatprep.subr.bf16.mxu0 0
      %1000 = vmatpush1.bf16.msra.mxu0 0
      %1001 = vmatprep.subr.bf16.mxu0 0
      %1002 = vmatpush1.bf16.msra.mxu0 0
      %1003 = vmatprep.subr.bf16.mxu0 0
      %1004 = vmatpush1.bf16.msra.mxu0 0
      %1005 = vmatprep.subr.bf16.mxu0 0
      %1006 = vmatpush1.bf16.msra.mxu0 0
      %1007 = vmatprep.subr.bf16.mxu0 0
      %1008 = vmatpush1.bf16.msra.mxu0 0
      %1009 = vmatprep.subr.bf16.mxu0 0
      %1010 = vmatpush1.bf16.msra.mxu0 0
      %1011 = vmatprep.subr.bf16.mxu0 0
      %1012 = vmatpush1.bf16.msra.mxu0 0
      %1013 = vmatprep.subr.bf16.mxu0 0
      %1014 = vmatpush1.bf16.msra.mxu0 0
      %1015 = vmatprep.subr.bf16.mxu0 0
      %1016 = vmatpush1.bf16.msra.mxu0 0
      %1017 = vmatprep.subr.bf16.mxu0 0
      %1018 = vmatpush1.bf16.msra.mxu0 0
      %1019 = vmatprep.subr.bf16.mxu0 0
      %1020 = vmatpush1.bf16.msra.mxu0 0
      %1021 = vmatprep.subr.bf16.mxu0 0
      %1022 = vmatpush1.bf16.msra.mxu0 0
      %1023 = vmatprep.mubr.bf16.mxu0 0
      %1024 = vmatmul.mubr.bf16.gmra.mrb[0].mxu0 %v989
      %v1025 = vpop.f32.mrb[0].mxu0
      %v1026 = vadd.f32 0.0, %v1025
      %v1027 = vpop.f32.mrb[0].mxu0
      %v1028 = vpop.f32.mrb[0].mxu0
      %v1029 = vadd.f32 0.0, %v1028
      %v1030 = vpop.f32.mrb[0].mxu0
      %1031 = vdwg.mxu0
      %v1032 = vpack.c.bf16 %v1029, %v1026
      %s1033 = scalar_lea.vmem %s5, 48
      %v1034 = vld [vmem:[%s1033] sm:$0xff]
      %v1035 = vld [vmem:[%s1033 + $0x8] sm:$0xff]
      %1037 = vset.pattern.permute.xlu0 0
      %1038 = vperm.xlu0 %1037, %v1034
      %v1039 = vpop.permute.xlu0 %1038
      %1042 = vset.pattern.permute.xlu0 0
      %1043 = vperm.xlu0 %1042, %v1035
      %v1044 = vpop.permute.xlu0 %1043
      %1046 = vmatprep.subr.bf16.mxu0 0
      %1047 = vmatpush1.bf16.msra.mxu0 %v513
      %1048 = vmatprep.subr.bf16.mxu0 0
      %1049 = vmatpush1.bf16.msra.mxu0 %v514
      %1050 = vmatprep.subr.bf16.mxu0 0
      %1051 = vmatpush1.bf16.msra.mxu0 %v515
      %1052 = vmatprep.subr.bf16.mxu0 0
      %1053 = vmatpush1.bf16.msra.mxu0 %v516
      %1054 = vmatprep.subr.bf16.mxu0 0
      %1055 = vmatpush1.bf16.msra.mxu0 %v517
      %1056 = vmatprep.subr.bf16.mxu0 0
      %1057 = vmatpush1.bf16.msra.mxu0 %v518
      %1058 = vmatprep.subr.bf16.mxu0 0
      %1059 = vmatpush1.bf16.msra.mxu0 %v519
      %1060 = vmatprep.subr.bf16.mxu0 0
      %1061 = vmatpush1.bf16.msra.mxu0 %v520
      %1062 = vmatprep.subr.bf16.mxu0 0
      %1063 = vmatpush1.bf16.msra.mxu0 0
      %1064 = vmatprep.subr.bf16.mxu0 0
      %1065 = vmatpush1.bf16.msra.mxu0 0
      %1066 = vmatprep.subr.bf16.mxu0 0
      %1067 = vmatpush1.bf16.msra.mxu0 0
      %1068 = vmatprep.subr.bf16.mxu0 0
      %1069 = vmatpush1.bf16.msra.mxu0 0
      %1070 = vmatprep.subr.bf16.mxu0 0
      %1071 = vmatpush1.bf16.msra.mxu0 0
      %1072 = vmatprep.subr.bf16.mxu0 0
      %1073 = vmatpush1.bf16.msra.mxu0 0
      %1074 = vmatprep.subr.bf16.mxu0 0
      %1075 = vmatpush1.bf16.msra.mxu0 0
      %1076 = vmatprep.subr.bf16.mxu0 0
      %1077 = vmatpush1.bf16.msra.mxu0 0
      %1078 = vmatprep.mubr.bf16.mxu0 0
      %1079 = vmatmul.mubr.bf16.gmra.mrb[0].mxu0 %v1032
      %v1080 = vpop.f32.mrb[0].mxu0
      %v1081 = vadd.f32 %v1039, %v1080
      %v1082 = vpop.f32.mrb[0].mxu0
      %v1083 = vpop.f32.mrb[0].mxu0
      %v1084 = vadd.f32 %v1044, %v1083
      %v1085 = vpop.f32.mrb[0].mxu0
      %1086 = vdwg.mxu0
      %v1087 = vmax.f32 %v1081, 0.0
      %v1088 = vmax.f32 %v1084, 0.0
      %v1089 = vadd.f32 %v1087, %v976
      %v1090 = vadd.f32 %v1088, %v977
      %v1091 = vpack.c.bf16 %v1090, %v1089
      %1092 = vst [vmem:[#allocation2 + $0x20] sm:$0xff] %v1091
      %v1093 = vld [vmem:[#allocation2] sm:$0xff]
      %v1094 = vld [vmem:[#allocation2 + $0x8] sm:$0xff]
      %v1095 = vld [vmem:[#allocation2 + $0x10] sm:$0xff]
      %v1096 = vld [vmem:[#allocation2 + $0x18] sm:$0xff]
      %v1097 = vld [vmem:[#allocation2 + $0x20] sm:$0xff]
      %v1098 = vld [vmem:[%s6] sm:$0xf]
      %v1099 = vld [vmem:[%s6 + $0x4] sm:$0xf]
      %v1100 = vld [vmem:[%s6 + $0x8] sm:$0xf]
      %v1101 = vld [vmem:[%s6 + $0xc] sm:$0xf]
      %v1102 = vld [vmem:[%s6 + $0x10] sm:$0xf]
      %v1103 = vld [vmem:[%s6 + $0x14] sm:$0xf]
      %v1104 = vld [vmem:[%s6 + $0x18] sm:$0xf]
      %v1105 = vld [vmem:[%s6 + $0x1c] sm:$0xf]
      %v1106 = vld [vmem:[%s6 + $0x20] sm:$0xf]
      %v1107 = vld [vmem:[%s6 + $0x24] sm:$0xf]
      %v1108 = vld [vmem:[%s6 + $0x28] sm:$0xf]
      %v1109 = vld [vmem:[%s6 + $0x2c] sm:$0xf]
      %v1110 = vld [vmem:[%s6 + $0x30] sm:$0xf]
      %v1111 = vld [vmem:[%s6 + $0x34] sm:$0xf]
      %v1112 = vld [vmem:[%s6 + $0x38] sm:$0xf]
      %v1113 = vld [vmem:[%s6 + $0x3c] sm:$0xf]
      %v1114 = vld [vmem:[%s6 + $0x40] sm:$0xf]
      %v1115 = vld [vmem:[%s6 + $0x44] sm:$0xf]
      %v1116 = vld [vmem:[%s6 + $0x48] sm:$0xf]
      %v1117 = vld [vmem:[%s6 + $0x4c] sm:$0xf]
      %v1118 = vld [vmem:[%s6 + $0x50] sm:$0xf]
      %v1119 = vld [vmem:[%s6 + $0x54] sm:$0xf]
      %v1120 = vld [vmem:[%s6 + $0x58] sm:$0xf]
      %v1121 = vld [vmem:[%s6 + $0x5c] sm:$0xf]
      %v1122 = vld [vmem:[%s6 + $0x60] sm:$0xf]
      %v1123 = vld [vmem:[%s6 + $0x64] sm:$0xf]
      %v1124 = vld [vmem:[%s6 + $0x68] sm:$0xf]
      %v1125 = vld [vmem:[%s6 + $0x6c] sm:$0xf]
      %v1126 = vld [vmem:[%s6 + $0x70] sm:$0xf]
      %v1127 = vld [vmem:[%s6 + $0x74] sm:$0xf]
      %v1128 = vld [vmem:[%s6 + $0x78] sm:$0xf]
      %v1129 = vld [vmem:[%s6 + $0x7c] sm:$0xf]
      %v1130 = vld [vmem:[%s6 + $0x80] sm:$0xf]
      %v1131 = vld [vmem:[%s6 + $0x84] sm:$0xf]
      %v1132 = vld [vmem:[%s6 + $0x88] sm:$0xf]
      %v1133 = vld [vmem:[%s6 + $0x8c] sm:$0xf]
      %v1134 = vld [vmem:[%s6 + $0x90] sm:$0xf]
      %v1135 = vld [vmem:[%s6 + $0x94] sm:$0xf]
      %v1136 = vld [vmem:[%s6 + $0x98] sm:$0xf]
      %v1137 = vld [vmem:[%s6 + $0x9c] sm:$0xf]
      %v1138 = vld [vmem:[%s6 + $0xa0] sm:$0xf]
      %v1139 = vld [vmem:[%s6 + $0xa4] sm:$0xf]
      %v1140 = vld [vmem:[%s6 + $0xa8] sm:$0xf]
      %v1141 = vld [vmem:[%s6 + $0xac] sm:$0xf]
      %v1142 = vld [vmem:[%s6 + $0xb0] sm:$0xf]
      %v1143 = vld [vmem:[%s6 + $0xb4] sm:$0xf]
      %v1144 = vld [vmem:[%s6 + $0xb8] sm:$0xf]
      %v1145 = vld [vmem:[%s6 + $0xbc] sm:$0xf]
      %v1146 = vld [vmem:[%s6 + $0xc0] sm:$0xf]
      %v1147 = vld [vmem:[%s6 + $0xc4] sm:$0xf]
      %v1148 = vld [vmem:[%s6 + $0xc8] sm:$0xf]
      %v1149 = vld [vmem:[%s6 + $0xcc] sm:$0xf]
      %v1150 = vld [vmem:[%s6 + $0xd0] sm:$0xf]
      %v1151 = vld [vmem:[%s6 + $0xd4] sm:$0xf]
      %v1152 = vld [vmem:[%s6 + $0xd8] sm:$0xf]
      %v1153 = vld [vmem:[%s6 + $0xdc] sm:$0xf]
      %v1154 = vld [vmem:[%s6 + $0xe0] sm:$0xf]
      %v1155 = vld [vmem:[%s6 + $0xe4] sm:$0xf]
      %v1156 = vld [vmem:[%s6 + $0xe8] sm:$0xf]
      %v1157 = vld [vmem:[%s6 + $0xec] sm:$0xf]
      %v1158 = vld [vmem:[%s6 + $0xf0] sm:$0xf]
      %v1159 = vld [vmem:[%s6 + $0xf4] sm:$0xf]
      %v1160 = vld [vmem:[%s6 + $0xf8] sm:$0xf]
      %v1161 = vld [vmem:[%s6 + $0xfc] sm:$0xf]
      %v1226 = vunpack.c.l.b16 %v1098
      %v1227 = vunpack.c.l.b16 %v1099
      %v1228 = vunpack.c.l.b16 %v1100
      %v1229 = vunpack.c.l.b16 %v1101
      %v1230 = vunpack.c.l.b16 %v1102
      %v1231 = vunpack.c.l.b16 %v1103
      %v1232 = vunpack.c.l.b16 %v1104
      %v1233 = vunpack.c.l.b16 %v1105
      %v1234 = vunpack.c.l.b16 %v1106
      %v1235 = vunpack.c.l.b16 %v1107
      %v1236 = vunpack.c.l.b16 %v1108
      %v1237 = vunpack.c.l.b16 %v1109
      %v1238 = vunpack.c.l.b16 %v1110
      %v1239 = vunpack.c.l.b16 %v1111
      %v1240 = vunpack.c.l.b16 %v1112
      %v1241 = vunpack.c.l.b16 %v1113
      %v1242 = vunpack.c.l.b16 %v1114
      %v1243 = vunpack.c.l.b16 %v1115
      %v1244 = vunpack.c.l.b16 %v1116
      %v1245 = vunpack.c.l.b16 %v1117
      %v1246 = vunpack.c.l.b16 %v1118
      %v1247 = vunpack.c.l.b16 %v1119
      %v1248 = vunpack.c.l.b16 %v1120
      %v1249 = vunpack.c.l.b16 %v1121
      %v1250 = vunpack.c.l.b16 %v1122
      %v1251 = vunpack.c.l.b16 %v1123
      %v1252 = vunpack.c.l.b16 %v1124
      %v1253 = vunpack.c.l.b16 %v1125
      %v1254 = vunpack.c.l.b16 %v1126
      %v1255 = vunpack.c.l.b16 %v1127
      %v1256 = vunpack.c.l.b16 %v1128
      %v1257 = vunpack.c.l.b16 %v1129
      %v1258 = vunpack.c.l.b16 %v1130
      %v1259 = vunpack.c.l.b16 %v1131
      %v1260 = vunpack.c.l.b16 %v1132
      %v1261 = vunpack.c.l.b16 %v1133
      %v1262 = vunpack.c.l.b16 %v1134
      %v1263 = vunpack.c.l.b16 %v1135
      %v1264 = vunpack.c.l.b16 %v1136
      %v1265 = vunpack.c.l.b16 %v1137
      %v1266 = vunpack.c.l.b16 %v1138
      %v1267 = vunpack.c.l.b16 %v1139
      %v1268 = vunpack.c.l.b16 %v1140
      %v1269 = vunpack.c.l.b16 %v1141
      %v1270 = vunpack.c.l.b16 %v1142
      %v1271 = vunpack.c.l.b16 %v1143
      %v1272 = vunpack.c.l.b16 %v1144
      %v1273 = vunpack.c.l.b16 %v1145
      %v1274 = vunpack.c.l.b16 %v1146
      %v1275 = vunpack.c.l.b16 %v1147
      %v1276 = vunpack.c.l.b16 %v1148
      %v1277 = vunpack.c.l.b16 %v1149
      %v1278 = vunpack.c.l.b16 %v1150
      %v1279 = vunpack.c.l.b16 %v1151
      %v1280 = vunpack.c.l.b16 %v1152
      %v1281 = vunpack.c.l.b16 %v1153
      %v1282 = vunpack.c.l.b16 %v1154
      %v1283 = vunpack.c.l.b16 %v1155
      %v1284 = vunpack.c.l.b16 %v1156
      %v1285 = vunpack.c.l.b16 %v1157
      %v1286 = vunpack.c.l.b16 %v1158
      %v1287 = vunpack.c.l.b16 %v1159
      %v1288 = vunpack.c.l.b16 %v1160
      %v1289 = vunpack.c.l.b16 %v1161
      %v1290 = vpack.c.b16 %v1227, %v1226
      %v1291 = vpack.c.b16 %v1229, %v1228
      %v1292 = vpack.c.b16 %v1231, %v1230
      %v1293 = vpack.c.b16 %v1233, %v1232
      %v1294 = vpack.c.b16 %v1235, %v1234
      %v1295 = vpack.c.b16 %v1237, %v1236
      %v1296 = vpack.c.b16 %v1239, %v1238
      %v1297 = vpack.c.b16 %v1241, %v1240
      %v1298 = vpack.c.b16 %v1243, %v1242
      %v1299 = vpack.c.b16 %v1245, %v1244
      %v1300 = vpack.c.b16 %v1247, %v1246
      %v1301 = vpack.c.b16 %v1249, %v1248
      %v1302 = vpack.c.b16 %v1251, %v1250
      %v1303 = vpack.c.b16 %v1253, %v1252
      %v1304 = vpack.c.b16 %v1255, %v1254
      %v1305 = vpack.c.b16 %v1257, %v1256
      %v1306 = vpack.c.b16 %v1259, %v1258
      %v1307 = vpack.c.b16 %v1261, %v1260
      %v1308 = vpack.c.b16 %v1263, %v1262
      %v1309 = vpack.c.b16 %v1265, %v1264
      %v1310 = vpack.c.b16 %v1267, %v1266
      %v1311 = vpack.c.b16 %v1269, %v1268
      %v1312 = vpack.c.b16 %v1271, %v1270
      %v1313 = vpack.c.b16 %v1273, %v1272
      %v1314 = vpack.c.b16 %v1275, %v1274
      %v1315 = vpack.c.b16 %v1277, %v1276
      %v1316 = vpack.c.b16 %v1279, %v1278
      %v1317 = vpack.c.b16 %v1281, %v1280
      %v1318 = vpack.c.b16 %v1283, %v1282
      %v1319 = vpack.c.b16 %v1285, %v1284
      %v1320 = vpack.c.b16 %v1287, %v1286
      %v1321 = vpack.c.b16 %v1289, %v1288
      %vm1322 = vcmask 654336
      %v1324 = vsel %vm1322, %v1290, 0
      %v1327 = vsel %vm1322, %v1291, 0
      %v1330 = vsel %vm1322, %v1292, 0
      %v1333 = vsel %vm1322, %v1293, 0
      %v1336 = vsel %vm1322, %v1294, 0
      %v1339 = vsel %vm1322, %v1295, 0
      %v1342 = vsel %vm1322, %v1296, 0
      %v1345 = vsel %vm1322, %v1297, 0
      %v1348 = vsel %vm1322, %v1298, 0
      %v1351 = vsel %vm1322, %v1299, 0
      %v1354 = vsel %vm1322, %v1300, 0
      %v1357 = vsel %vm1322, %v1301, 0
      %v1360 = vsel %vm1322, %v1302, 0
      %v1363 = vsel %vm1322, %v1303, 0
      %v1366 = vsel %vm1322, %v1304, 0
      %v1369 = vsel %vm1322, %v1305, 0
      %v1372 = vsel %vm1322, %v1306, 0
      %v1375 = vsel %vm1322, %v1307, 0
      %v1378 = vsel %vm1322, %v1308, 0
      %v1381 = vsel %vm1322, %v1309, 0
      %v1384 = vsel %vm1322, %v1310, 0
      %v1387 = vsel %vm1322, %v1311, 0
      %v1390 = vsel %vm1322, %v1312, 0
      %v1393 = vsel %vm1322, %v1313, 0
      %v1396 = vsel %vm1322, %v1314, 0
      %v1399 = vsel %vm1322, %v1315, 0
      %v1402 = vsel %vm1322, %v1316, 0
      %v1405 = vsel %vm1322, %v1317, 0
      %v1408 = vsel %vm1322, %v1318, 0
      %v1411 = vsel %vm1322, %v1319, 0
      %v1414 = vsel %vm1322, %v1320, 0
      %v1417 = vsel %vm1322, %v1321, 0
      %1419 = vmatprep.subr.bf16.mxu0 0
      %1420 = vmatpush1.bf16.msra.mxu0 %v1093
      %1421 = vmatprep.subr.bf16.mxu0 0
      %1422 = vmatpush1.bf16.msra.mxu0 %v1094
      %1423 = vmatprep.subr.bf16.mxu0 0
      %1424 = vmatpush1.bf16.msra.mxu0 %v1095
      %1425 = vmatprep.subr.bf16.mxu0 0
      %1426 = vmatpush1.bf16.msra.mxu0 %v1096
      %1427 = vmatprep.subr.bf16.mxu0 0
      %1428 = vmatpush1.bf16.msra.mxu0 %v1097
      %1429 = vmatprep.subr.bf16.mxu0 0
      %1430 = vmatpush1.bf16.msra.mxu0 0
      %1431 = vmatprep.subr.bf16.mxu0 0
      %1432 = vmatpush1.bf16.msra.mxu0 0
      %1433 = vmatprep.subr.bf16.mxu0 0
      %1434 = vmatpush1.bf16.msra.mxu0 0
      %1435 = vmatprep.subr.bf16.mxu0 0
      %1436 = vmatpush1.bf16.msra.mxu0 0
      %1437 = vmatprep.subr.bf16.mxu0 0
      %1438 = vmatpush1.bf16.msra.mxu0 0
      %1439 = vmatprep.subr.bf16.mxu0 0
      %1440 = vmatpush1.bf16.msra.mxu0 0
      %1441 = vmatprep.subr.bf16.mxu0 0
      %1442 = vmatpush1.bf16.msra.mxu0 0
      %1443 = vmatprep.subr.bf16.mxu0 0
      %1444 = vmatpush1.bf16.msra.mxu0 0
      %1445 = vmatprep.subr.bf16.mxu0 0
      %1446 = vmatpush1.bf16.msra.mxu0 0
      %1447 = vmatprep.subr.bf16.mxu0 0
      %1448 = vmatpush1.bf16.msra.mxu0 0
      %1449 = vmatprep.subr.bf16.mxu0 0
      %1450 = vmatpush1.bf16.msra.mxu0 0
      %1451 = vmatprep.mubr.bf16.mxu0 0
      %1452 = vmatmul.mubr.bf16.gmra.mrb[0].mxu0 %v1324
      %v1453 = vpop.f32.mrb[0].mxu0
      %v1454 = vadd.f32 0.0, %v1453
      %v1455 = vpop.f32.mrb[0].mxu0
      %v1456 = vpop.f32.mrb[0].mxu0
      %v1457 = vadd.f32 0.0, %v1456
      %v1458 = vpop.f32.mrb[0].mxu0
      %1459 = vmatprep.mubr.bf16.mxu0 0
      %1460 = vmatmul.mubr.bf16.gmra.mrb[0].mxu0 %v1327
      %v1461 = vpop.f32.mrb[0].mxu0
      %v1462 = vadd.f32 0.0, %v1461
      %v1463 = vpop.f32.mrb[0].mxu0
      %v1464 = vpop.f32.mrb[0].mxu0
      %v1465 = vadd.f32 0.0, %v1464
      %v1466 = vpop.f32.mrb[0].mxu0
      %1467 = vmatprep.mubr.bf16.mxu0 0
      %1468 = vmatmul.mubr.bf16.gmra.mrb[0].mxu0 %v1330
      %v1469 = vpop.f32.mrb[0].mxu0
      %v1470 = vadd.f32 0.0, %v1469
      %v1471 = vpop.f32.mrb[0].mxu0
      %v1472 = vpop.f32.mrb[0].mxu0
      %v1473 = vadd.f32 0.0, %v1472
      %v1474 = vpop.f32.mrb[0].mxu0
      %1475 = vmatprep.mubr.bf16.mxu0 0
      %1476 = vmatmul.mubr.bf16.gmra.mrb[0].mxu0 %v1333
      %v1477 = vpop.f32.mrb[0].mxu0
      %v1478 = vadd.f32 0.0, %v1477
      %v1479 = vpop.f32.mrb[0].mxu0
      %v1480 = vpop.f32.mrb[0].mxu0
      %v1481 = vadd.f32 0.0, %v1480
      %v1482 = vpop.f32.mrb[0].mxu0
      %1483 = vmatprep.mubr.bf16.mxu0 0
      %1484 = vmatmul.mubr.bf16.gmra.mrb[0].mxu0 %v1336
      %v1485 = vpop.f32.mrb[0].mxu0
      %v1486 = vadd.f32 0.0, %v1485
      %v1487 = vpop.f32.mrb[0].mxu0
      %v1488 = vpop.f32.mrb[0].mxu0
      %v1489 = vadd.f32 0.0, %v1488
      %v1490 = vpop.f32.mrb[0].mxu0
      %1491 = vmatprep.mubr.bf16.mxu0 0
      %1492 = vmatmul.mubr.bf16.gmra.mrb[0].mxu0 %v1339
      %v1493 = vpop.f32.mrb[0].mxu0
      %v1494 = vadd.f32 0.0, %v1493
      %v1495 = vpop.f32.mrb[0].mxu0
      %v1496 = vpop.f32.mrb[0].mxu0
      %v1497 = vadd.f32 0.0, %v1496
      %v1498 = vpop.f32.mrb[0].mxu0
      %1499 = vmatprep.mubr.bf16.mxu0 0
      %1500 = vmatmul.mubr.bf16.gmra.mrb[0].mxu0 %v1342
      %v1501 = vpop.f32.mrb[0].mxu0
      %v1502 = vadd.f32 0.0, %v1501
      %v1503 = vpop.f32.mrb[0].mxu0
      %v1504 = vpop.f32.mrb[0].mxu0
      %v1505 = vadd.f32 0.0, %v1504
      %v1506 = vpop.f32.mrb[0].mxu0
      %1507 = vmatprep.mubr.bf16.mxu0 0
      %1508 = vmatmul.mubr.bf16.gmra.mrb[0].mxu0 %v1345
      %v1509 = vpop.f32.mrb[0].mxu0
      %v1510 = vadd.f32 0.0, %v1509
      %v1511 = vpop.f32.mrb[0].mxu0
      %v1512 = vpop.f32.mrb[0].mxu0
      %v1513 = vadd.f32 0.0, %v1512
      %v1514 = vpop.f32.mrb[0].mxu0
      %1515 = vmatprep.mubr.bf16.mxu0 0
      %1516 = vmatmul.mubr.bf16.gmra.mrb[0].mxu0 %v1348
      %v1517 = vpop.f32.mrb[0].mxu0
      %v1518 = vadd.f32 0.0, %v1517
      %v1519 = vpop.f32.mrb[0].mxu0
      %v1520 = vpop.f32.mrb[0].mxu0
      %v1521 = vadd.f32 0.0, %v1520
      %v1522 = vpop.f32.mrb[0].mxu0
      %1523 = vmatprep.mubr.bf16.mxu0 0
      %1524 = vmatmul.mubr.bf16.gmra.mrb[0].mxu0 %v1351
      %v1525 = vpop.f32.mrb[0].mxu0
      %v1526 = vadd.f32 0.0, %v1525
      %v1527 = vpop.f32.mrb[0].mxu0
      %v1528 = vpop.f32.mrb[0].mxu0
      %v1529 = vadd.f32 0.0, %v1528
      %v1530 = vpop.f32.mrb[0].mxu0
      %1531 = vmatprep.mubr.bf16.mxu0 0
      %1532 = vmatmul.mubr.bf16.gmra.mrb[0].mxu0 %v1354
      %v1533 = vpop.f32.mrb[0].mxu0
      %v1534 = vadd.f32 0.0, %v1533
      %v1535 = vpop.f32.mrb[0].mxu0
      %v1536 = vpop.f32.mrb[0].mxu0
      %v1537 = vadd.f32 0.0, %v1536
      %v1538 = vpop.f32.mrb[0].mxu0
      %1539 = vmatprep.mubr.bf16.mxu0 0
      %1540 = vmatmul.mubr.bf16.gmra.mrb[0].mxu0 %v1357
      %v1541 = vpop.f32.mrb[0].mxu0
      %v1542 = vadd.f32 0.0, %v1541
      %v1543 = vpop.f32.mrb[0].mxu0
      %v1544 = vpop.f32.mrb[0].mxu0
      %v1545 = vadd.f32 0.0, %v1544
      %v1546 = vpop.f32.mrb[0].mxu0
      %1547 = vmatprep.mubr.bf16.mxu0 0
      %1548 = vmatmul.mubr.bf16.gmra.mrb[0].mxu0 %v1360
      %v1549 = vpop.f32.mrb[0].mxu0
      %v1550 = vadd.f32 0.0, %v1549
      %v1551 = vpop.f32.mrb[0].mxu0
      %v1552 = vpop.f32.mrb[0].mxu0
      %v1553 = vadd.f32 0.0, %v1552
      %v1554 = vpop.f32.mrb[0].mxu0
      %1555 = vmatprep.mubr.bf16.mxu0 0
      %1556 = vmatmul.mubr.bf16.gmra.mrb[0].mxu0 %v1363
      %v1557 = vpop.f32.mrb[0].mxu0
      %v1558 = vadd.f32 0.0, %v1557
      %v1559 = vpop.f32.mrb[0].mxu0
      %v1560 = vpop.f32.mrb[0].mxu0
      %v1561 = vadd.f32 0.0, %v1560
      %v1562 = vpop.f32.mrb[0].mxu0
      %1563 = vmatprep.mubr.bf16.mxu0 0
      %1564 = vmatmul.mubr.bf16.gmra.mrb[0].mxu0 %v1366
      %v1565 = vpop.f32.mrb[0].mxu0
      %v1566 = vadd.f32 0.0, %v1565
      %v1567 = vpop.f32.mrb[0].mxu0
      %v1568 = vpop.f32.mrb[0].mxu0
      %v1569 = vadd.f32 0.0, %v1568
      %v1570 = vpop.f32.mrb[0].mxu0
      %1571 = vmatprep.mubr.bf16.mxu0 0
      %1572 = vmatmul.mubr.bf16.gmra.mrb[0].mxu0 %v1369
      %v1573 = vpop.f32.mrb[0].mxu0
      %v1574 = vadd.f32 0.0, %v1573
      %v1575 = vpop.f32.mrb[0].mxu0
      %v1576 = vpop.f32.mrb[0].mxu0
      %v1577 = vadd.f32 0.0, %v1576
      %v1578 = vpop.f32.mrb[0].mxu0
      %1579 = vmatprep.mubr.bf16.mxu0 0
      %1580 = vmatmul.mubr.bf16.gmra.mrb[0].mxu0 %v1372
      %v1581 = vpop.f32.mrb[0].mxu0
      %v1582 = vadd.f32 0.0, %v1581
      %v1583 = vpop.f32.mrb[0].mxu0
      %v1584 = vpop.f32.mrb[0].mxu0
      %v1585 = vadd.f32 0.0, %v1584
      %v1586 = vpop.f32.mrb[0].mxu0
      %1587 = vmatprep.mubr.bf16.mxu0 0
      %1588 = vmatmul.mubr.bf16.gmra.mrb[0].mxu0 %v1375
      %v1589 = vpop.f32.mrb[0].mxu0
      %v1590 = vadd.f32 0.0, %v1589
      %v1591 = vpop.f32.mrb[0].mxu0
      %v1592 = vpop.f32.mrb[0].mxu0
      %v1593 = vadd.f32 0.0, %v1592
      %v1594 = vpop.f32.mrb[0].mxu0
      %1595 = vmatprep.mubr.bf16.mxu0 0
      %1596 = vmatmul.mubr.bf16.gmra.mrb[0].mxu0 %v1378
      %v1597 = vpop.f32.mrb[0].mxu0
      %v1598 = vadd.f32 0.0, %v1597
      %v1599 = vpop.f32.mrb[0].mxu0
      %v1600 = vpop.f32.mrb[0].mxu0
      %v1601 = vadd.f32 0.0, %v1600
      %v1602 = vpop.f32.mrb[0].mxu0
      %1603 = vmatprep.mubr.bf16.mxu0 0
      %1604 = vmatmul.mubr.bf16.gmra.mrb[0].mxu0 %v1381
      %v1605 = vpop.f32.mrb[0].mxu0
      %v1606 = vadd.f32 0.0, %v1605
      %v1607 = vpop.f32.mrb[0].mxu0
      %v1608 = vpop.f32.mrb[0].mxu0
      %v1609 = vadd.f32 0.0, %v1608
      %v1610 = vpop.f32.mrb[0].mxu0
      %1611 = vmatprep.mubr.bf16.mxu0 0
      %1612 = vmatmul.mubr.bf16.gmra.mrb[0].mxu0 %v1384
      %v1613 = vpop.f32.mrb[0].mxu0
      %v1614 = vadd.f32 0.0, %v1613
      %v1615 = vpop.f32.mrb[0].mxu0
      %v1616 = vpop.f32.mrb[0].mxu0
      %v1617 = vadd.f32 0.0, %v1616
      %v1618 = vpop.f32.mrb[0].mxu0
      %1619 = vmatprep.mubr.bf16.mxu0 0
      %1620 = vmatmul.mubr.bf16.gmra.mrb[0].mxu0 %v1387
      %v1621 = vpop.f32.mrb[0].mxu0
      %v1622 = vadd.f32 0.0, %v1621
      %v1623 = vpop.f32.mrb[0].mxu0
      %v1624 = vpop.f32.mrb[0].mxu0
      %v1625 = vadd.f32 0.0, %v1624
      %v1626 = vpop.f32.mrb[0].mxu0
      %1627 = vmatprep.mubr.bf16.mxu0 0
      %1628 = vmatmul.mubr.bf16.gmra.mrb[0].mxu0 %v1390
      %v1629 = vpop.f32.mrb[0].mxu0
      %v1630 = vadd.f32 0.0, %v1629
      %v1631 = vpop.f32.mrb[0].mxu0
      %v1632 = vpop.f32.mrb[0].mxu0
      %v1633 = vadd.f32 0.0, %v1632
      %v1634 = vpop.f32.mrb[0].mxu0
      %1635 = vmatprep.mubr.bf16.mxu0 0
      %1636 = vmatmul.mubr.bf16.gmra.mrb[0].mxu0 %v1393
      %v1637 = vpop.f32.mrb[0].mxu0
      %v1638 = vadd.f32 0.0, %v1637
      %v1639 = vpop.f32.mrb[0].mxu0
      %v1640 = vpop.f32.mrb[0].mxu0
      %v1641 = vadd.f32 0.0, %v1640
      %v1642 = vpop.f32.mrb[0].mxu0
      %1643 = vmatprep.mubr.bf16.mxu0 0
      %1644 = vmatmul.mubr.bf16.gmra.mrb[0].mxu0 %v1396
      %v1645 = vpop.f32.mrb[0].mxu0
      %v1646 = vadd.f32 0.0, %v1645
      %v1647 = vpop.f32.mrb[0].mxu0
      %v1648 = vpop.f32.mrb[0].mxu0
      %v1649 = vadd.f32 0.0, %v1648
      %v1650 = vpop.f32.mrb[0].mxu0
      %1651 = vmatprep.mubr.bf16.mxu0 0
      %1652 = vmatmul.mubr.bf16.gmra.mrb[0].mxu0 %v1399
      %v1653 = vpop.f32.mrb[0].mxu0
      %v1654 = vadd.f32 0.0, %v1653
      %v1655 = vpop.f32.mrb[0].mxu0
      %v1656 = vpop.f32.mrb[0].mxu0
      %v1657 = vadd.f32 0.0, %v1656
      %v1658 = vpop.f32.mrb[0].mxu0
      %1659 = vmatprep.mubr.bf16.mxu0 0
      %1660 = vmatmul.mubr.bf16.gmra.mrb[0].mxu0 %v1402
      %v1661 = vpop.f32.mrb[0].mxu0
      %v1662 = vadd.f32 0.0, %v1661
      %v1663 = vpop.f32.mrb[0].mxu0
      %v1664 = vpop.f32.mrb[0].mxu0
      %v1665 = vadd.f32 0.0, %v1664
      %v1666 = vpop.f32.mrb[0].mxu0
      %1667 = vmatprep.mubr.bf16.mxu0 0
      %1668 = vmatmul.mubr.bf16.gmra.mrb[0].mxu0 %v1405
      %v1669 = vpop.f32.mrb[0].mxu0
      %v1670 = vadd.f32 0.0, %v1669
      %v1671 = vpop.f32.mrb[0].mxu0
      %v1672 = vpop.f32.mrb[0].mxu0
      %v1673 = vadd.f32 0.0, %v1672
      %v1674 = vpop.f32.mrb[0].mxu0
      %1675 = vmatprep.mubr.bf16.mxu0 0
      %1676 = vmatmul.mubr.bf16.gmra.mrb[0].mxu0 %v1408
      %v1677 = vpop.f32.mrb[0].mxu0
      %v1678 = vadd.f32 0.0, %v1677
      %v1679 = vpop.f32.mrb[0].mxu0
      %v1680 = vpop.f32.mrb[0].mxu0
      %v1681 = vadd.f32 0.0, %v1680
      %v1682 = vpop.f32.mrb[0].mxu0
      %1683 = vmatprep.mubr.bf16.mxu0 0
      %1684 = vmatmul.mubr.bf16.gmra.mrb[0].mxu0 %v1411
      %v1685 = vpop.f32.mrb[0].mxu0
      %v1686 = vadd.f32 0.0, %v1685
      %v1687 = vpop.f32.mrb[0].mxu0
      %v1688 = vpop.f32.mrb[0].mxu0
      %v1689 = vadd.f32 0.0, %v1688
      %v1690 = vpop.f32.mrb[0].mxu0
      %1691 = vmatprep.mubr.bf16.mxu0 0
      %1692 = vmatmul.mubr.bf16.gmra.mrb[0].mxu0 %v1414
      %v1693 = vpop.f32.mrb[0].mxu0
      %v1694 = vadd.f32 0.0, %v1693
      %v1695 = vpop.f32.mrb[0].mxu0
      %v1696 = vpop.f32.mrb[0].mxu0
      %v1697 = vadd.f32 0.0, %v1696
      %v1698 = vpop.f32.mrb[0].mxu0
      %1699 = vmatprep.mubr.bf16.mxu0 0
      %1700 = vmatmul.mubr.bf16.gmra.mrb[0].mxu0 %v1417
      %v1701 = vpop.f32.mrb[0].mxu0
      %v1702 = vadd.f32 0.0, %v1701
      %v1703 = vpop.f32.mrb[0].mxu0
      %v1704 = vpop.f32.mrb[0].mxu0
      %v1705 = vadd.f32 0.0, %v1704
      %v1706 = vpop.f32.mrb[0].mxu0
      %1707 = vdwg.mxu0
      %v1708 = vld [vmem:[%s7] sm:$0xff]
      %v1709 = vld [vmem:[%s7 + $0x8] sm:$0xff]
      %v1710 = vld [vmem:[%s7 + $0x10] sm:$0xff]
      %v1711 = vld [vmem:[%s7 + $0x18] sm:$0xff]
      %v1712 = vld [vmem:[%s7 + $0x20] sm:$0xff]
      %v1713 = vld [vmem:[%s7 + $0x28] sm:$0xff]
      %v1714 = vld [vmem:[%s7 + $0x30] sm:$0xff]
      %v1715 = vld [vmem:[%s7 + $0x38] sm:$0xff]
      %v1716 = vld [vmem:[%s7 + $0x40] sm:$0xff]
      %v1717 = vld [vmem:[%s7 + $0x48] sm:$0xff]
      %v1718 = vld [vmem:[%s7 + $0x50] sm:$0xff]
      %v1719 = vld [vmem:[%s7 + $0x58] sm:$0xff]
      %v1720 = vld [vmem:[%s7 + $0x60] sm:$0xff]
      %v1721 = vld [vmem:[%s7 + $0x68] sm:$0xff]
      %v1722 = vld [vmem:[%s7 + $0x70] sm:$0xff]
      %v1723 = vld [vmem:[%s7 + $0x78] sm:$0xff]
      %v1724 = vld [vmem:[%s7 + $0x80] sm:$0xff]
      %v1725 = vld [vmem:[%s7 + $0x88] sm:$0xff]
      %v1726 = vld [vmem:[%s7 + $0x90] sm:$0xff]
      %v1727 = vld [vmem:[%s7 + $0x98] sm:$0xff]
      %v1728 = vld [vmem:[%s7 + $0xa0] sm:$0xff]
      %v1729 = vld [vmem:[%s7 + $0xa8] sm:$0xff]
      %v1730 = vld [vmem:[%s7 + $0xb0] sm:$0xff]
      %v1731 = vld [vmem:[%s7 + $0xb8] sm:$0xff]
      %v1732 = vld [vmem:[%s7 + $0xc0] sm:$0xff]
      %v1733 = vld [vmem:[%s7 + $0xc8] sm:$0xff]
      %v1734 = vld [vmem:[%s7 + $0xd0] sm:$0xff]
      %v1735 = vld [vmem:[%s7 + $0xd8] sm:$0xff]
      %v1736 = vld [vmem:[%s7 + $0xe0] sm:$0xff]
      %v1737 = vld [vmem:[%s7 + $0xe8] sm:$0xff]
      %v1738 = vld [vmem:[%s7 + $0xf0] sm:$0xff]
      %v1739 = vld [vmem:[%s7 + $0xf8] sm:$0xff]
      %1741 = vset.pattern.permute.xlu0 0
      %1742 = vperm.xlu0 %1741, %v1708
      %v1743 = vpop.permute.xlu0 %1742
      %1746 = vset.pattern.permute.xlu0 0
      %1747 = vperm.xlu0 %1746, %v1709
      %v1748 = vpop.permute.xlu0 %1747
      %1751 = vset.pattern.permute.xlu0 0
      %1752 = vperm.xlu0 %1751, %v1710
      %v1753 = vpop.permute.xlu0 %1752
      %1756 = vset.pattern.permute.xlu0 0
      %1757 = vperm.xlu0 %1756, %v1711
      %v1758 = vpop.permute.xlu0 %1757
      %1761 = vset.pattern.permute.xlu0 0
      %1762 = vperm.xlu0 %1761, %v1712
      %v1763 = vpop.permute.xlu0 %1762
      %1766 = vset.pattern.permute.xlu0 0
      %1767 = vperm.xlu0 %1766, %v1713
      %v1768 = vpop.permute.xlu0 %1767
      %1771 = vset.pattern.permute.xlu0 0
      %1772 = vperm.xlu0 %1771, %v1714
      %v1773 = vpop.permute.xlu0 %1772
      %1776 = vset.pattern.permute.xlu0 0
      %1777 = vperm.xlu0 %1776, %v1715
      %v1778 = vpop.permute.xlu0 %1777
      %1781 = vset.pattern.permute.xlu0 0
      %1782 = vperm.xlu0 %1781, %v1716
      %v1783 = vpop.permute.xlu0 %1782
      %1786 = vset.pattern.permute.xlu0 0
      %1787 = vperm.xlu0 %1786, %v1717
      %v1788 = vpop.permute.xlu0 %1787
      %1791 = vset.pattern.permute.xlu0 0
      %1792 = vperm.xlu0 %1791, %v1718
      %v1793 = vpop.permute.xlu0 %1792
      %1796 = vset.pattern.permute.xlu0 0
      %1797 = vperm.xlu0 %1796, %v1719
      %v1798 = vpop.permute.xlu0 %1797
      %1801 = vset.pattern.permute.xlu0 0
      %1802 = vperm.xlu0 %1801, %v1720
      %v1803 = vpop.permute.xlu0 %1802
      %1806 = vset.pattern.permute.xlu0 0
      %1807 = vperm.xlu0 %1806, %v1721
      %v1808 = vpop.permute.xlu0 %1807
      %1811 = vset.pattern.permute.xlu0 0
      %1812 = vperm.xlu0 %1811, %v1722
      %v1813 = vpop.permute.xlu0 %1812
      %1816 = vset.pattern.permute.xlu0 0
      %1817 = vperm.xlu0 %1816, %v1723
      %v1818 = vpop.permute.xlu0 %1817
      %1821 = vset.pattern.permute.xlu0 0
      %1822 = vperm.xlu0 %1821, %v1724
      %v1823 = vpop.permute.xlu0 %1822
      %1826 = vset.pattern.permute.xlu0 0
      %1827 = vperm.xlu0 %1826, %v1725
      %v1828 = vpop.permute.xlu0 %1827
      %1831 = vset.pattern.permute.xlu0 0
      %1832 = vperm.xlu0 %1831, %v1726
      %v1833 = vpop.permute.xlu0 %1832
      %1836 = vset.pattern.permute.xlu0 0
      %1837 = vperm.xlu0 %1836, %v1727
      %v1838 = vpop.permute.xlu0 %1837
      %1841 = vset.pattern.permute.xlu0 0
      %1842 = vperm.xlu0 %1841, %v1728
      %v1843 = vpop.permute.xlu0 %1842
      %1846 = vset.pattern.permute.xlu0 0
      %1847 = vperm.xlu0 %1846, %v1729
      %v1848 = vpop.permute.xlu0 %1847
      %1851 = vset.pattern.permute.xlu0 0
      %1852 = vperm.xlu0 %1851, %v1730
      %v1853 = vpop.permute.xlu0 %1852
      %1856 = vset.pattern.permute.xlu0 0
      %1857 = vperm.xlu0 %1856, %v1731
      %v1858 = vpop.permute.xlu0 %1857
      %1861 = vset.pattern.permute.xlu0 0
      %1862 = vperm.xlu0 %1861, %v1732
      %v1863 = vpop.permute.xlu0 %1862
      %1866 = vset.pattern.permute.xlu0 0
      %1867 = vperm.xlu0 %1866, %v1733
      %v1868 = vpop.permute.xlu0 %1867
      %1871 = vset.pattern.permute.xlu0 0
      %1872 = vperm.xlu0 %1871, %v1734
      %v1873 = vpop.permute.xlu0 %1872
      %1876 = vset.pattern.permute.xlu0 0
      %1877 = vperm.xlu0 %1876, %v1735
      %v1878 = vpop.permute.xlu0 %1877
      %1881 = vset.pattern.permute.xlu0 0
      %1882 = vperm.xlu0 %1881, %v1736
      %v1883 = vpop.permute.xlu0 %1882
      %1886 = vset.pattern.permute.xlu0 0
      %1887 = vperm.xlu0 %1886, %v1737
      %v1888 = vpop.permute.xlu0 %1887
      %1891 = vset.pattern.permute.xlu0 0
      %1892 = vperm.xlu0 %1891, %v1738
      %v1893 = vpop.permute.xlu0 %1892
      %1896 = vset.pattern.permute.xlu0 0
      %1897 = vperm.xlu0 %1896, %v1739
      %v1898 = vpop.permute.xlu0 %1897
      %v1900 = vadd.f32 %v1454, %v1743
      %v1901 = vadd.f32 %v1457, %v1748
      %v1902 = vadd.f32 %v1462, %v1753
      %v1903 = vadd.f32 %v1465, %v1758
      %v1904 = vadd.f32 %v1470, %v1763
      %v1905 = vadd.f32 %v1473, %v1768
      %v1906 = vadd.f32 %v1478, %v1773
      %v1907 = vadd.f32 %v1481, %v1778
      %v1908 = vadd.f32 %v1486, %v1783
      %v1909 = vadd.f32 %v1489, %v1788
      %v1910 = vadd.f32 %v1494, %v1793
      %v1911 = vadd.f32 %v1497, %v1798
      %v1912 = vadd.f32 %v1502, %v1803
      %v1913 = vadd.f32 %v1505, %v1808
      %v1914 = vadd.f32 %v1510, %v1813
      %v1915 = vadd.f32 %v1513, %v1818
      %v1916 = vadd.f32 %v1518, %v1823
      %v1917 = vadd.f32 %v1521, %v1828
      %v1918 = vadd.f32 %v1526, %v1833
      %v1919 = vadd.f32 %v1529, %v1838
      %v1920 = vadd.f32 %v1534, %v1843
      %v1921 = vadd.f32 %v1537, %v1848
      %v1922 = vadd.f32 %v1542, %v1853
      %v1923 = vadd.f32 %v1545, %v1858
      %v1924 = vadd.f32 %v1550, %v1863
      %v1925 = vadd.f32 %v1553, %v1868
      %v1926 = vadd.f32 %v1558, %v1873
      %v1927 = vadd.f32 %v1561, %v1878
      %v1928 = vadd.f32 %v1566, %v1883
      %v1929 = vadd.f32 %v1569, %v1888
      %v1930 = vadd.f32 %v1574, %v1893
      %v1931 = vadd.f32 %v1577, %v1898
      %v1932 = vlaneseq
      %v1933 = vand.u32 %v1932, 127
      %vm1934 = vcmp.lt.s32.totalorder %v1933, 16
      %v1935 = vsel %vm1934, %v1900, -3.4028235e+38
      %v1936 = vsel %vm1934, %v1901, -3.4028235e+38
      %v1937 = vsel %vm1934, %v1902, -3.4028235e+38
      %v1938 = vsel %vm1934, %v1903, -3.4028235e+38
      %v1939 = vsel %vm1934, %v1904, -3.4028235e+38
      %v1940 = vsel %vm1934, %v1905, -3.4028235e+38
      %v1941 = vsel %vm1934, %v1906, -3.4028235e+38
      %v1942 = vsel %vm1934, %v1907, -3.4028235e+38
      %v1943 = vsel %vm1934, %v1908, -3.4028235e+38
      %v1944 = vsel %vm1934, %v1909, -3.4028235e+38
      %v1945 = vsel %vm1934, %v1910, -3.4028235e+38
      %v1946 = vsel %vm1934, %v1911, -3.4028235e+38
      %v1947 = vsel %vm1934, %v1912, -3.4028235e+38
      %v1948 = vsel %vm1934, %v1913, -3.4028235e+38
      %v1949 = vsel %vm1934, %v1914, -3.4028235e+38
      %v1950 = vsel %vm1934, %v1915, -3.4028235e+38
      %v1951 = vsel %vm1934, %v1916, -3.4028235e+38
      %v1952 = vsel %vm1934, %v1917, -3.4028235e+38
      %v1953 = vsel %vm1934, %v1918, -3.4028235e+38
      %v1954 = vsel %vm1934, %v1919, -3.4028235e+38
      %v1955 = vsel %vm1934, %v1920, -3.4028235e+38
      %v1956 = vsel %vm1934, %v1921, -3.4028235e+38
      %v1957 = vsel %vm1934, %v1922, -3.4028235e+38
      %v1958 = vsel %vm1934, %v1923, -3.4028235e+38
      %v1959 = vsel %vm1934, %v1924, -3.4028235e+38
      %v1960 = vsel %vm1934, %v1925, -3.4028235e+38
      %v1961 = vsel %vm1934, %v1926, -3.4028235e+38
      %v1962 = vsel %vm1934, %v1927, -3.4028235e+38
      %v1963 = vsel %vm1934, %v1928, -3.4028235e+38
      %v1964 = vsel %vm1934, %v1929, -3.4028235e+38
      %v1965 = vsel %vm1934, %v1930, -3.4028235e+38
      %v1966 = vsel %vm1934, %v1931, -3.4028235e+38
      %1967 = vmax.xlane.f32.xlu0 %v1935
      %v1968 = vpop.xlane.xlu0 %1967
      %1969 = vmax.xlane.f32.xlu0 %v1936
      %v1970 = vpop.xlane.xlu0 %1969
      %1971 = vmax.xlane.f32.xlu0 %v1937
      %v1972 = vpop.xlane.xlu0 %1971
      %1973 = vmax.xlane.f32.xlu0 %v1938
      %v1974 = vpop.xlane.xlu0 %1973
      %1975 = vmax.xlane.f32.xlu0 %v1939
      %v1976 = vpop.xlane.xlu0 %1975
      %1977 = vmax.xlane.f32.xlu0 %v1940
      %v1978 = vpop.xlane.xlu0 %1977
      %1979 = vmax.xlane.f32.xlu0 %v1941
      %v1980 = vpop.xlane.xlu0 %1979
      %1981 = vmax.xlane.f32.xlu0 %v1942
      %v1982 = vpop.xlane.xlu0 %1981
      %1983 = vmax.xlane.f32.xlu0 %v1943
      %v1984 = vpop.xlane.xlu0 %1983
      %1985 = vmax.xlane.f32.xlu0 %v1944
      %v1986 = vpop.xlane.xlu0 %1985
      %1987 = vmax.xlane.f32.xlu0 %v1945
      %v1988 = vpop.xlane.xlu0 %1987
      %1989 = vmax.xlane.f32.xlu0 %v1946
      %v1990 = vpop.xlane.xlu0 %1989
      %1991 = vmax.xlane.f32.xlu0 %v1947
      %v1992 = vpop.xlane.xlu0 %1991
      %1993 = vmax.xlane.f32.xlu0 %v1948
      %v1994 = vpop.xlane.xlu0 %1993
      %1995 = vmax.xlane.f32.xlu0 %v1949
      %v1996 = vpop.xlane.xlu0 %1995
      %1997 = vmax.xlane.f32.xlu0 %v1950
      %v1998 = vpop.xlane.xlu0 %1997
      %1999 = vmax.xlane.f32.xlu0 %v1951
      %v2000 = vpop.xlane.xlu0 %1999
      %2001 = vmax.xlane.f32.xlu0 %v1952
      %v2002 = vpop.xlane.xlu0 %2001
      %2003 = vmax.xlane.f32.xlu0 %v1953
      %v2004 = vpop.xlane.xlu0 %2003
      %2005 = vmax.xlane.f32.xlu0 %v1954
      %v2006 = vpop.xlane.xlu0 %2005
      %2007 = vmax.xlane.f32.xlu0 %v1955
      %v2008 = vpop.xlane.xlu0 %2007
      %2009 = vmax.xlane.f32.xlu0 %v1956
      %v2010 = vpop.xlane.xlu0 %2009
      %2011 = vmax.xlane.f32.xlu0 %v1957
      %v2012 = vpop.xlane.xlu0 %2011
      %2013 = vmax.xlane.f32.xlu0 %v1958
      %v2014 = vpop.xlane.xlu0 %2013
      %2015 = vmax.xlane.f32.xlu0 %v1959
      %v2016 = vpop.xlane.xlu0 %2015
      %2017 = vmax.xlane.f32.xlu0 %v1960
      %v2018 = vpop.xlane.xlu0 %2017
      %2019 = vmax.xlane.f32.xlu0 %v1961
      %v2020 = vpop.xlane.xlu0 %2019
      %2021 = vmax.xlane.f32.xlu0 %v1962
      %v2022 = vpop.xlane.xlu0 %2021
      %2023 = vmax.xlane.f32.xlu0 %v1963
      %v2024 = vpop.xlane.xlu0 %2023
      %2025 = vmax.xlane.f32.xlu0 %v1964
      %v2026 = vpop.xlane.xlu0 %2025
      %2027 = vmax.xlane.f32.xlu0 %v1965
      %v2028 = vpop.xlane.xlu0 %2027
      %2029 = vmax.xlane.f32.xlu0 %v1966
      %v2030 = vpop.xlane.xlu0 %2029
      %v2031 = vld [vmem:[%s8] sm:$0xff]
      %v2032 = vld [vmem:[%s8 + $0x8] sm:$0xff]
      %v2033 = vld [vmem:[%s8 + $0x10] sm:$0xff]
      %v2034 = vld [vmem:[%s8 + $0x18] sm:$0xff]
      %v2035 = vld [vmem:[%s8 + $0x20] sm:$0xff]
      %v2036 = vld [vmem:[%s8 + $0x28] sm:$0xff]
      %v2037 = vld [vmem:[%s8 + $0x30] sm:$0xff]
      %v2038 = vld [vmem:[%s8 + $0x38] sm:$0xff]
      %v2039 = vld [vmem:[%s8 + $0x40] sm:$0xff]
      %v2040 = vld [vmem:[%s8 + $0x48] sm:$0xff]
      %v2041 = vld [vmem:[%s8 + $0x50] sm:$0xff]
      %v2042 = vld [vmem:[%s8 + $0x58] sm:$0xff]
      %v2043 = vld [vmem:[%s8 + $0x60] sm:$0xff]
      %v2044 = vld [vmem:[%s8 + $0x68] sm:$0xff]
      %v2045 = vld [vmem:[%s8 + $0x70] sm:$0xff]
      %v2046 = vld [vmem:[%s8 + $0x78] sm:$0xff]
      %v2047 = vld [vmem:[%s8 + $0x80] sm:$0xff]
      %v2048 = vld [vmem:[%s8 + $0x88] sm:$0xff]
      %v2049 = vld [vmem:[%s8 + $0x90] sm:$0xff]
      %v2050 = vld [vmem:[%s8 + $0x98] sm:$0xff]
      %v2051 = vld [vmem:[%s8 + $0xa0] sm:$0xff]
      %v2052 = vld [vmem:[%s8 + $0xa8] sm:$0xff]
      %v2053 = vld [vmem:[%s8 + $0xb0] sm:$0xff]
      %v2054 = vld [vmem:[%s8 + $0xb8] sm:$0xff]
      %v2055 = vld [vmem:[%s8 + $0xc0] sm:$0xff]
      %v2056 = vld [vmem:[%s8 + $0xc8] sm:$0xff]
      %v2057 = vld [vmem:[%s8 + $0xd0] sm:$0xff]
      %v2058 = vld [vmem:[%s8 + $0xd8] sm:$0xff]
      %v2059 = vld [vmem:[%s8 + $0xe0] sm:$0xff]
      %v2060 = vld [vmem:[%s8 + $0xe8] sm:$0xff]
      %v2061 = vld [vmem:[%s8 + $0xf0] sm:$0xff]
      %v2062 = vld [vmem:[%s8 + $0xf8] sm:$0xff]
      %v2063 = vpack.c.bf16 %v1970, %v1968
      %v2064 = vpack.c.bf16 %v1974, %v1972
      %v2065 = vpack.c.bf16 %v1978, %v1976
      %v2066 = vpack.c.bf16 %v1982, %v1980
      %v2067 = vpack.c.bf16 %v1986, %v1984
      %v2068 = vpack.c.bf16 %v1990, %v1988
      %v2069 = vpack.c.bf16 %v1994, %v1992
      %v2070 = vpack.c.bf16 %v1998, %v1996
      %v2071 = vpack.c.bf16 %v2002, %v2000
      %v2072 = vpack.c.bf16 %v2006, %v2004
      %v2073 = vpack.c.bf16 %v2010, %v2008
      %v2074 = vpack.c.bf16 %v2014, %v2012
      %v2075 = vpack.c.bf16 %v2018, %v2016
      %v2076 = vpack.c.bf16 %v2022, %v2020
      %v2077 = vpack.c.bf16 %v2026, %v2024
      %v2078 = vpack.c.bf16 %v2030, %v2028
      %v2111 = vunpack.c.l.b16 %v2031
      %v2112 = vunpack.c.h.b16 %v2031
      %v2113 = vunpack.c.l.b16 %v2032
      %v2114 = vunpack.c.h.b16 %v2032
      %v2115 = vunpack.c.l.b16 %v2033
      %v2116 = vunpack.c.h.b16 %v2033
      %v2117 = vunpack.c.l.b16 %v2034
      %v2118 = vunpack.c.h.b16 %v2034
      %v2119 = vunpack.c.l.b16 %v2035
      %v2120 = vunpack.c.h.b16 %v2035
      %v2121 = vunpack.c.l.b16 %v2036
      %v2122 = vunpack.c.h.b16 %v2036
      %v2123 = vunpack.c.l.b16 %v2037
      %v2124 = vunpack.c.h.b16 %v2037
      %v2125 = vunpack.c.l.b16 %v2038
      %v2126 = vunpack.c.h.b16 %v2038
      %v2127 = vunpack.c.l.b16 %v2039
      %v2128 = vunpack.c.h.b16 %v2039
      %v2129 = vunpack.c.l.b16 %v2040
      %v2130 = vunpack.c.h.b16 %v2040
      %v2131 = vunpack.c.l.b16 %v2041
      %v2132 = vunpack.c.h.b16 %v2041
      %v2133 = vunpack.c.l.b16 %v2042
      %v2134 = vunpack.c.h.b16 %v2042
      %v2135 = vunpack.c.l.b16 %v2043
      %v2136 = vunpack.c.h.b16 %v2043
      %v2137 = vunpack.c.l.b16 %v2044
      %v2138 = vunpack.c.h.b16 %v2044
      %v2139 = vunpack.c.l.b16 %v2045
      %v2140 = vunpack.c.h.b16 %v2045
      %v2141 = vunpack.c.l.b16 %v2046
      %v2142 = vunpack.c.h.b16 %v2046
      %v2143 = vunpack.c.l.b16 %v2047
      %v2144 = vunpack.c.h.b16 %v2047
      %v2145 = vunpack.c.l.b16 %v2048
      %v2146 = vunpack.c.h.b16 %v2048
      %v2147 = vunpack.c.l.b16 %v2049
      %v2148 = vunpack.c.h.b16 %v2049
      %v2149 = vunpack.c.l.b16 %v2050
      %v2150 = vunpack.c.h.b16 %v2050
      %v2151 = vunpack.c.l.b16 %v2051
      %v2152 = vunpack.c.h.b16 %v2051
      %v2153 = vunpack.c.l.b16 %v2052
      %v2154 = vunpack.c.h.b16 %v2052
      %v2155 = vunpack.c.l.b16 %v2053
      %v2156 = vunpack.c.h.b16 %v2053
      %v2157 = vunpack.c.l.b16 %v2054
      %v2158 = vunpack.c.h.b16 %v2054
      %v2159 = vunpack.c.l.b16 %v2055
      %v2160 = vunpack.c.h.b16 %v2055
      %v2161 = vunpack.c.l.b16 %v2056
      %v2162 = vunpack.c.h.b16 %v2056
      %v2163 = vunpack.c.l.b16 %v2057
      %v2164 = vunpack.c.h.b16 %v2057
      %v2165 = vunpack.c.l.b16 %v2058
      %v2166 = vunpack.c.h.b16 %v2058
      %v2167 = vunpack.c.l.b16 %v2059
      %v2168 = vunpack.c.h.b16 %v2059
      %v2169 = vunpack.c.l.b16 %v2060
      %v2170 = vunpack.c.h.b16 %v2060
      %v2171 = vunpack.c.l.b16 %v2061
      %v2172 = vunpack.c.h.b16 %v2061
      %v2173 = vunpack.c.l.b16 %v2062
      %v2174 = vunpack.c.h.b16 %v2062
      %v2175 = vpack.c.b16 %v2113, %v2111
      %v2176 = vpack.c.b16 %v2114, %v2112
      %v2177 = vpack.c.b16 %v2117, %v2115
      %v2178 = vpack.c.b16 %v2118, %v2116
      %v2179 = vpack.c.b16 %v2121, %v2119
      %v2180 = vpack.c.b16 %v2122, %v2120
      %v2181 = vpack.c.b16 %v2125, %v2123
      %v2182 = vpack.c.b16 %v2126, %v2124
      %v2183 = vpack.c.b16 %v2129, %v2127
      %v2184 = vpack.c.b16 %v2130, %v2128
      %v2185 = vpack.c.b16 %v2133, %v2131
      %v2186 = vpack.c.b16 %v2134, %v2132
      %v2187 = vpack.c.b16 %v2137, %v2135
      %v2188 = vpack.c.b16 %v2138, %v2136
      %v2189 = vpack.c.b16 %v2141, %v2139
      %v2190 = vpack.c.b16 %v2142, %v2140
      %v2191 = vpack.c.b16 %v2145, %v2143
      %v2192 = vpack.c.b16 %v2146, %v2144
      %v2193 = vpack.c.b16 %v2149, %v2147
      %v2194 = vpack.c.b16 %v2150, %v2148
      %v2195 = vpack.c.b16 %v2153, %v2151
      %v2196 = vpack.c.b16 %v2154, %v2152
      %v2197 = vpack.c.b16 %v2157, %v2155
      %v2198 = vpack.c.b16 %v2158, %v2156
      %v2199 = vpack.c.b16 %v2161, %v2159
      %v2200 = vpack.c.b16 %v2162, %v2160
      %v2201 = vpack.c.b16 %v2165, %v2163
      %v2202 = vpack.c.b16 %v2166, %v2164
      %v2203 = vpack.c.b16 %v2169, %v2167
      %v2204 = vpack.c.b16 %v2170, %v2168
      %v2205 = vpack.c.b16 %v2173, %v2171
      %v2206 = vpack.c.b16 %v2174, %v2172
      %2239 = vmatprep.subr.bf16.mxu0 0
      %2240 = vmatpush1.bf16.msra.mxu0 %v2063
      %2241 = vmatprep.subr.bf16.mxu0 0
      %2242 = vmatpush1.bf16.msra.mxu0 %v2064
      %2243 = vmatprep.subr.bf16.mxu0 0
      %2244 = vmatpush1.bf16.msra.mxu0 %v2065
      %2245 = vmatprep.subr.bf16.mxu0 0
      %2246 = vmatpush1.bf16.msra.mxu0 %v2066
      %2247 = vmatprep.subr.bf16.mxu0 0
      %2248 = vmatpush1.bf16.msra.mxu0 %v2067
      %2249 = vmatprep.subr.bf16.mxu0 0
      %2250 = vmatpush1.bf16.msra.mxu0 %v2068
      %2251 = vmatprep.subr.bf16.mxu0 0
      %2252 = vmatpush1.bf16.msra.mxu0 %v2069
      %2253 = vmatprep.subr.bf16.mxu0 0
      %2254 = vmatpush1.bf16.msra.mxu0 %v2070
      %2255 = vmatprep.subr.bf16.mxu0 0
      %2256 = vmatpush1.bf16.msra.mxu0 %v2071
      %2257 = vmatprep.subr.bf16.mxu0 0
      %2258 = vmatpush1.bf16.msra.mxu0 %v2072
      %2259 = vmatprep.subr.bf16.mxu0 0
      %2260 = vmatpush1.bf16.msra.mxu0 %v2073
      %2261 = vmatprep.subr.bf16.mxu0 0
      %2262 = vmatpush1.bf16.msra.mxu0 %v2074
      %2263 = vmatprep.subr.bf16.mxu0 0
      %2264 = vmatpush1.bf16.msra.mxu0 %v2075
      %2265 = vmatprep.subr.bf16.mxu0 0
      %2266 = vmatpush1.bf16.msra.mxu0 %v2076
      %2267 = vmatprep.subr.bf16.mxu0 0
      %2268 = vmatpush1.bf16.msra.mxu0 %v2077
      %2269 = vmatprep.subr.bf16.mxu0 0
      %2270 = vmatpush1.bf16.msra.mxu0 %v2078
      %2271 = vmatprep.mubr.bf16.mxu0 %v2176
      %2272 = vmatmul.mubr.bf16.gmra.mrb[0].mxu0 %v2175
      %v2273 = vpop.f32.mrb[0].mxu0
      %v2274 = vadd.f32 0.0, %v2273
      %v2275 = vpop.f32.mrb[0].mxu0
      %v2276 = vpop.f32.mrb[0].mxu0
      %v2277 = vadd.f32 0.0, %v2276
      %v2278 = vpop.f32.mrb[0].mxu0
      %2279 = vmatprep.mubr.bf16.mxu0 %v2178
      %2280 = vmatmul.mubr.bf16.gmra.mrb[0].mxu0 %v2177
      %v2281 = vpop.f32.mrb[0].mxu0
      %v2282 = vadd.f32 0.0, %v2281
      %v2283 = vpop.f32.mrb[0].mxu0
      %v2284 = vpop.f32.mrb[0].mxu0
      %v2285 = vadd.f32 0.0, %v2284
      %v2286 = vpop.f32.mrb[0].mxu0
      %2287 = vmatprep.mubr.bf16.mxu0 %v2180
      %2288 = vmatmul.mubr.bf16.gmra.mrb[0].mxu0 %v2179
      %v2289 = vpop.f32.mrb[0].mxu0
      %v2290 = vadd.f32 0.0, %v2289
      %v2291 = vpop.f32.mrb[0].mxu0
      %v2292 = vpop.f32.mrb[0].mxu0
      %v2293 = vadd.f32 0.0, %v2292
      %v2294 = vpop.f32.mrb[0].mxu0
      %2295 = vmatprep.mubr.bf16.mxu0 %v2182
      %2296 = vmatmul.mubr.bf16.gmra.mrb[0].mxu0 %v2181
      %v2297 = vpop.f32.mrb[0].mxu0
      %v2298 = vadd.f32 0.0, %v2297
      %v2299 = vpop.f32.mrb[0].mxu0
      %v2300 = vpop.f32.mrb[0].mxu0
      %v2301 = vadd.f32 0.0, %v2300
      %v2302 = vpop.f32.mrb[0].mxu0
      %2303 = vmatprep.mubr.bf16.mxu0 %v2184
      %2304 = vmatmul.mubr.bf16.gmra.mrb[0].mxu0 %v2183
      %v2305 = vpop.f32.mrb[0].mxu0
      %v2306 = vadd.f32 0.0, %v2305
      %v2307 = vpop.f32.mrb[0].mxu0
      %v2308 = vpop.f32.mrb[0].mxu0
      %v2309 = vadd.f32 0.0, %v2308
      %v2310 = vpop.f32.mrb[0].mxu0
      %2311 = vmatprep.mubr.bf16.mxu0 %v2186
      %2312 = vmatmul.mubr.bf16.gmra.mrb[0].mxu0 %v2185
      %v2313 = vpop.f32.mrb[0].mxu0
      %v2314 = vadd.f32 0.0, %v2313
      %v2315 = vpop.f32.mrb[0].mxu0
      %v2316 = vpop.f32.mrb[0].mxu0
      %v2317 = vadd.f32 0.0, %v2316
      %v2318 = vpop.f32.mrb[0].mxu0
      %2319 = vmatprep.mubr.bf16.mxu0 %v2188
      %2320 = vmatmul.mubr.bf16.gmra.mrb[0].mxu0 %v2187
      %v2321 = vpop.f32.mrb[0].mxu0
      %v2322 = vadd.f32 0.0, %v2321
      %v2323 = vpop.f32.mrb[0].mxu0
      %v2324 = vpop.f32.mrb[0].mxu0
      %v2325 = vadd.f32 0.0, %v2324
      %v2326 = vpop.f32.mrb[0].mxu0
      %2327 = vmatprep.mubr.bf16.mxu0 %v2190
      %2328 = vmatmul.mubr.bf16.gmra.mrb[0].mxu0 %v2189
      %v2329 = vpop.f32.mrb[0].mxu0
      %v2330 = vadd.f32 0.0, %v2329
      %v2331 = vpop.f32.mrb[0].mxu0
      %v2332 = vpop.f32.mrb[0].mxu0
      %v2333 = vadd.f32 0.0, %v2332
      %v2334 = vpop.f32.mrb[0].mxu0
      %2335 = vmatprep.mubr.bf16.mxu0 %v2192
      %2336 = vmatmul.mubr.bf16.gmra.mrb[0].mxu0 %v2191
      %v2337 = vpop.f32.mrb[0].mxu0
      %v2338 = vadd.f32 0.0, %v2337
      %v2339 = vpop.f32.mrb[0].mxu0
      %v2340 = vpop.f32.mrb[0].mxu0
      %v2341 = vadd.f32 0.0, %v2340
      %v2342 = vpop.f32.mrb[0].mxu0
      %2343 = vmatprep.mubr.bf16.mxu0 %v2194
      %2344 = vmatmul.mubr.bf16.gmra.mrb[0].mxu0 %v2193
      %v2345 = vpop.f32.mrb[0].mxu0
      %v2346 = vadd.f32 0.0, %v2345
      %v2347 = vpop.f32.mrb[0].mxu0
      %v2348 = vpop.f32.mrb[0].mxu0
      %v2349 = vadd.f32 0.0, %v2348
      %v2350 = vpop.f32.mrb[0].mxu0
      %2351 = vmatprep.mubr.bf16.mxu0 %v2196
      %2352 = vmatmul.mubr.bf16.gmra.mrb[0].mxu0 %v2195
      %v2353 = vpop.f32.mrb[0].mxu0
      %v2354 = vadd.f32 0.0, %v2353
      %v2355 = vpop.f32.mrb[0].mxu0
      %v2356 = vpop.f32.mrb[0].mxu0
      %v2357 = vadd.f32 0.0, %v2356
      %v2358 = vpop.f32.mrb[0].mxu0
      %2359 = vmatprep.mubr.bf16.mxu0 %v2198
      %2360 = vmatmul.mubr.bf16.gmra.mrb[0].mxu0 %v2197
      %v2361 = vpop.f32.mrb[0].mxu0
      %v2362 = vadd.f32 0.0, %v2361
      %v2363 = vpop.f32.mrb[0].mxu0
      %v2364 = vpop.f32.mrb[0].mxu0
      %v2365 = vadd.f32 0.0, %v2364
      %v2366 = vpop.f32.mrb[0].mxu0
      %2367 = vmatprep.mubr.bf16.mxu0 %v2200
      %2368 = vmatmul.mubr.bf16.gmra.mrb[0].mxu0 %v2199
      %v2369 = vpop.f32.mrb[0].mxu0
      %v2370 = vadd.f32 0.0, %v2369
      %v2371 = vpop.f32.mrb[0].mxu0
      %v2372 = vpop.f32.mrb[0].mxu0
      %v2373 = vadd.f32 0.0, %v2372
      %v2374 = vpop.f32.mrb[0].mxu0
      %2375 = vmatprep.mubr.bf16.mxu0 %v2202
      %2376 = vmatmul.mubr.bf16.gmra.mrb[0].mxu0 %v2201
      %v2377 = vpop.f32.mrb[0].mxu0
      %v2378 = vadd.f32 0.0, %v2377
      %v2379 = vpop.f32.mrb[0].mxu0
      %v2380 = vpop.f32.mrb[0].mxu0
      %v2381 = vadd.f32 0.0, %v2380
      %v2382 = vpop.f32.mrb[0].mxu0
      %2383 = vmatprep.mubr.bf16.mxu0 %v2204
      %2384 = vmatmul.mubr.bf16.gmra.mrb[0].mxu0 %v2203
      %v2385 = vpop.f32.mrb[0].mxu0
      %v2386 = vadd.f32 0.0, %v2385
      %v2387 = vpop.f32.mrb[0].mxu0
      %v2388 = vpop.f32.mrb[0].mxu0
      %v2389 = vadd.f32 0.0, %v2388
      %v2390 = vpop.f32.mrb[0].mxu0
      %2391 = vmatprep.mubr.bf16.mxu0 %v2206
      %2392 = vmatmul.mubr.bf16.gmra.mrb[0].mxu0 %v2205
      %v2393 = vpop.f32.mrb[0].mxu0
      %v2394 = vadd.f32 0.0, %v2393
      %v2395 = vpop.f32.mrb[0].mxu0
      %v2396 = vpop.f32.mrb[0].mxu0
      %v2397 = vadd.f32 0.0, %v2396
      %v2398 = vpop.f32.mrb[0].mxu0
      %2399 = vdwg.mxu0
      %2401 = vset.pattern.permute.xlu0 0
      %2402 = vperm.xlu0 %2401, %v2274
      %v2403 = vpop.permute.xlu0 %2402
      %2406 = vset.pattern.permute.xlu0 0
      %2407 = vperm.xlu0 %2406, %v2277
      %v2408 = vpop.permute.xlu0 %2407
      %2411 = vset.pattern.permute.xlu0 0
      %2412 = vperm.xlu0 %2411, %v2282
      %v2413 = vpop.permute.xlu0 %2412
      %2416 = vset.pattern.permute.xlu0 0
      %2417 = vperm.xlu0 %2416, %v2285
      %v2418 = vpop.permute.xlu0 %2417
      %2421 = vset.pattern.permute.xlu0 0
      %2422 = vperm.xlu0 %2421, %v2290
      %v2423 = vpop.permute.xlu0 %2422
      %2426 = vset.pattern.permute.xlu0 0
      %2427 = vperm.xlu0 %2426, %v2293
      %v2428 = vpop.permute.xlu0 %2427
      %2431 = vset.pattern.permute.xlu0 0
      %2432 = vperm.xlu0 %2431, %v2298
      %v2433 = vpop.permute.xlu0 %2432
      %2436 = vset.pattern.permute.xlu0 0
      %2437 = vperm.xlu0 %2436, %v2301
      %v2438 = vpop.permute.xlu0 %2437
      %2441 = vset.pattern.permute.xlu0 0
      %2442 = vperm.xlu0 %2441, %v2306
      %v2443 = vpop.permute.xlu0 %2442
      %2446 = vset.pattern.permute.xlu0 0
      %2447 = vperm.xlu0 %2446, %v2309
      %v2448 = vpop.permute.xlu0 %2447
      %2451 = vset.pattern.permute.xlu0 0
      %2452 = vperm.xlu0 %2451, %v2314
      %v2453 = vpop.permute.xlu0 %2452
      %2456 = vset.pattern.permute.xlu0 0
      %2457 = vperm.xlu0 %2456, %v2317
      %v2458 = vpop.permute.xlu0 %2457
      %2461 = vset.pattern.permute.xlu0 0
      %2462 = vperm.xlu0 %2461, %v2322
      %v2463 = vpop.permute.xlu0 %2462
      %2466 = vset.pattern.permute.xlu0 0
      %2467 = vperm.xlu0 %2466, %v2325
      %v2468 = vpop.permute.xlu0 %2467
      %2471 = vset.pattern.permute.xlu0 0
      %2472 = vperm.xlu0 %2471, %v2330
      %v2473 = vpop.permute.xlu0 %2472
      %2476 = vset.pattern.permute.xlu0 0
      %2477 = vperm.xlu0 %2476, %v2333
      %v2478 = vpop.permute.xlu0 %2477
      %2481 = vset.pattern.permute.xlu0 0
      %2482 = vperm.xlu0 %2481, %v2338
      %v2483 = vpop.permute.xlu0 %2482
      %2486 = vset.pattern.permute.xlu0 0
      %2487 = vperm.xlu0 %2486, %v2341
      %v2488 = vpop.permute.xlu0 %2487
      %2491 = vset.pattern.permute.xlu0 0
      %2492 = vperm.xlu0 %2491, %v2346
      %v2493 = vpop.permute.xlu0 %2492
      %2496 = vset.pattern.permute.xlu0 0
      %2497 = vperm.xlu0 %2496, %v2349
      %v2498 = vpop.permute.xlu0 %2497
      %2501 = vset.pattern.permute.xlu0 0
      %2502 = vperm.xlu0 %2501, %v2354
      %v2503 = vpop.permute.xlu0 %2502
      %2506 = vset.pattern.permute.xlu0 0
      %2507 = vperm.xlu0 %2506, %v2357
      %v2508 = vpop.permute.xlu0 %2507
      %2511 = vset.pattern.permute.xlu0 0
      %2512 = vperm.xlu0 %2511, %v2362
      %v2513 = vpop.permute.xlu0 %2512
      %2516 = vset.pattern.permute.xlu0 0
      %2517 = vperm.xlu0 %2516, %v2365
      %v2518 = vpop.permute.xlu0 %2517
      %2521 = vset.pattern.permute.xlu0 0
      %2522 = vperm.xlu0 %2521, %v2370
      %v2523 = vpop.permute.xlu0 %2522
      %2526 = vset.pattern.permute.xlu0 0
      %2527 = vperm.xlu0 %2526, %v2373
      %v2528 = vpop.permute.xlu0 %2527
      %2531 = vset.pattern.permute.xlu0 0
      %2532 = vperm.xlu0 %2531, %v2378
      %v2533 = vpop.permute.xlu0 %2532
      %2536 = vset.pattern.permute.xlu0 0
      %2537 = vperm.xlu0 %2536, %v2381
      %v2538 = vpop.permute.xlu0 %2537
      %2541 = vset.pattern.permute.xlu0 0
      %2542 = vperm.xlu0 %2541, %v2386
      %v2543 = vpop.permute.xlu0 %2542
      %2546 = vset.pattern.permute.xlu0 0
      %2547 = vperm.xlu0 %2546, %v2389
      %v2548 = vpop.permute.xlu0 %2547
      %2551 = vset.pattern.permute.xlu0 0
      %2552 = vperm.xlu0 %2551, %v2394
      %v2553 = vpop.permute.xlu0 %2552
      %2556 = vset.pattern.permute.xlu0 0
      %2557 = vperm.xlu0 %2556, %v2397
      %v2558 = vpop.permute.xlu0 %2557
      %v2560 = vadd.f32 %v1582, %v2403
      %v2561 = vadd.f32 %v1585, %v2408
      %v2562 = vadd.f32 %v1590, %v2413
      %v2563 = vadd.f32 %v1593, %v2418
      %v2564 = vadd.f32 %v1598, %v2423
      %v2565 = vadd.f32 %v1601, %v2428
      %v2566 = vadd.f32 %v1606, %v2433
      %v2567 = vadd.f32 %v1609, %v2438
      %v2568 = vadd.f32 %v1614, %v2443
      %v2569 = vadd.f32 %v1617, %v2448
      %v2570 = vadd.f32 %v1622, %v2453
      %v2571 = vadd.f32 %v1625, %v2458
      %v2572 = vadd.f32 %v1630, %v2463
      %v2573 = vadd.f32 %v1633, %v2468
      %v2574 = vadd.f32 %v1638, %v2473
      %v2575 = vadd.f32 %v1641, %v2478
      %v2576 = vadd.f32 %v1646, %v2483
      %v2577 = vadd.f32 %v1649, %v2488
      %v2578 = vadd.f32 %v1654, %v2493
      %v2579 = vadd.f32 %v1657, %v2498
      %v2580 = vadd.f32 %v1662, %v2503
      %v2581 = vadd.f32 %v1665, %v2508
      %v2582 = vadd.f32 %v1670, %v2513
      %v2583 = vadd.f32 %v1673, %v2518
      %v2584 = vadd.f32 %v1678, %v2523
      %v2585 = vadd.f32 %v1681, %v2528
      %v2586 = vadd.f32 %v1686, %v2533
      %v2587 = vadd.f32 %v1689, %v2538
      %v2588 = vadd.f32 %v1694, %v2543
      %v2589 = vadd.f32 %v1697, %v2548
      %v2590 = vadd.f32 %v1702, %v2553
      %v2591 = vadd.f32 %v1705, %v2558
      %v2592 = vld [vmem:[%s9] sm:$0xff]
      %v2593 = vld [vmem:[%s9 + $0x8] sm:$0xff]
      %v2594 = vld [vmem:[%s9 + $0x10] sm:$0xff]
      %v2595 = vld [vmem:[%s9 + $0x18] sm:$0xff]
      %v2596 = vld [vmem:[%s9 + $0x20] sm:$0xff]
      %v2597 = vld [vmem:[%s9 + $0x28] sm:$0xff]
      %v2598 = vld [vmem:[%s9 + $0x30] sm:$0xff]
      %v2599 = vld [vmem:[%s9 + $0x38] sm:$0xff]
      %v2600 = vld [vmem:[%s9 + $0x40] sm:$0xff]
      %v2601 = vld [vmem:[%s9 + $0x48] sm:$0xff]
      %v2602 = vld [vmem:[%s9 + $0x50] sm:$0xff]
      %v2603 = vld [vmem:[%s9 + $0x58] sm:$0xff]
      %v2604 = vld [vmem:[%s9 + $0x60] sm:$0xff]
      %v2605 = vld [vmem:[%s9 + $0x68] sm:$0xff]
      %v2606 = vld [vmem:[%s9 + $0x70] sm:$0xff]
      %v2607 = vld [vmem:[%s9 + $0x78] sm:$0xff]
      %v2608 = vld [vmem:[%s9 + $0x80] sm:$0xff]
      %v2609 = vld [vmem:[%s9 + $0x88] sm:$0xff]
      %v2610 = vld [vmem:[%s9 + $0x90] sm:$0xff]
      %v2611 = vld [vmem:[%s9 + $0x98] sm:$0xff]
      %v2612 = vld [vmem:[%s9 + $0xa0] sm:$0xff]
      %v2613 = vld [vmem:[%s9 + $0xa8] sm:$0xff]
      %v2614 = vld [vmem:[%s9 + $0xb0] sm:$0xff]
      %v2615 = vld [vmem:[%s9 + $0xb8] sm:$0xff]
      %v2616 = vld [vmem:[%s9 + $0xc0] sm:$0xff]
      %v2617 = vld [vmem:[%s9 + $0xc8] sm:$0xff]
      %v2618 = vld [vmem:[%s9 + $0xd0] sm:$0xff]
      %v2619 = vld [vmem:[%s9 + $0xd8] sm:$0xff]
      %v2620 = vld [vmem:[%s9 + $0xe0] sm:$0xff]
      %v2621 = vld [vmem:[%s9 + $0xe8] sm:$0xff]
      %v2622 = vld [vmem:[%s9 + $0xf0] sm:$0xff]
      %v2623 = vld [vmem:[%s9 + $0xf8] sm:$0xff]
      %2625 = vset.pattern.permute.xlu0 0
      %2626 = vperm.xlu0 %2625, %v2592
      %v2627 = vpop.permute.xlu0 %2626
      %2630 = vset.pattern.permute.xlu0 0
      %2631 = vperm.xlu0 %2630, %v2593
      %v2632 = vpop.permute.xlu0 %2631
      %2635 = vset.pattern.permute.xlu0 0
      %2636 = vperm.xlu0 %2635, %v2594
      %v2637 = vpop.permute.xlu0 %2636
      %2640 = vset.pattern.permute.xlu0 0
      %2641 = vperm.xlu0 %2640, %v2595
      %v2642 = vpop.permute.xlu0 %2641
      %2645 = vset.pattern.permute.xlu0 0
      %2646 = vperm.xlu0 %2645, %v2596
      %v2647 = vpop.permute.xlu0 %2646
      %2650 = vset.pattern.permute.xlu0 0
      %2651 = vperm.xlu0 %2650, %v2597
      %v2652 = vpop.permute.xlu0 %2651
      %2655 = vset.pattern.permute.xlu0 0
      %2656 = vperm.xlu0 %2655, %v2598
      %v2657 = vpop.permute.xlu0 %2656
      %2660 = vset.pattern.permute.xlu0 0
      %2661 = vperm.xlu0 %2660, %v2599
      %v2662 = vpop.permute.xlu0 %2661
      %2665 = vset.pattern.permute.xlu0 0
      %2666 = vperm.xlu0 %2665, %v2600
      %v2667 = vpop.permute.xlu0 %2666
      %2670 = vset.pattern.permute.xlu0 0
      %2671 = vperm.xlu0 %2670, %v2601
      %v2672 = vpop.permute.xlu0 %2671
      %2675 = vset.pattern.permute.xlu0 0
      %2676 = vperm.xlu0 %2675, %v2602
      %v2677 = vpop.permute.xlu0 %2676
      %2680 = vset.pattern.permute.xlu0 0
      %2681 = vperm.xlu0 %2680, %v2603
      %v2682 = vpop.permute.xlu0 %2681
      %2685 = vset.pattern.permute.xlu0 0
      %2686 = vperm.xlu0 %2685, %v2604
      %v2687 = vpop.permute.xlu0 %2686
      %2690 = vset.pattern.permute.xlu0 0
      %2691 = vperm.xlu0 %2690, %v2605
      %v2692 = vpop.permute.xlu0 %2691
      %2695 = vset.pattern.permute.xlu0 0
      %2696 = vperm.xlu0 %2695, %v2606
      %v2697 = vpop.permute.xlu0 %2696
      %2700 = vset.pattern.permute.xlu0 0
      %2701 = vperm.xlu0 %2700, %v2607
      %v2702 = vpop.permute.xlu0 %2701
      %2705 = vset.pattern.permute.xlu0 0
      %2706 = vperm.xlu0 %2705, %v2608
      %v2707 = vpop.permute.xlu0 %2706
      %2710 = vset.pattern.permute.xlu0 0
      %2711 = vperm.xlu0 %2710, %v2609
      %v2712 = vpop.permute.xlu0 %2711
      %2715 = vset.pattern.permute.xlu0 0
      %2716 = vperm.xlu0 %2715, %v2610
      %v2717 = vpop.permute.xlu0 %2716
      %2720 = vset.pattern.permute.xlu0 0
      %2721 = vperm.xlu0 %2720, %v2611
      %v2722 = vpop.permute.xlu0 %2721
      %2725 = vset.pattern.permute.xlu0 0
      %2726 = vperm.xlu0 %2725, %v2612
      %v2727 = vpop.permute.xlu0 %2726
      %2730 = vset.pattern.permute.xlu0 0
      %2731 = vperm.xlu0 %2730, %v2613
      %v2732 = vpop.permute.xlu0 %2731
      %2735 = vset.pattern.permute.xlu0 0
      %2736 = vperm.xlu0 %2735, %v2614
      %v2737 = vpop.permute.xlu0 %2736
      %2740 = vset.pattern.permute.xlu0 0
      %2741 = vperm.xlu0 %2740, %v2615
      %v2742 = vpop.permute.xlu0 %2741
      %2745 = vset.pattern.permute.xlu0 0
      %2746 = vperm.xlu0 %2745, %v2616
      %v2747 = vpop.permute.xlu0 %2746
      %2750 = vset.pattern.permute.xlu0 0
      %2751 = vperm.xlu0 %2750, %v2617
      %v2752 = vpop.permute.xlu0 %2751
      %2755 = vset.pattern.permute.xlu0 0
      %2756 = vperm.xlu0 %2755, %v2618
      %v2757 = vpop.permute.xlu0 %2756
      %2760 = vset.pattern.permute.xlu0 0
      %2761 = vperm.xlu0 %2760, %v2619
      %v2762 = vpop.permute.xlu0 %2761
      %2765 = vset.pattern.permute.xlu0 0
      %2766 = vperm.xlu0 %2765, %v2620
      %v2767 = vpop.permute.xlu0 %2766
      %2770 = vset.pattern.permute.xlu0 0
      %2771 = vperm.xlu0 %2770, %v2621
      %v2772 = vpop.permute.xlu0 %2771
      %2775 = vset.pattern.permute.xlu0 0
      %2776 = vperm.xlu0 %2775, %v2622
      %v2777 = vpop.permute.xlu0 %2776
      %2780 = vset.pattern.permute.xlu0 0
      %2781 = vperm.xlu0 %2780, %v2623
      %v2782 = vpop.permute.xlu0 %2781
      %v2784 = vadd.f32 %v2560, %v2627
      %v2785 = vadd.f32 %v2561, %v2632
      %v2786 = vadd.f32 %v2562, %v2637
      %v2787 = vadd.f32 %v2563, %v2642
      %v2788 = vadd.f32 %v2564, %v2647
      %v2789 = vadd.f32 %v2565, %v2652
      %v2790 = vadd.f32 %v2566, %v2657
      %v2791 = vadd.f32 %v2567, %v2662
      %v2792 = vadd.f32 %v2568, %v2667
      %v2793 = vadd.f32 %v2569, %v2672
      %v2794 = vadd.f32 %v2570, %v2677
      %v2795 = vadd.f32 %v2571, %v2682
      %v2796 = vadd.f32 %v2572, %v2687
      %v2797 = vadd.f32 %v2573, %v2692
      %v2798 = vadd.f32 %v2574, %v2697
      %v2799 = vadd.f32 %v2575, %v2702
      %v2800 = vadd.f32 %v2576, %v2707
      %v2801 = vadd.f32 %v2577, %v2712
      %v2802 = vadd.f32 %v2578, %v2717
      %v2803 = vadd.f32 %v2579, %v2722
      %v2804 = vadd.f32 %v2580, %v2727
      %v2805 = vadd.f32 %v2581, %v2732
      %v2806 = vadd.f32 %v2582, %v2737
      %v2807 = vadd.f32 %v2583, %v2742
      %v2808 = vadd.f32 %v2584, %v2747
      %v2809 = vadd.f32 %v2585, %v2752
      %v2810 = vadd.f32 %v2586, %v2757
      %v2811 = vadd.f32 %v2587, %v2762
      %v2812 = vadd.f32 %v2588, %v2767
      %v2813 = vadd.f32 %v2589, %v2772
      %v2814 = vadd.f32 %v2590, %v2777
      %v2815 = vadd.f32 %v2591, %v2782
      %v2816 = vmax.f32 %v2784, 0.0
      %v2817 = vmax.f32 %v2785, 0.0
      %v2818 = vmax.f32 %v2786, 0.0
      %v2819 = vmax.f32 %v2787, 0.0
      %v2820 = vmax.f32 %v2788, 0.0
      %v2821 = vmax.f32 %v2789, 0.0
      %v2822 = vmax.f32 %v2790, 0.0
      %v2823 = vmax.f32 %v2791, 0.0
      %v2824 = vmax.f32 %v2792, 0.0
      %v2825 = vmax.f32 %v2793, 0.0
      %v2826 = vmax.f32 %v2794, 0.0
      %v2827 = vmax.f32 %v2795, 0.0
      %v2828 = vmax.f32 %v2796, 0.0
      %v2829 = vmax.f32 %v2797, 0.0
      %v2830 = vmax.f32 %v2798, 0.0
      %v2831 = vmax.f32 %v2799, 0.0
      %v2832 = vmax.f32 %v2800, 0.0
      %v2833 = vmax.f32 %v2801, 0.0
      %v2834 = vmax.f32 %v2802, 0.0
      %v2835 = vmax.f32 %v2803, 0.0
      %v2836 = vmax.f32 %v2804, 0.0
      %v2837 = vmax.f32 %v2805, 0.0
      %v2838 = vmax.f32 %v2806, 0.0
      %v2839 = vmax.f32 %v2807, 0.0
      %v2840 = vmax.f32 %v2808, 0.0
      %v2841 = vmax.f32 %v2809, 0.0
      %v2842 = vmax.f32 %v2810, 0.0
      %v2843 = vmax.f32 %v2811, 0.0
      %v2844 = vmax.f32 %v2812, 0.0
      %v2845 = vmax.f32 %v2813, 0.0
      %v2846 = vmax.f32 %v2814, 0.0
      %v2847 = vmax.f32 %v2815, 0.0
      %v2848 = vld [vmem:[%s10] sm:$0xff]
      %v2849 = vld [vmem:[%s10 + $0x8] sm:$0xff]
      %v2850 = vld [vmem:[%s10 + $0x10] sm:$0xff]
      %v2851 = vld [vmem:[%s10 + $0x18] sm:$0xff]
      %v2852 = vld [vmem:[%s10 + $0x20] sm:$0xff]
      %v2853 = vld [vmem:[%s10 + $0x28] sm:$0xff]
      %v2854 = vld [vmem:[%s10 + $0x30] sm:$0xff]
      %v2855 = vld [vmem:[%s10 + $0x38] sm:$0xff]
      %v2856 = vpack.c.bf16 %v2817, %v2816
      %v2857 = vpack.c.bf16 %v2819, %v2818
      %v2858 = vpack.c.bf16 %v2821, %v2820
      %v2859 = vpack.c.bf16 %v2823, %v2822
      %v2860 = vpack.c.bf16 %v2825, %v2824
      %v2861 = vpack.c.bf16 %v2827, %v2826
      %v2862 = vpack.c.bf16 %v2829, %v2828
      %v2863 = vpack.c.bf16 %v2831, %v2830
      %v2864 = vpack.c.bf16 %v2833, %v2832
      %v2865 = vpack.c.bf16 %v2835, %v2834
      %v2866 = vpack.c.bf16 %v2837, %v2836
      %v2867 = vpack.c.bf16 %v2839, %v2838
      %v2868 = vpack.c.bf16 %v2841, %v2840
      %v2869 = vpack.c.bf16 %v2843, %v2842
      %v2870 = vpack.c.bf16 %v2845, %v2844
      %v2871 = vpack.c.bf16 %v2847, %v2846
      %v2872 = vld [vmem:[%s11] sm:$0xff]
      %v2873 = vld [vmem:[%s11 + $0x8] sm:$0xff]
      %v2874 = vld [vmem:[%s11 + $0x10] sm:$0xff]
      %v2875 = vld [vmem:[%s11 + $0x18] sm:$0xff]
      %v2876 = vld [vmem:[%s11 + $0x20] sm:$0xff]
      %v2877 = vld [vmem:[%s11 + $0x28] sm:$0xff]
      %v2878 = vld [vmem:[%s11 + $0x30] sm:$0xff]
      %v2879 = vld [vmem:[%s11 + $0x38] sm:$0xff]
      %2881 = vset.pattern.permute.xlu0 0
      %2882 = vperm.xlu0 %2881, %v2872
      %v2883 = vpop.permute.xlu0 %2882
      %2886 = vset.pattern.permute.xlu0 0
      %2887 = vperm.xlu0 %2886, %v2873
      %v2888 = vpop.permute.xlu0 %2887
      %2891 = vset.pattern.permute.xlu0 0
      %2892 = vperm.xlu0 %2891, %v2874
      %v2893 = vpop.permute.xlu0 %2892
      %2896 = vset.pattern.permute.xlu0 0
      %2897 = vperm.xlu0 %2896, %v2875
      %v2898 = vpop.permute.xlu0 %2897
      %2901 = vset.pattern.permute.xlu0 0
      %2902 = vperm.xlu0 %2901, %v2876
      %v2903 = vpop.permute.xlu0 %2902
      %2906 = vset.pattern.permute.xlu0 0
      %2907 = vperm.xlu0 %2906, %v2877
      %v2908 = vpop.permute.xlu0 %2907
      %2911 = vset.pattern.permute.xlu0 0
      %2912 = vperm.xlu0 %2911, %v2878
      %v2913 = vpop.permute.xlu0 %2912
      %2916 = vset.pattern.permute.xlu0 0
      %2917 = vperm.xlu0 %2916, %v2879
      %v2918 = vpop.permute.xlu0 %2917
      %v2928 = vunpack.c.l.b16 %v2848
      %v2929 = vunpack.c.h.b16 %v2848
      %v2930 = vunpack.c.l.b16 %v2849
      %v2931 = vunpack.c.h.b16 %v2849
      %v2932 = vunpack.c.l.b16 %v2850
      %v2933 = vunpack.c.h.b16 %v2850
      %v2934 = vunpack.c.l.b16 %v2851
      %v2935 = vunpack.c.h.b16 %v2851
      %v2936 = vunpack.c.l.b16 %v2852
      %v2937 = vunpack.c.h.b16 %v2852
      %v2938 = vunpack.c.l.b16 %v2853
      %v2939 = vunpack.c.h.b16 %v2853
      %v2940 = vunpack.c.l.b16 %v2854
      %v2941 = vunpack.c.h.b16 %v2854
      %v2942 = vunpack.c.l.b16 %v2855
      %v2943 = vunpack.c.h.b16 %v2855
      %v2944 = vpack.c.b16 %v2930, %v2928
      %v2945 = vpack.c.b16 %v2931, %v2929
      %v2946 = vpack.c.b16 %v2934, %v2932
      %v2947 = vpack.c.b16 %v2935, %v2933
      %v2948 = vpack.c.b16 %v2938, %v2936
      %v2949 = vpack.c.b16 %v2939, %v2937
      %v2950 = vpack.c.b16 %v2942, %v2940
      %v2951 = vpack.c.b16 %v2943, %v2941
      %2960 = vmatprep.subr.bf16.mxu0 0
      %2961 = vmatpush1.bf16.msra.mxu0 %v2856
      %2962 = vmatprep.subr.bf16.mxu0 0
      %2963 = vmatpush1.bf16.msra.mxu0 %v2857
      %2964 = vmatprep.subr.bf16.mxu0 0
      %2965 = vmatpush1.bf16.msra.mxu0 %v2858
      %2966 = vmatprep.subr.bf16.mxu0 0
      %2967 = vmatpush1.bf16.msra.mxu0 %v2859
      %2968 = vmatprep.subr.bf16.mxu0 0
      %2969 = vmatpush1.bf16.msra.mxu0 %v2860
      %2970 = vmatprep.subr.bf16.mxu0 0
      %2971 = vmatpush1.bf16.msra.mxu0 %v2861
      %2972 = vmatprep.subr.bf16.mxu0 0
      %2973 = vmatpush1.bf16.msra.mxu0 %v2862
      %2974 = vmatprep.subr.bf16.mxu0 0
      %2975 = vmatpush1.bf16.msra.mxu0 %v2863
      %2976 = vmatprep.subr.bf16.mxu0 0
      %2977 = vmatpush1.bf16.msra.mxu0 %v2864
      %2978 = vmatprep.subr.bf16.mxu0 0
      %2979 = vmatpush1.bf16.msra.mxu0 %v2865
      %2980 = vmatprep.subr.bf16.mxu0 0
      %2981 = vmatpush1.bf16.msra.mxu0 %v2866
      %2982 = vmatprep.subr.bf16.mxu0 0
      %2983 = vmatpush1.bf16.msra.mxu0 %v2867
      %2984 = vmatprep.subr.bf16.mxu0 0
      %2985 = vmatpush1.bf16.msra.mxu0 %v2868
      %2986 = vmatprep.subr.bf16.mxu0 0
      %2987 = vmatpush1.bf16.msra.mxu0 %v2869
      %2988 = vmatprep.subr.bf16.mxu0 0
      %2989 = vmatpush1.bf16.msra.mxu0 %v2870
      %2990 = vmatprep.subr.bf16.mxu0 0
      %2991 = vmatpush1.bf16.msra.mxu0 %v2871
      %2992 = vmatprep.mubr.bf16.mxu0 %v2945
      %2993 = vmatmul.mubr.bf16.gmra.mrb[0].mxu0 %v2944
      %v2994 = vpop.f32.mrb[0].mxu0
      %v2995 = vadd.f32 %v2883, %v2994
      %v2996 = vpop.f32.mrb[0].mxu0
      %v2997 = vpop.f32.mrb[0].mxu0
      %v2998 = vadd.f32 %v2888, %v2997
      %v2999 = vpop.f32.mrb[0].mxu0
      %3000 = vmatprep.mubr.bf16.mxu0 %v2947
      %3001 = vmatmul.mubr.bf16.gmra.mrb[0].mxu0 %v2946
      %v3002 = vpop.f32.mrb[0].mxu0
      %v3003 = vadd.f32 %v2893, %v3002
      %v3004 = vpop.f32.mrb[0].mxu0
      %v3005 = vpop.f32.mrb[0].mxu0
      %v3006 = vadd.f32 %v2898, %v3005
      %v3007 = vpop.f32.mrb[0].mxu0
      %3008 = vmatprep.mubr.bf16.mxu0 %v2949
      %3009 = vmatmul.mubr.bf16.gmra.mrb[0].mxu0 %v2948
      %v3010 = vpop.f32.mrb[0].mxu0
      %v3011 = vadd.f32 %v2903, %v3010
      %v3012 = vpop.f32.mrb[0].mxu0
      %v3013 = vpop.f32.mrb[0].mxu0
      %v3014 = vadd.f32 %v2908, %v3013
      %v3015 = vpop.f32.mrb[0].mxu0
      %3016 = vmatprep.mubr.bf16.mxu0 %v2951
      %3017 = vmatmul.mubr.bf16.gmra.mrb[0].mxu0 %v2950
      %v3018 = vpop.f32.mrb[0].mxu0
      %v3019 = vadd.f32 %v2913, %v3018
      %v3020 = vpop.f32.mrb[0].mxu0
      %v3021 = vpop.f32.mrb[0].mxu0
      %v3022 = vadd.f32 %v2918, %v3021
      %v3023 = vpop.f32.mrb[0].mxu0
      %3024 = vdwg.mxu0
      %v3025 = vmax.f32 %v2995, 0.0
      %v3026 = vmax.f32 %v2998, 0.0
      %v3027 = vmax.f32 %v3003, 0.0
      %v3028 = vmax.f32 %v3006, 0.0
      %v3029 = vmax.f32 %v3011, 0.0
      %v3030 = vmax.f32 %v3014, 0.0
      %v3031 = vmax.f32 %v3019, 0.0
      %v3032 = vmax.f32 %v3022, 0.0
      %v3033 = vld [vmem:[%s12] sm:$0xf]
      %v3034 = vpack.c.bf16 %v3026, %v3025
      %v3035 = vpack.c.bf16 %v3028, %v3027
      %v3036 = vpack.c.bf16 %v3030, %v3029
      %v3037 = vpack.c.bf16 %v3032, %v3031
      %v3038 = vld [vmem:[%s13] sm:$0xff]
      %3040 = vset.pattern.permute.xlu0 0
      %3041 = vperm.xlu0 %3040, %v3038
      %v3042 = vpop.permute.xlu0 %3041
      %vm3044 = vcmask 523264
      %v3046 = vsel %vm3044, %v3033, 0
      %3048 = vmatprep.subr.bf16.mxu0 0
      %3049 = vmatpush1.bf16.msra.mxu0 %v3034
      %3050 = vmatprep.subr.bf16.mxu0 0
      %3051 = vmatpush1.bf16.msra.mxu0 %v3035
      %3052 = vmatprep.subr.bf16.mxu0 0
      %3053 = vmatpush1.bf16.msra.mxu0 %v3036
      %3054 = vmatprep.subr.bf16.mxu0 0
      %3055 = vmatpush1.bf16.msra.mxu0 %v3037
      %3056 = vmatprep.subr.bf16.mxu0 0
      %3057 = vmatpush1.bf16.msra.mxu0 0
      %3058 = vmatprep.subr.bf16.mxu0 0
      %3059 = vmatpush1.bf16.msra.mxu0 0
      %3060 = vmatprep.subr.bf16.mxu0 0
      %3061 = vmatpush1.bf16.msra.mxu0 0
      %3062 = vmatprep.subr.bf16.mxu0 0
      %3063 = vmatpush1.bf16.msra.mxu0 0
      %3064 = vmatprep.subr.bf16.mxu0 0
      %3065 = vmatpush1.bf16.msra.mxu0 0
      %3066 = vmatprep.subr.bf16.mxu0 0
      %3067 = vmatpush1.bf16.msra.mxu0 0
      %3068 = vmatprep.subr.bf16.mxu0 0
      %3069 = vmatpush1.bf16.msra.mxu0 0
      %3070 = vmatprep.subr.bf16.mxu0 0
      %3071 = vmatpush1.bf16.msra.mxu0 0
      %3072 = vmatprep.subr.bf16.mxu0 0
      %3073 = vmatpush1.bf16.msra.mxu0 0
      %3074 = vmatprep.subr.bf16.mxu0 0
      %3075 = vmatpush1.bf16.msra.mxu0 0
      %3076 = vmatprep.subr.bf16.mxu0 0
      %3077 = vmatpush1.bf16.msra.mxu0 0
      %3078 = vmatprep.subr.bf16.mxu0 0
      %3079 = vmatpush1.bf16.msra.mxu0 0
      %3080 = vmatprep.mubr.bf16.mxu0 0
      %3081 = vmatmul.mubr.bf16.gmra.mrb[0].mxu0 %v3046
      %v3082 = vpop.f32.mrb[0].mxu0
      %v3083 = vadd.f32 %v3042, %v3082
      %v3084 = vpop.f32.mrb[0].mxu0
      %v3085 = vpop.f32.mrb[0].mxu0
      %v3086 = vpop.f32.mrb[0].mxu0
      %3087 = vdwg.mxu0
      %3088 = vst [vmem:[%s462] sm:$0xff] %v3083
      %p3089 = scmp.lt.s32.totalorder %s25, 1
      %s3090 = scalar_select %p3089, %s25, 1
      %s3091 = smul.addr %s3090, 8
      %s3092 = scalar_lea.vmem %s14, %s3091
      // Predicated region
      $region77: #{gcn_forward.1} parent=75 // pred_check
        %p3093 = pneg %p342
      $region78: #{gcn_forward.1} parent=75 // pred_check_branch
        %3095 = sbr.rel (%p3093) target = $region80
      $region79: #{gcn_forward.1} parent=75 // pred_region
        _
      $region80: #{gcn_forward.1} parent=75 // pred_fallthru
        _
    $region76: #{gcn_forward.1} parent=5 // pred_fallthru
      _
    %p3096 = scmp.le.s32.totalorder 2, %s20
    // Predicated region
    $region81: #{gcn_forward.1} parent=5 // pred_check
      %p3097 = pneg %p3096
    $region82: #{gcn_forward.1} parent=5 // pred_check_branch
      %3099 = sbr.rel (%p3097) target = $region84
    $region83: #{gcn_forward.1} parent=5 // pred_region
      %s3100 = ssub.s32 %s20, 2
      // Predicated region
      $region85: #{gcn_forward.1} parent=83 // pred_check
        %p3101 = pneg %p348
      $region86: #{gcn_forward.1} parent=83 // pred_check_branch
        %3103 = sbr.rel (%p3101) target = $region88
      $region87: #{gcn_forward.1} parent=83 // pred_region
        %p3104 = scmp.lt.s32.totalorder %s26, 1
        %s3105 = scalar_select %p3104, %s26, 1
        %s3106 = smul.addr %s3105, 8
        %s3107 = scalar_lea.vmem %s14, %s3106
      $region88: #{gcn_forward.1} parent=83 // pred_fallthru
        _
    $region84: #{gcn_forward.1} parent=5 // pred_fallthru
      _
  $region6: #{gcn_forward.1} parent=0 // loop_footer
    %s24 = sadd.s32 1, %s20
  $region7: #{gcn_forward.1} parent=0 // loop_footer_branch
    %19 = sbr.rel target = $region3
  $region8: #{gcn_forward.1} parent=0 // loop_exit
    _

// kernel: gcn_forward.1
$region0: #{gcn_forward.1}
  #allocation0 [shape = 'u32[]', space=smem, size = 0x4, offset = 0x4, fixed_abs, tag = 'smem constant byte address 0x4 - core index']
  #allocation1 [shape = 'u32[144,128]{1,0:T(1,128)}', space=vmem, size = 0x12000, scoped, tag = 'internal scratch']
  #allocation2 [shape = 'bf16[80,128]{1,0:T(16,128)(2,1)}', space=vmem, size = 0x5000, scoped, tag = 'scratch operand']
  %s0 = inlined_call_operand.vmem [shape: bf16[128,128], index: 0, kind: input, shape index: {}]
  %s1 = inlined_call_operand.vmem [shape: bf16[2,8,128], index: 1, kind: input, shape index: {}]
  %s2 = inlined_call_operand.vmem [shape: bf16[16,8], index: 2, kind: input, shape index: {}]
  %s3 = inlined_call_operand.vmem [shape: f32[16,1], index: 3, kind: input, shape index: {}]
  %s4 = inlined_call_operand.vmem [shape: bf16[4,16,16], index: 4, kind: input, shape index: {}]
  %s5 = inlined_call_operand.vmem [shape: f32[4,16,1], index: 5, kind: input, shape index: {}]
  %s6 = inlined_call_operand.vmem [shape: bf16[512,80], index: 6, kind: input, shape index: {}]
  %s7 = inlined_call_operand.vmem [shape: f32[256,1], index: 7, kind: input, shape index: {}]
  %s8 = inlined_call_operand.vmem [shape: bf16[256,256], index: 8, kind: input, shape index: {}]
  %s9 = inlined_call_operand.vmem [shape: f32[256,1], index: 9, kind: input, shape index: {}]
  %s10 = inlined_call_operand.vmem [shape: bf16[64,256], index: 10, kind: input, shape index: {}]
  %s11 = inlined_call_operand.vmem [shape: f32[64,1], index: 11, kind: input, shape index: {}]
  %s12 = inlined_call_operand.vmem [shape: bf16[8,64], index: 12, kind: input, shape index: {}]
  %s13 = inlined_call_operand.vmem [shape: f32[8,1], index: 13, kind: input, shape index: {}]
  %s14 = inlined_call_operand.vmem [shape: f32[2,8,128], index: 14, kind: output, shape index: {}]
  %s15 = sld [smem:[#allocation0]]
  $region89: #{gcn_forward.1} parent=0
    _
  %s17 = ssub.s32 1, %s15
  %s18 = scalar_select 0, %s17, %s15
  loop: start=0, step=1, limit=4
  $region2: #{gcn_forward.1} parent=0 // loop_pre_header
    _
  $region3: #{gcn_forward.1} parent=0 // loop_header
    %s20 = sphi 0, %s24
    %p21 = scmp.ge.s32.totalorder %s20, 4
    %s28 = sphi 0, %s28
    %s30 = sphi 0, %s28
    %s31 = sphi 0, %s30
    %s45 = sphi 0, %s31
    %s51 = sphi 0, %s53
    %s54 = sphi 0, %s51
    %s55 = sphi 0, %s54
    %s71 = sphi 0, %s55
    %s75 = sphi 0, %s75
    %s77 = sphi 0, %s75
    %s78 = sphi 0, %s77
    %s92 = sphi 0, %s78
    %s96 = sphi 0, %s96
    %s98 = sphi 0, %s96
    %s99 = sphi 0, %s98
    %s113 = sphi 0, %s99
    %s117 = sphi 0, %s117
    %s119 = sphi 0, %s117
    %s120 = sphi 0, %s119
    %s134 = sphi 0, %s120
    %s138 = sphi 0, %s138
    %s140 = sphi 0, %s138
    %s141 = sphi 0, %s140
    %s155 = sphi 0, %s141
    %s159 = sphi 0, %s159
    %s161 = sphi 0, %s159
    %s162 = sphi 0, %s161
    %s176 = sphi 0, %s162
    %s180 = sphi 0, %s180
    %s182 = sphi 0, %s180
    %s183 = sphi 0, %s182
    %s197 = sphi 0, %s183
    %s201 = sphi 0, %s201
    %s203 = sphi 0, %s201
    %s204 = sphi 0, %s203
    %s218 = sphi 0, %s204
    %s222 = sphi 0, %s222
    %s224 = sphi 0, %s222
    %s225 = sphi 0, %s224
    %s239 = sphi 0, %s225
    %s243 = sphi 0, %s243
    %s245 = sphi 0, %s243
    %s246 = sphi 0, %s245
    %s260 = sphi 0, %s246
    %s264 = sphi 0, %s264
    %s266 = sphi 0, %s264
    %s267 = sphi 0, %s266
    %s281 = sphi 0, %s267
    %s285 = sphi 0, %s285
    %s287 = sphi 0, %s285
    %s288 = sphi 0, %s287
    %s302 = sphi 0, %s288
    %s306 = sphi 0, %s306
    %s308 = sphi 0, %s306
    %s309 = sphi 0, %s308
    %s323 = sphi 0, %s309
    %s329 = sphi 0, %s331
    %s332 = sphi 0, %s329
    %s333 = sphi 0, %s332
    %s349 = sphi 0, %s333
  $region4: #{gcn_forward.1} parent=0 // loop_header_branch
    %23 = sbr.rel (%p21) target = $region8
  $region5: #{gcn_forward.1} parent=0 // loop_body
    %s25 = ssub.s32 %s20, 1
    %s26 = ssub.s32 %s20, 2
    %s27 = sadd.s32 %s20, 1
    %s29 = sadd.s32 %s28, 1
    %p32 = scmp.eq.s32.totalorder %s20, 1
    %p33 = scmp.ne.s32.totalorder %s28, %s30
    %p34 = scmp.eq.s32.totalorder %s20, 0
    %p35 = por %p33, %p34
    %p36 = scmp.ne.s32.totalorder %s28, %s30
    %p37 = scmp.eq.s32.totalorder %s25, 1
    %p38 = por %p36, %p37
    %p39 = scmp.ne.s32.totalorder %s30, %s31
    %p40 = scmp.eq.s32.totalorder %s25, 0
    %p41 = por %p39, %p40
    %p42 = scmp.ne.s32.totalorder %s30, %s31
    %p43 = scmp.eq.s32.totalorder %s26, 1
    %p44 = por %p42, %p43
    %p46 = scmp.ne.s32.totalorder %s31, %s45
    %p47 = scmp.eq.s32.totalorder %s26, 0
    %p48 = por %p46, %p47
    %s49 = ssub.s32 %s20, %s27
    %p50 = scmp.eq.s32.totalorder %s49, 0
    %s52 = sadd.s32 %s51, 1
    %s53 = scalar_select %p50, %s51, %s52
    %p56 = pneg %p50
    %p57 = scmp.eq.s32.totalorder %s20, 1
    %p58 = por %p56, %p57
    %p59 = scmp.ne.s32.totalorder %s51, %s54
    %p60 = scmp.eq.s32.totalorder %s20, 0
    %p61 = por %p59, %p60
    %p62 = scmp.ne.s32.totalorder %s51, %s54
    %p63 = scmp.eq.s32.totalorder %s25, 1
    %p64 = por %p62, %p63
    %p65 = scmp.ne.s32.totalorder %s54, %s55
    %p66 = scmp.eq.s32.totalorder %s25, 0
    %p67 = por %p65, %p66
    %p68 = scmp.ne.s32.totalorder %s54, %s55
    %p69 = scmp.eq.s32.totalorder %s26, 1
    %p70 = por %p68, %p69
    %p72 = scmp.ne.s32.totalorder %s55, %s71
    %p73 = scmp.eq.s32.totalorder %s26, 0
    %p74 = por %p72, %p73
    %s76 = sadd.s32 %s75, 1
    %p79 = scmp.eq.s32.totalorder %s20, 1
    %p80 = scmp.ne.s32.totalorder %s75, %s77
    %p81 = scmp.eq.s32.totalorder %s20, 0
    %p82 = por %p80, %p81
    %p83 = scmp.ne.s32.totalorder %s75, %s77
    %p84 = scmp.eq.s32.totalorder %s25, 1
    %p85 = por %p83, %p84
    %p86 = scmp.ne.s32.totalorder %s77, %s78
    %p87 = scmp.eq.s32.totalorder %s25, 0
    %p88 = por %p86, %p87
    %p89 = scmp.ne.s32.totalorder %s77, %s78
    %p90 = scmp.eq.s32.totalorder %s26, 1
    %p91 = por %p89, %p90
    %p93 = scmp.ne.s32.totalorder %s78, %s92
    %p94 = scmp.eq.s32.totalorder %s26, 0
    %p95 = por %p93, %p94
    %s97 = sadd.s32 %s96, 1
    %p100 = scmp.eq.s32.totalorder %s20, 1
    %p101 = scmp.ne.s32.totalorder %s96, %s98
    %p102 = scmp.eq.s32.totalorder %s20, 0
    %p103 = por %p101, %p102
    %p104 = scmp.ne.s32.totalorder %s96, %s98
    %p105 = scmp.eq.s32.totalorder %s25, 1
    %p106 = por %p104, %p105
    %p107 = scmp.ne.s32.totalorder %s98, %s99
    %p108 = scmp.eq.s32.totalorder %s25, 0
    %p109 = por %p107, %p108
    %p110 = scmp.ne.s32.totalorder %s98, %s99
    %p111 = scmp.eq.s32.totalorder %s26, 1
    %p112 = por %p110, %p111
    %p114 = scmp.ne.s32.totalorder %s99, %s113
    %p115 = scmp.eq.s32.totalorder %s26, 0
    %p116 = por %p114, %p115
    %s118 = sadd.s32 %s117, 1
    %p121 = scmp.eq.s32.totalorder %s20, 1
    %p122 = scmp.ne.s32.totalorder %s117, %s119
    %p123 = scmp.eq.s32.totalorder %s20, 0
    %p124 = por %p122, %p123
    %p125 = scmp.ne.s32.totalorder %s117, %s119
    %p126 = scmp.eq.s32.totalorder %s25, 1
    %p127 = por %p125, %p126
    %p128 = scmp.ne.s32.totalorder %s119, %s120
    %p129 = scmp.eq.s32.totalorder %s25, 0
    %p130 = por %p128, %p129
    %p131 = scmp.ne.s32.totalorder %s119, %s120
    %p132 = scmp.eq.s32.totalorder %s26, 1
    %p133 = por %p131, %p132
    %p135 = scmp.ne.s32.totalorder %s120, %s134
    %p136 = scmp.eq.s32.totalorder %s26, 0
    %p137 = por %p135, %p136
    %s139 = sadd.s32 %s138, 1
    %p142 = scmp.eq.s32.totalorder %s20, 1
    %p143 = scmp.ne.s32.totalorder %s138, %s140
    %p144 = scmp.eq.s32.totalorder %s20, 0
    %p145 = por %p143, %p144
    %p146 = scmp.ne.s32.totalorder %s138, %s140
    %p147 = scmp.eq.s32.totalorder %s25, 1
    %p148 = por %p146, %p147
    %p149 = scmp.ne.s32.totalorder %s140, %s141
    %p150 = scmp.eq.s32.totalorder %s25, 0
    %p151 = por %p149, %p150
    %p152 = scmp.ne.s32.totalorder %s140, %s141
    %p153 = scmp.eq.s32.totalorder %s26, 1
    %p154 = por %p152, %p153
    %p156 = scmp.ne.s32.totalorder %s141, %s155
    %p157 = scmp.eq.s32.totalorder %s26, 0
    %p158 = por %p156, %p157
    %s160 = sadd.s32 %s159, 1
    %p163 = scmp.eq.s32.totalorder %s20, 1
    %p164 = scmp.ne.s32.totalorder %s159, %s161
    %p165 = scmp.eq.s32.totalorder %s20, 0
    %p166 = por %p164, %p165
    %p167 = scmp.ne.s32.totalorder %s159, %s161
    %p168 = scmp.eq.s32.totalorder %s25, 1
    %p169 = por %p167, %p168
    %p170 = scmp.ne.s32.totalorder %s161, %s162
    %p171 = scmp.eq.s32.totalorder %s25, 0
    %p172 = por %p170, %p171
    %p173 = scmp.ne.s32.totalorder %s161, %s162
    %p174 = scmp.eq.s32.totalorder %s26, 1
    %p175 = por %p173, %p174
    %p177 = scmp.ne.s32.totalorder %s162, %s176
    %p178 = scmp.eq.s32.totalorder %s26, 0
    %p179 = por %p177, %p178
    %s181 = sadd.s32 %s180, 1
    %p184 = scmp.eq.s32.totalorder %s20, 1
    %p185 = scmp.ne.s32.totalorder %s180, %s182
    %p186 = scmp.eq.s32.totalorder %s20, 0
    %p187 = por %p185, %p186
    %p188 = scmp.ne.s32.totalorder %s180, %s182
    %p189 = scmp.eq.s32.totalorder %s25, 1
    %p190 = por %p188, %p189
    %p191 = scmp.ne.s32.totalorder %s182, %s183
    %p192 = scmp.eq.s32.totalorder %s25, 0
    %p193 = por %p191, %p192
    %p194 = scmp.ne.s32.totalorder %s182, %s183
    %p195 = scmp.eq.s32.totalorder %s26, 1
    %p196 = por %p194, %p195
    %p198 = scmp.ne.s32.totalorder %s183, %s197
    %p199 = scmp.eq.s32.totalorder %s26, 0
    %p200 = por %p198, %p199
    %s202 = sadd.s32 %s201, 1
    %p205 = scmp.eq.s32.totalorder %s20, 1
    %p206 = scmp.ne.s32.totalorder %s201, %s203
    %p207 = scmp.eq.s32.totalorder %s20, 0
    %p208 = por %p206, %p207
    %p209 = scmp.ne.s32.totalorder %s201, %s203
    %p210 = scmp.eq.s32.totalorder %s25, 1
    %p211 = por %p209, %p210
    %p212 = scmp.ne.s32.totalorder %s203, %s204
    %p213 = scmp.eq.s32.totalorder %s25, 0
    %p214 = por %p212, %p213
    %p215 = scmp.ne.s32.totalorder %s203, %s204
    %p216 = scmp.eq.s32.totalorder %s26, 1
    %p217 = por %p215, %p216
    %p219 = scmp.ne.s32.totalorder %s204, %s218
    %p220 = scmp.eq.s32.totalorder %s26, 0
    %p221 = por %p219, %p220
    %s223 = sadd.s32 %s222, 1
    %p226 = scmp.eq.s32.totalorder %s20, 1
    %p227 = scmp.ne.s32.totalorder %s222, %s224
    %p228 = scmp.eq.s32.totalorder %s20, 0
    %p229 = por %p227, %p228
    %p230 = scmp.ne.s32.totalorder %s222, %s224
    %p231 = scmp.eq.s32.totalorder %s25, 1
    %p232 = por %p230, %p231
    %p233 = scmp.ne.s32.totalorder %s224, %s225
    %p234 = scmp.eq.s32.totalorder %s25, 0
    %p235 = por %p233, %p234
    %p236 = scmp.ne.s32.totalorder %s224, %s225
    %p237 = scmp.eq.s32.totalorder %s26, 1
    %p238 = por %p236, %p237
    %p240 = scmp.ne.s32.totalorder %s225, %s239
    %p241 = scmp.eq.s32.totalorder %s26, 0
    %p242 = por %p240, %p241
    %s244 = sadd.s32 %s243, 1
    %p247 = scmp.eq.s32.totalorder %s20, 1
    %p248 = scmp.ne.s32.totalorder %s243, %s245
    %p249 = scmp.eq.s32.totalorder %s20, 0
    %p250 = por %p248, %p249
    %p251 = scmp.ne.s32.totalorder %s243, %s245
    %p252 = scmp.eq.s32.totalorder %s25, 1
    %p253 = por %p251, %p252
    %p254 = scmp.ne.s32.totalorder %s245, %s246
    %p255 = scmp.eq.s32.totalorder %s25, 0
    %p256 = por %p254, %p255
    %p257 = scmp.ne.s32.totalorder %s245, %s246
    %p258 = scmp.eq.s32.totalorder %s26, 1
    %p259 = por %p257, %p258
    %p261 = scmp.ne.s32.totalorder %s246, %s260
    %p262 = scmp.eq.s32.totalorder %s26, 0
    %p263 = por %p261, %p262
    %s265 = sadd.s32 %s264, 1
    %p268 = scmp.eq.s32.totalorder %s20, 1
    %p269 = scmp.ne.s32.totalorder %s264, %s266
    %p270 = scmp.eq.s32.totalorder %s20, 0
    %p271 = por %p269, %p270
    %p272 = scmp.ne.s32.totalorder %s264, %s266
    %p273 = scmp.eq.s32.totalorder %s25, 1
    %p274 = por %p272, %p273
    %p275 = scmp.ne.s32.totalorder %s266, %s267
    %p276 = scmp.eq.s32.totalorder %s25, 0
    %p277 = por %p275, %p276
    %p278 = scmp.ne.s32.totalorder %s266, %s267
    %p279 = scmp.eq.s32.totalorder %s26, 1
    %p280 = por %p278, %p279
    %p282 = scmp.ne.s32.totalorder %s267, %s281
    %p283 = scmp.eq.s32.totalorder %s26, 0
    %p284 = por %p282, %p283
    %s286 = sadd.s32 %s285, 1
    %p289 = scmp.eq.s32.totalorder %s20, 1
    %p290 = scmp.ne.s32.totalorder %s285, %s287
    %p291 = scmp.eq.s32.totalorder %s20, 0
    %p292 = por %p290, %p291
    %p293 = scmp.ne.s32.totalorder %s285, %s287
    %p294 = scmp.eq.s32.totalorder %s25, 1
    %p295 = por %p293, %p294
    %p296 = scmp.ne.s32.totalorder %s287, %s288
    %p297 = scmp.eq.s32.totalorder %s25, 0
    %p298 = por %p296, %p297
    %p299 = scmp.ne.s32.totalorder %s287, %s288
    %p300 = scmp.eq.s32.totalorder %s26, 1
    %p301 = por %p299, %p300
    %p303 = scmp.ne.s32.totalorder %s288, %s302
    %p304 = scmp.eq.s32.totalorder %s26, 0
    %p305 = por %p303, %p304
    %s307 = sadd.s32 %s306, 1
    %p310 = scmp.eq.s32.totalorder %s20, 1
    %p311 = scmp.ne.s32.totalorder %s306, %s308
    %p312 = scmp.eq.s32.totalorder %s20, 0
    %p313 = por %p311, %p312
    %p314 = scmp.ne.s32.totalorder %s306, %s308
    %p315 = scmp.eq.s32.totalorder %s25, 1
    %p316 = por %p314, %p315
    %p317 = scmp.ne.s32.totalorder %s308, %s309
    %p318 = scmp.eq.s32.totalorder %s25, 0
    %p319 = por %p317, %p318
    %p320 = scmp.ne.s32.totalorder %s308, %s309
    %p321 = scmp.eq.s32.totalorder %s26, 1
    %p322 = por %p320, %p321
    %p324 = scmp.ne.s32.totalorder %s309, %s323
    %p325 = scmp.eq.s32.totalorder %s26, 0
    %p326 = por %p324, %p325
    %s327 = ssub.s32 %s20, %s27
    %p328 = scmp.eq.s32.totalorder %s327, 0
    %s330 = sadd.s32 %s329, 1
    %s331 = scalar_select %p328, %s329, %s330
    %p334 = pneg %p328
    %p335 = scmp.eq.s32.totalorder %s20, 1
    %p336 = por %p334, %p335
    %p337 = scmp.ne.s32.totalorder %s329, %s332
    %p338 = scmp.eq.s32.totalorder %s20, 0
    %p339 = por %p337, %p338
    %p340 = scmp.ne.s32.totalorder %s329, %s332
    %p341 = scmp.eq.s32.totalorder %s25, 1
    %p342 = por %p340, %p341
    %p343 = scmp.ne.s32.totalorder %s332, %s333
    %p344 = scmp.eq.s32.totalorder %s25, 0
    %p345 = por %p343, %p344
    %p346 = scmp.ne.s32.totalorder %s332, %s333
    %p347 = scmp.eq.s32.totalorder %s26, 1
    %p348 = por %p346, %p347
    %p350 = scmp.ne.s32.totalorder %s333, %s349
    %p351 = scmp.eq.s32.totalorder %s26, 0
    %p352 = por %p350, %p351
    %p353 = scmp.le.s32.totalorder 1, %s20
    %p354 = scmp.lt.s32.totalorder %s20, 3
    %p355 = pnand %p353, %p354
    %p356 = pneg %p355
    // Predicated region
    $region9: #{gcn_forward.1} parent=5 // pred_check
      _
    $region10: #{gcn_forward.1} parent=5 // pred_check_branch
      %358 = sbr.rel (%p355) target = $region12
    $region11: #{gcn_forward.1} parent=5 // pred_region
      %s359 = ssub.s32 %s20, 1
      // Predicated region
      $region13: #{gcn_forward.1} parent=11 // pred_check
        %p360 = pneg %p41
      $region14: #{gcn_forward.1} parent=11 // pred_check_branch
        %362 = sbr.rel (%p360) target = $region16
      $region15: #{gcn_forward.1} parent=11 // pred_region
        _
      $region16: #{gcn_forward.1} parent=11 // pred_fallthru
        _
      // Predicated region
      $region17: #{gcn_forward.1} parent=11 // pred_check
        %p363 = pneg %p88
      $region18: #{gcn_forward.1} parent=11 // pred_check_branch
        %365 = sbr.rel (%p363) target = $region20
      $region19: #{gcn_forward.1} parent=11 // pred_region
        _
      $region20: #{gcn_forward.1} parent=11 // pred_fallthru
        _
      // Predicated region
      $region21: #{gcn_forward.1} parent=11 // pred_check
        %p366 = pneg %p109
      $region22: #{gcn_forward.1} parent=11 // pred_check_branch
        %368 = sbr.rel (%p366) target = $region24
      $region23: #{gcn_forward.1} parent=11 // pred_region
        _
      $region24: #{gcn_forward.1} parent=11 // pred_fallthru
        _
      // Predicated region
      $region25: #{gcn_forward.1} parent=11 // pred_check
        %p369 = pneg %p130
      $region26: #{gcn_forward.1} parent=11 // pred_check_branch
        %371 = sbr.rel (%p369) target = $region28
      $region27: #{gcn_forward.1} parent=11 // pred_region
        _
      $region28: #{gcn_forward.1} parent=11 // pred_fallthru
        _
      // Predicated region
      $region29: #{gcn_forward.1} parent=11 // pred_check
        %p372 = pneg %p151
      $region30: #{gcn_forward.1} parent=11 // pred_check_branch
        %374 = sbr.rel (%p372) target = $region32
      $region31: #{gcn_forward.1} parent=11 // pred_region
        _
      $region32: #{gcn_forward.1} parent=11 // pred_fallthru
        _
      // Predicated region
      $region33: #{gcn_forward.1} parent=11 // pred_check
        %p375 = pneg %p172
      $region34: #{gcn_forward.1} parent=11 // pred_check_branch
        %377 = sbr.rel (%p375) target = $region36
      $region35: #{gcn_forward.1} parent=11 // pred_region
        _
      $region36: #{gcn_forward.1} parent=11 // pred_fallthru
        _
      // Predicated region
      $region37: #{gcn_forward.1} parent=11 // pred_check
        %p378 = pneg %p193
      $region38: #{gcn_forward.1} parent=11 // pred_check_branch
        %380 = sbr.rel (%p378) target = $region40
      $region39: #{gcn_forward.1} parent=11 // pred_region
        _
      $region40: #{gcn_forward.1} parent=11 // pred_fallthru
        _
      // Predicated region
      $region41: #{gcn_forward.1} parent=11 // pred_check
        %p381 = pneg %p214
      $region42: #{gcn_forward.1} parent=11 // pred_check_branch
        %383 = sbr.rel (%p381) target = $region44
      $region43: #{gcn_forward.1} parent=11 // pred_region
        _
      $region44: #{gcn_forward.1} parent=11 // pred_fallthru
        _
      // Predicated region
      $region45: #{gcn_forward.1} parent=11 // pred_check
        %p384 = pneg %p235
      $region46: #{gcn_forward.1} parent=11 // pred_check_branch
        %386 = sbr.rel (%p384) target = $region48
      $region47: #{gcn_forward.1} parent=11 // pred_region
        _
      $region48: #{gcn_forward.1} parent=11 // pred_fallthru
        _
      // Predicated region
      $region49: #{gcn_forward.1} parent=11 // pred_check
        %p387 = pneg %p256
      $region50: #{gcn_forward.1} parent=11 // pred_check_branch
        %389 = sbr.rel (%p387) target = $region52
      $region51: #{gcn_forward.1} parent=11 // pred_region
        _
      $region52: #{gcn_forward.1} parent=11 // pred_fallthru
        _
      // Predicated region
      $region53: #{gcn_forward.1} parent=11 // pred_check
        %p390 = pneg %p277
      $region54: #{gcn_forward.1} parent=11 // pred_check_branch
        %392 = sbr.rel (%p390) target = $region56
      $region55: #{gcn_forward.1} parent=11 // pred_region
        _
      $region56: #{gcn_forward.1} parent=11 // pred_fallthru
        _
      // Predicated region
      $region57: #{gcn_forward.1} parent=11 // pred_check
        %p393 = pneg %p298
      $region58: #{gcn_forward.1} parent=11 // pred_check_branch
        %395 = sbr.rel (%p393) target = $region60
      $region59: #{gcn_forward.1} parent=11 // pred_region
        _
      $region60: #{gcn_forward.1} parent=11 // pred_fallthru
        _
      // Predicated region
      $region61: #{gcn_forward.1} parent=11 // pred_check
        %p396 = pneg %p319
      $region62: #{gcn_forward.1} parent=11 // pred_check_branch
        %398 = sbr.rel (%p396) target = $region64
      $region63: #{gcn_forward.1} parent=11 // pred_region
        _
      $region64: #{gcn_forward.1} parent=11 // pred_fallthru
        _
    $region12: #{gcn_forward.1} parent=5 // pred_fallthru
      _
    %p399 = scmp.lt.s32.totalorder %s20, 2
    // Predicated region
    $region65: #{gcn_forward.1} parent=5 // pred_check
      %p400 = pneg %p399
    $region66: #{gcn_forward.1} parent=5 // pred_check_branch
      %402 = sbr.rel (%p400) target = $region68
    $region67: #{gcn_forward.1} parent=5 // pred_region
      // Predicated region
      $region69: #{gcn_forward.1} parent=67 // pred_check
        %p403 = pneg %p61
      $region70: #{gcn_forward.1} parent=67 // pred_check_branch
        %405 = sbr.rel (%p403) target = $region72
      $region71: #{gcn_forward.1} parent=67 // pred_region
        %p406 = scmp.lt.s32.totalorder %s20, 1
        %s407 = scalar_select %p406, %s20, 1
        %s408 = smul.addr %s407, 4
        %s409 = scalar_lea.vmem %s1, %s408
      $region72: #{gcn_forward.1} parent=67 // pred_fallthru
        _
    $region68: #{gcn_forward.1} parent=5 // pred_fallthru
      _
    %p410 = scmp.le.s32.totalorder 1, %s20
    %p411 = scmp.lt.s32.totalorder %s20, 3
    %p412 = pnand %p410, %p411
    %p413 = pneg %p412
    // Predicated region
    $region73: #{gcn_forward.1} parent=5 // pred_check
      _
    $region74: #{gcn_forward.1} parent=5 // pred_check_branch
      %415 = sbr.rel (%p412) target = $region76
    $region75: #{gcn_forward.1} parent=5 // pred_region
      %s416 = ssub.s32 %s20, 1
      %p417 = pneg %p41
      %p418 = pneg %p38
      %p419 = scmp.lt.s32.totalorder %s25, 1
      %s420 = scalar_select %p419, %s25, 1
      %s421 = smul.addr %s420, 4
      %s422 = scalar_lea.vmem %s1, %s421
      %p423 = pneg %p67
      %p424 = pneg %p64
      %p425 = pneg %p88
      %p426 = pneg %p85
      %p427 = pneg %p109
      %p428 = pneg %p106
      %p429 = pneg %p130
      %p430 = pneg %p127
      %p431 = pneg %p151
      %p432 = pneg %p148
      %p433 = pneg %p172
      %p434 = pneg %p169
      %p435 = pneg %p193
      %p436 = pneg %p190
      %p437 = pneg %p214
      %p438 = pneg %p211
      %p439 = pneg %p235
      %p440 = pneg %p232
      %p441 = pneg %p256
      %p442 = pneg %p253
      %p443 = pneg %p277
      %p444 = pneg %p274
      %p445 = pneg %p298
      %p446 = pneg %p295
      %p447 = pneg %p319
      %p448 = pneg %p316
      %p449 = pneg %p345
      %p450 = pneg %p342
      %p451 = scmp.lt.s32.totalorder %s25, 1
      %s452 = scalar_select %p451, %s25, 1
      %s453 = smul.addr %s452, 8
      %s454 = scalar_lea.vmem %s14, %s453
      %p455 = scmp.lt.s32.totalorder %s25, 1
      %s456 = scalar_select %p455, %s25, 1
      %s457 = smul.addr %s456, 4
      %s458 = scalar_lea.vmem %s1, %s457
      %p459 = scmp.lt.s32.totalorder %s25, 1
      %s460 = scalar_select %p459, %s25, 1
      %s461 = smul.addr %s460, 8
      %s462 = scalar_lea.vmem %s14, %s461
      %v464 = vld [vmem:[%s0] sm:$0xf]
      %v465 = vld [vmem:[%s0 + $0x4] sm:$0xf]
      %v466 = vld [vmem:[%s0 + $0x8] sm:$0xf]
      %v467 = vld [vmem:[%s0 + $0xc] sm:$0xf]
      %v468 = vld [vmem:[%s0 + $0x10] sm:$0xf]
      %v469 = vld [vmem:[%s0 + $0x14] sm:$0xf]
      %v470 = vld [vmem:[%s0 + $0x18] sm:$0xf]
      %v471 = vld [vmem:[%s0 + $0x1c] sm:$0xf]
      %v472 = vld [vmem:[%s0 + $0x20] sm:$0xf]
      %v473 = vld [vmem:[%s0 + $0x24] sm:$0xf]
      %v474 = vld [vmem:[%s0 + $0x28] sm:$0xf]
      %v475 = vld [vmem:[%s0 + $0x2c] sm:$0xf]
      %v476 = vld [vmem:[%s0 + $0x30] sm:$0xf]
      %v477 = vld [vmem:[%s0 + $0x34] sm:$0xf]
      %v478 = vld [vmem:[%s0 + $0x38] sm:$0xf]
      %v479 = vld [vmem:[%s0 + $0x3c] sm:$0xf]
      %v480 = vld [vmem:[%s458] sm:$0xf]
      %v497 = vunpack.c.l.b16 %v464
      %v498 = vunpack.c.l.b16 %v465
      %v499 = vunpack.c.l.b16 %v466
      %v500 = vunpack.c.l.b16 %v467
      %v501 = vunpack.c.l.b16 %v468
      %v502 = vunpack.c.l.b16 %v469
      %v503 = vunpack.c.l.b16 %v470
      %v504 = vunpack.c.l.b16 %v471
      %v505 = vunpack.c.l.b16 %v472
      %v506 = vunpack.c.l.b16 %v473
      %v507 = vunpack.c.l.b16 %v474
      %v508 = vunpack.c.l.b16 %v475
      %v509 = vunpack.c.l.b16 %v476
      %v510 = vunpack.c.l.b16 %v477
      %v511 = vunpack.c.l.b16 %v478
      %v512 = vunpack.c.l.b16 %v479
      %v513 = vpack.c.b16 %v498, %v497
      %v514 = vpack.c.b16 %v500, %v499
      %v515 = vpack.c.b16 %v502, %v501
      %v516 = vpack.c.b16 %v504, %v503
      %v517 = vpack.c.b16 %v506, %v505
      %v518 = vpack.c.b16 %v508, %v507
      %v519 = vpack.c.b16 %v510, %v509
      %v520 = vpack.c.b16 %v512, %v511
      %529 = vmatprep.subr.bf16.mxu0 0
      %530 = vmatpush1.bf16.msra.mxu0 %v513
      %531 = vmatprep.subr.bf16.mxu0 0
      %532 = vmatpush1.bf16.msra.mxu0 %v514
      %533 = vmatprep.subr.bf16.mxu0 0
      %534 = vmatpush1.bf16.msra.mxu0 %v515
      %535 = vmatprep.subr.bf16.mxu0 0
      %536 = vmatpush1.bf16.msra.mxu0 %v516
      %537 = vmatprep.subr.bf16.mxu0 0
      %538 = vmatpush1.bf16.msra.mxu0 %v517
      %539 = vmatprep.subr.bf16.mxu0 0
      %540 = vmatpush1.bf16.msra.mxu0 %v518
      %541 = vmatprep.subr.bf16.mxu0 0
      %542 = vmatpush1.bf16.msra.mxu0 %v519
      %543 = vmatprep.subr.bf16.mxu0 0
      %544 = vmatpush1.bf16.msra.mxu0 %v520
      %545 = vmatprep.subr.bf16.mxu0 0
      %546 = vmatpush1.bf16.msra.mxu0 0
      %547 = vmatprep.subr.bf16.mxu0 0
      %548 = vmatpush1.bf16.msra.mxu0 0
      %549 = vmatprep.subr.bf16.mxu0 0
      %550 = vmatpush1.bf16.msra.mxu0 0
      %551 = vmatprep.subr.bf16.mxu0 0
      %552 = vmatpush1.bf16.msra.mxu0 0
      %553 = vmatprep.subr.bf16.mxu0 0
      %554 = vmatpush1.bf16.msra.mxu0 0
      %555 = vmatprep.subr.bf16.mxu0 0
      %556 = vmatpush1.bf16.msra.mxu0 0
      %557 = vmatprep.subr.bf16.mxu0 0
      %558 = vmatpush1.bf16.msra.mxu0 0
      %559 = vmatprep.subr.bf16.mxu0 0
      %560 = vmatpush1.bf16.msra.mxu0 0
      %561 = vmatprep.mubr.bf16.mxu0 0
      %562 = vmatmul.mubr.bf16.gmra.mrb[0].mxu0 %v480
      %v563 = vpop.f32.mrb[0].mxu0
      %v564 = vadd.f32 0.0, %v563
      %v565 = vpop.f32.mrb[0].mxu0
      %v566 = vpop.f32.mrb[0].mxu0
      %v567 = vpop.f32.mrb[0].mxu0
      %568 = vdwg.mxu0
      %v569 = vld [vmem:[%s2] sm:$0xf]
      %v570 = vld [vmem:[%s2 + $0x4] sm:$0xf]
      %v571 = vpack.c.bf16 %v564, %v564
      %v572 = vld [vmem:[%s3] sm:$0xff]
      %v573 = vld [vmem:[%s3 + $0x8] sm:$0xff]
      %575 = vset.pattern.permute.xlu0 0
      %576 = vperm.xlu0 %575, %v572
      %v577 = vpop.permute.xlu0 %576
      %580 = vset.pattern.permute.xlu0 0
      %581 = vperm.xlu0 %580, %v573
      %v582 = vpop.permute.xlu0 %581
      %v586 = vunpack.c.l.b16 %v569
      %v587 = vunpack.c.l.b16 %v570
      %v588 = vpack.c.b16 %v587, %v586
      %vm589 = vcmask 64512
      %v591 = vsel %vm589, %v588, 0
      %vm593 = vcmask 1043456
      %v595 = vsel %vm593, %v571, 0
      %597 = vmatprep.subr.bf16.mxu0 0
      %598 = vmatpush1.bf16.msra.mxu0 %v595
      %599 = vmatprep.subr.bf16.mxu0 0
      %600 = vmatpush1.bf16.msra.mxu0 0
      %601 = vmatprep.subr.bf16.mxu0 0
      %602 = vmatpush1.bf16.msra.mxu0 0
      %603 = vmatprep.subr.bf16.mxu0 0
      %604 = vmatpush1.bf16.msra.mxu0 0
      %605 = vmatprep.subr.bf16.mxu0 0
      %606 = vmatpush1.bf16.msra.mxu0 0
      %607 = vmatprep.subr.bf16.mxu0 0
      %608 = vmatpush1.bf16.msra.mxu0 0
      %609 = vmatprep.subr.bf16.mxu0 0
      %610 = vmatpush1.bf16.msra.mxu0 0
      %611 = vmatprep.subr.bf16.mxu0 0
      %612 = vmatpush1.bf16.msra.mxu0 0
      %613 = vmatprep.subr.bf16.mxu0 0
      %614 = vmatpush1.bf16.msra.mxu0 0
      %615 = vmatprep.subr.bf16.mxu0 0
      %616 = vmatpush1.bf16.msra.mxu0 0
      %617 = vmatprep.subr.bf16.mxu0 0
      %618 = vmatpush1.bf16.msra.mxu0 0
      %619 = vmatprep.subr.bf16.mxu0 0
      %620 = vmatpush1.bf16.msra.mxu0 0
      %621 = vmatprep.subr.bf16.mxu0 0
      %622 = vmatpush1.bf16.msra.mxu0 0
      %623 = vmatprep.subr.bf16.mxu0 0
      %624 = vmatpush1.bf16.msra.mxu0 0
      %625 = vmatprep.subr.bf16.mxu0 0
      %626 = vmatpush1.bf16.msra.mxu0 0
      %627 = vmatprep.subr.bf16.mxu0 0
      %628 = vmatpush1.bf16.msra.mxu0 0
      %629 = vmatprep.mubr.bf16.mxu0 0
      %630 = vmatmul.mubr.bf16.gmra.mrb[0].mxu0 %v591
      %v631 = vpop.f32.mrb[0].mxu0
      %v632 = vadd.f32 %v577, %v631
      %v633 = vpop.f32.mrb[0].mxu0
      %v634 = vpop.f32.mrb[0].mxu0
      %v635 = vadd.f32 %v582, %v634
      %v636 = vpop.f32.mrb[0].mxu0
      %637 = vdwg.mxu0
      %v638 = vmax.f32 %v632, 0.0
      %v639 = vmax.f32 %v635, 0.0
      %v640 = vpack.c.bf16 %v639, %v638
      %641 = vst [vmem:[#allocation2] sm:$0xff] %v640
      %v642 = vld [vmem:[%s4] sm:$0xf]
      %v643 = vld [vmem:[%s4 + $0x4] sm:$0xf]
      %v646 = vunpack.c.l.b16 %v642
      %v647 = vunpack.c.l.b16 %v643
      %v648 = vpack.c.b16 %v647, %v646
      %vm649 = vcmask 130048
      %v651 = vsel %vm649, %v648, 0
      %653 = vmatprep.subr.bf16.mxu0 0
      %654 = vmatpush1.bf16.msra.mxu0 %v640
      %655 = vmatprep.subr.bf16.mxu0 0
      %656 = vmatpush1.bf16.msra.mxu0 0
      %657 = vmatprep.subr.bf16.mxu0 0
      %658 = vmatpush1.bf16.msra.mxu0 0
      %659 = vmatprep.subr.bf16.mxu0 0
      %660 = vmatpush1.bf16.msra.mxu0 0
      %661 = vmatprep.subr.bf16.mxu0 0
      %662 = vmatpush1.bf16.msra.mxu0 0
      %663 = vmatprep.subr.bf16.mxu0 0
      %664 = vmatpush1.bf16.msra.mxu0 0
      %665 = vmatprep.subr.bf16.mxu0 0
      %666 = vmatpush1.bf16.msra.mxu0 0
      %667 = vmatprep.subr.bf16.mxu0 0
      %668 = vmatpush1.bf16.msra.mxu0 0
      %669 = vmatprep.subr.bf16.mxu0 0
      %670 = vmatpush1.bf16.msra.mxu0 0
      %671 = vmatprep.subr.bf16.mxu0 0
      %672 = vmatpush1.bf16.msra.mxu0 0
      %673 = vmatprep.subr.bf16.mxu0 0
      %674 = vmatpush1.bf16.msra.mxu0 0
      %675 = vmatprep.subr.bf16.mxu0 0
      %676 = vmatpush1.bf16.msra.mxu0 0
      %677 = vmatprep.subr.bf16.mxu0 0
      %678 = vmatpush1.bf16.msra.mxu0 0
      %679 = vmatprep.subr.bf16.mxu0 0
      %680 = vmatpush1.bf16.msra.mxu0 0
      %681 = vmatprep.subr.bf16.mxu0 0
      %682 = vmatpush1.bf16.msra.mxu0 0
      %683 = vmatprep.subr.bf16.mxu0 0
      %684 = vmatpush1.bf16.msra.mxu0 0
      %685 = vmatprep.mubr.bf16.mxu0 0
      %686 = vmatmul.mubr.bf16.gmra.mrb[0].mxu0 %v651
      %v687 = vpop.f32.mrb[0].mxu0
      %v688 = vadd.f32 0.0, %v687
      %v689 = vpop.f32.mrb[0].mxu0
      %v690 = vpop.f32.mrb[0].mxu0
      %v691 = vadd.f32 0.0, %v690
      %v692 = vpop.f32.mrb[0].mxu0
      %693 = vdwg.mxu0
      %v694 = vpack.c.bf16 %v691, %v688
      %v695 = vld [vmem:[%s5] sm:$0xff]
      %v696 = vld [vmem:[%s5 + $0x8] sm:$0xff]
      %698 = vset.pattern.permute.xlu0 0
      %699 = vperm.xlu0 %698, %v695
      %v700 = vpop.permute.xlu0 %699
      %703 = vset.pattern.permute.xlu0 0
      %704 = vperm.xlu0 %703, %v696
      %v705 = vpop.permute.xlu0 %704
      %707 = vmatprep.subr.bf16.mxu0 0
      %708 = vmatpush1.bf16.msra.mxu0 %v513
      %709 = vmatprep.subr.bf16.mxu0 0
      %710 = vmatpush1.bf16.msra.mxu0 %v514
      %711 = vmatprep.subr.bf16.mxu0 0
      %712 = vmatpush1.bf16.msra.mxu0 %v515
      %713 = vmatprep.subr.bf16.mxu0 0
      %714 = vmatpush1.bf16.msra.mxu0 %v516
      %715 = vmatprep.subr.bf16.mxu0 0
      %716 = vmatpush1.bf16.msra.mxu0 %v517
      %717 = vmatprep.subr.bf16.mxu0 0
      %718 = vmatpush1.bf16.msra.mxu0 %v518
      %719 = vmatprep.subr.bf16.mxu0 0
      %720 = vmatpush1.bf16.msra.mxu0 %v519
      %721 = vmatprep.subr.bf16.mxu0 0
      %722 = vmatpush1.bf16.msra.mxu0 %v520
      %723 = vmatprep.subr.bf16.mxu0 0
      %724 = vmatpush1.bf16.msra.mxu0 0
      %725 = vmatprep.subr.bf16.mxu0 0
      %726 = vmatpush1.bf16.msra.mxu0 0
      %727 = vmatprep.subr.bf16.mxu0 0
      %728 = vmatpush1.bf16.msra.mxu0 0
      %729 = vmatprep.subr.bf16.mxu0 0
      %730 = vmatpush1.bf16.msra.mxu0 0
      %731 = vmatprep.subr.bf16.mxu0 0
      %732 = vmatpush1.bf16.msra.mxu0 0
      %733 = vmatprep.subr.bf16.mxu0 0
      %734 = vmatpush1.bf16.msra.mxu0 0
      %735 = vmatprep.subr.bf16.mxu0 0
      %736 = vmatpush1.bf16.msra.mxu0 0
      %737 = vmatprep.subr.bf16.mxu0 0
      %738 = vmatpush1.bf16.msra.mxu0 0
      %739 = vmatprep.mubr.bf16.mxu0 0
      %740 = vmatmul.mubr.bf16.gmra.mrb[0].mxu0 %v694
      %v741 = vpop.f32.mrb[0].mxu0
      %v742 = vadd.f32 %v700, %v741
      %v743 = vpop.f32.mrb[0].mxu0
      %v744 = vpop.f32.mrb[0].mxu0
      %v745 = vadd.f32 %v705, %v744
      %v746 = vpop.f32.mrb[0].mxu0
      %747 = vdwg.mxu0
      %v748 = vmax.f32 %v742, 0.0
      %v749 = vmax.f32 %v745, 0.0
      %v750 = vadd.f32 %v748, %v638
      %v751 = vadd.f32 %v749, %v639
      %v752 = vpack.c.bf16 %v751, %v750
      %753 = vst [vmem:[#allocation2 + $0x8] sm:$0xff] %v752
      %s754 = scalar_lea.vmem %s4, 8
      %v755 = vld [vmem:[%s754] sm:$0xf]
      %v756 = vld [vmem:[%s754 + $0x4] sm:$0xf]
      %v759 = vunpack.c.l.b16 %v755
      %v760 = vunpack.c.l.b16 %v756
      %v761 = vpack.c.b16 %v760, %v759
      %v763 = vsel %vm649, %v761, 0
      %765 = vmatprep.subr.bf16.mxu0 0
      %766 = vmatpush1.bf16.msra.mxu0 %v752
      %767 = vmatprep.subr.bf16.mxu0 0
      %768 = vmatpush1.bf16.msra.mxu0 0
      %769 = vmatprep.subr.bf16.mxu0 0
      %770 = vmatpush1.bf16.msra.mxu0 0
      %771 = vmatprep.subr.bf16.mxu0 0
      %772 = vmatpush1.bf16.msra.mxu0 0
      %773 = vmatprep.subr.bf16.mxu0 0
      %774 = vmatpush1.bf16.msra.mxu0 0
      %775 = vmatprep.subr.bf16.mxu0 0
      %776 = vmatpush1.bf16.msra.mxu0 0
      %777 = vmatprep.subr.bf16.mxu0 0
      %778 = vmatpush1.bf16.msra.mxu0 0
      %779 = vmatprep.subr.bf16.mxu0 0
      %780 = vmatpush1.bf16.msra.mxu0 0
      %781 = vmatprep.subr.bf16.mxu0 0
      %782 = vmatpush1.bf16.msra.mxu0 0
      %783 = vmatprep.subr.bf16.mxu0 0
      %784 = vmatpush1.bf16.msra.mxu0 0
      %785 = vmatprep.subr.bf16.mxu0 0
      %786 = vmatpush1.bf16.msra.mxu0 0
      %787 = vmatprep.subr.bf16.mxu0 0
      %788 = vmatpush1.bf16.msra.mxu0 0
      %789 = vmatprep.subr.bf16.mxu0 0
      %790 = vmatpush1.bf16.msra.mxu0 0
      %791 = vmatprep.subr.bf16.mxu0 0
      %792 = vmatpush1.bf16.msra.mxu0 0
      %793 = vmatprep.subr.bf16.mxu0 0
      %794 = vmatpush1.bf16.msra.mxu0 0
      %795 = vmatprep.subr.bf16.mxu0 0
      %796 = vmatpush1.bf16.msra.mxu0 0
      %797 = vmatprep.mubr.bf16.mxu0 0
      %798 = vmatmul.mubr.bf16.gmra.mrb[0].mxu0 %v763
      %v799 = vpop.f32.mrb[0].mxu0
      %v800 = vadd.f32 0.0, %v799
      %v801 = vpop.f32.mrb[0].mxu0
      %v802 = vpop.f32.mrb[0].mxu0
      %v803 = vadd.f32 0.0, %v802
      %v804 = vpop.f32.mrb[0].mxu0
      %805 = vdwg.mxu0
      %v806 = vpack.c.bf16 %v803, %v800
      %s807 = scalar_lea.vmem %s5, 16
      %v808 = vld [vmem:[%s807] sm:$0xff]
      %v809 = vld [vmem:[%s807 + $0x8] sm:$0xff]
      %811 = vset.pattern.permute.xlu0 0
      %812 = vperm.xlu0 %811, %v808
      %v813 = vpop.permute.xlu0 %812
      %816 = vset.pattern.permute.xlu0 0
      %817 = vperm.xlu0 %816, %v809
      %v818 = vpop.permute.xlu0 %817
      %820 = vmatprep.subr.bf16.mxu0 0
      %821 = vmatpush1.bf16.msra.mxu0 %v513
      %822 = vmatprep.subr.bf16.mxu0 0
      %823 = vmatpush1.bf16.msra.mxu0 %v514
      %824 = vmatprep.subr.bf16.mxu0 0
      %825 = vmatpush1.bf16.msra.mxu0 %v515
      %826 = vmatprep.subr.bf16.mxu0 0
      %827 = vmatpush1.bf16.msra.mxu0 %v516
      %828 = vmatprep.subr.bf16.mxu0 0
      %829 = vmatpush1.bf16.msra.mxu0 %v517
      %830 = vmatprep.subr.bf16.mxu0 0
      %831 = vmatpush1.bf16.msra.mxu0 %v518
      %832 = vmatprep.subr.bf16.mxu0 0
      %833 = vmatpush1.bf16.msra.mxu0 %v519
      %834 = vmatprep.subr.bf16.mxu0 0
      %835 = vmatpush1.bf16.msra.mxu0 %v520
      %836 = vmatprep.subr.bf16.mxu0 0
      %837 = vmatpush1.bf16.msra.mxu0 0
      %838 = vmatprep.subr.bf16.mxu0 0
      %839 = vmatpush1.bf16.msra.mxu0 0
      %840 = vmatprep.subr.bf16.mxu0 0
      %841 = vmatpush1.bf16.msra.mxu0 0
      %842 = vmatprep.subr.bf16.mxu0 0
      %843 = vmatpush1.bf16.msra.mxu0 0
      %844 = vmatprep.subr.bf16.mxu0 0
      %845 = vmatpush1.bf16.msra.mxu0 0
      %846 = vmatprep.subr.bf16.mxu0 0
      %847 = vmatpush1.bf16.msra.mxu0 0
      %848 = vmatprep.subr.bf16.mxu0 0
      %849 = vmatpush1.bf16.msra.mxu0 0
      %850 = vmatprep.subr.bf16.mxu0 0
      %851 = vmatpush1.bf16.msra.mxu0 0
      %852 = vmatprep.mubr.bf16.mxu0 0
      %853 = vmatmul.mubr.bf16.gmra.mrb[0].mxu0 %v806
      %v854 = vpop.f32.mrb[0].mxu0
      %v855 = vadd.f32 %v813, %v854
      %v856 = vpop.f32.mrb[0].mxu0
      %v857 = vpop.f32.mrb[0].mxu0
      %v858 = vadd.f32 %v818, %v857
      %v859 = vpop.f32.mrb[0].mxu0
      %860 = vdwg.mxu0
      %v861 = vmax.f32 %v855, 0.0
      %v862 = vmax.f32 %v858, 0.0
      %v863 = vadd.f32 %v861, %v750
      %v864 = vadd.f32 %v862, %v751
      %v865 = vpack.c.bf16 %v864, %v863
      %866 = vst [vmem:[#allocation2 + $0x10] sm:$0xff] %v865
      %s867 = scalar_lea.vmem %s4, 16
      %v868 = vld [vmem:[%s867] sm:$0xf]
      %v869 = vld [vmem:[%s867 + $0x4] sm:$0xf]
      %v872 = vunpack.c.l.b16 %v868
      %v873 = vunpack.c.l.b16 %v869
      %v874 = vpack.c.b16 %v873, %v872
      %v876 = vsel %vm649, %v874, 0
      %878 = vmatprep.subr.bf16.mxu0 0
      %879 = vmatpush1.bf16.msra.mxu0 %v865
      %880 = vmatprep.subr.bf16.mxu0 0
      %881 = vmatpush1.bf16.msra.mxu0 0
      %882 = vmatprep.subr.bf16.mxu0 0
      %883 = vmatpush1.bf16.msra.mxu0 0
      %884 = vmatprep.subr.bf16.mxu0 0
      %885 = vmatpush1.bf16.msra.mxu0 0
      %886 = vmatprep.subr.bf16.mxu0 0
      %887 = vmatpush1.bf16.msra.mxu0 0
      %888 = vmatprep.subr.bf16.mxu0 0
      %889 = vmatpush1.bf16.msra.mxu0 0
      %890 = vmatprep.subr.bf16.mxu0 0
      %891 = vmatpush1.bf16.msra.mxu0 0
      %892 = vmatprep.subr.bf16.mxu0 0
      %893 = vmatpush1.bf16.msra.mxu0 0
      %894 = vmatprep.subr.bf16.mxu0 0
      %895 = vmatpush1.bf16.msra.mxu0 0
      %896 = vmatprep.subr.bf16.mxu0 0
      %897 = vmatpush1.bf16.msra.mxu0 0
      %898 = vmatprep.subr.bf16.mxu0 0
      %899 = vmatpush1.bf16.msra.mxu0 0
      %900 = vmatprep.subr.bf16.mxu0 0
      %901 = vmatpush1.bf16.msra.mxu0 0
      %902 = vmatprep.subr.bf16.mxu0 0
      %903 = vmatpush1.bf16.msra.mxu0 0
      %904 = vmatprep.subr.bf16.mxu0 0
      %905 = vmatpush1.bf16.msra.mxu0 0
      %906 = vmatprep.subr.bf16.mxu0 0
      %907 = vmatpush1.bf16.msra.mxu0 0
      %908 = vmatprep.subr.bf16.mxu0 0
      %909 = vmatpush1.bf16.msra.mxu0 0
      %910 = vmatprep.mubr.bf16.mxu0 0
      %911 = vmatmul.mubr.bf16.gmra.mrb[0].mxu0 %v876
      %v912 = vpop.f32.mrb[0].mxu0
      %v913 = vadd.f32 0.0, %v912
      %v914 = vpop.f32.mrb[0].mxu0
      %v915 = vpop.f32.mrb[0].mxu0
      %v916 = vadd.f32 0.0, %v915
      %v917 = vpop.f32.mrb[0].mxu0
      %918 = vdwg.mxu0
      %v919 = vpack.c.bf16 %v916, %v913
      %s920 = scalar_lea.vmem %s5, 32
      %v921 = vld [vmem:[%s920] sm:$0xff]
      %v922 = vld [vmem:[%s920 + $0x8] sm:$0xff]
      %924 = vset.pattern.permute.xlu0 0
      %925 = vperm.xlu0 %924, %v921
      %v926 = vpop.permute.xlu0 %925
      %929 = vset.pattern.permute.xlu0 0
      %930 = vperm.xlu0 %929, %v922
      %v931 = vpop.permute.xlu0 %930
      %933 = vmatprep.subr.bf16.mxu0 0
      %934 = vmatpush1.bf16.msra.mxu0 %v513
      %935 = vmatprep.subr.bf16.mxu0 0
      %936 = vmatpush1.bf16.msra.mxu0 %v514
      %937 = vmatprep.subr.bf16.mxu0 0
      %938 = vmatpush1.bf16.msra.mxu0 %v515
      %939 = vmatprep.subr.bf16.mxu0 0
      %940 = vmatpush1.bf16.msra.mxu0 %v516
      %941 = vmatprep.subr.bf16.mxu0 0
      %942 = vmatpush1.bf16.msra.mxu0 %v517
      %943 = vmatprep.subr.bf16.mxu0 0
      %944 = vmatpush1.bf16.msra.mxu0 %v518
      %945 = vmatprep.subr.bf16.mxu0 0
      %946 = vmatpush1.bf16.msra.mxu0 %v519
      %947 = vmatprep.subr.bf16.mxu0 0
      %948 = vmatpush1.bf16.msra.mxu0 %v520
      %949 = vmatprep.subr.bf16.mxu0 0
      %950 = vmatpush1.bf16.msra.mxu0 0
      %951 = vmatprep.subr.bf16.mxu0 0
      %952 = vmatpush1.bf16.msra.mxu0 0
      %953 = vmatprep.subr.bf16.mxu0 0
      %954 = vmatpush1.bf16.msra.mxu0 0
      %955 = vmatprep.subr.bf16.mxu0 0
      %956 = vmatpush1.bf16.msra.mxu0 0
      %957 = vmatprep.subr.bf16.mxu0 0
      %958 = vmatpush1.bf16.msra.mxu0 0
      %959 = vmatprep.subr.bf16.mxu0 0
      %960 = vmatpush1.bf16.msra.mxu0 0
      %961 = vmatprep.subr.bf16.mxu0 0
      %962 = vmatpush1.bf16.msra.mxu0 0
      %963 = vmatprep.subr.bf16.mxu0 0
      %964 = vmatpush1.bf16.msra.mxu0 0
      %965 = vmatprep.mubr.bf16.mxu0 0
      %966 = vmatmul.mubr.bf16.gmra.mrb[0].mxu0 %v919
      %v967 = vpop.f32.mrb[0].mxu0
      %v968 = vadd.f32 %v926, %v967
      %v969 = vpop.f32.mrb[0].mxu0
      %v970 = vpop.f32.mrb[0].mxu0
      %v971 = vadd.f32 %v931, %v970
      %v972 = vpop.f32.mrb[0].mxu0
      %973 = vdwg.mxu0
      %v974 = vmax.f32 %v968, 0.0
      %v975 = vmax.f32 %v971, 0.0
      %v976 = vadd.f32 %v974, %v863
      %v977 = vadd.f32 %v975, %v864
      %v978 = vpack.c.bf16 %v977, %v976
      %979 = vst [vmem:[#allocation2 + $0x18] sm:$0xff] %v978
      %s980 = scalar_lea.vmem %s4, 24
      %v981 = vld [vmem:[%s980] sm:$0xf]
      %v982 = vld [vmem:[%s980 + $0x4] sm:$0xf]
      %v985 = vunpack.c.l.b16 %v981
      %v986 = vunpack.c.l.b16 %v982
      %v987 = vpack.c.b16 %v986, %v985
      %v989 = vsel %vm649, %v987, 0
      %991 = vmatprep.subr.bf16.mxu0 0
      %992 = vmatpush1.bf16.msra.mxu0 %v978
      %993 = vmatprep.subr.bf16.mxu0 0
      %994 = vmatpush1.bf16.msra.mxu0 0
      %995 = vmatprep.subr.bf16.mxu0 0
      %996 = vmatpush1.bf16.msra.mxu0 0
      %997 = vmatprep.subr.bf16.mxu0 0
      %998 = vmatpush1.bf16.msra.mxu0 0
      %999 = vmatprep.subr.bf16.mxu0 0
      %1000 = vmatpush1.bf16.msra.mxu0 0
      %1001 = vmatprep.subr.bf16.mxu0 0
      %1002 = vmatpush1.bf16.msra.mxu0 0
      %1003 = vmatprep.subr.bf16.mxu0 0
      %1004 = vmatpush1.bf16.msra.mxu0 0
      %1005 = vmatprep.subr.bf16.mxu0 0
      %1006 = vmatpush1.bf16.msra.mxu0 0
      %1007 = vmatprep.subr.bf16.mxu0 0
      %1008 = vmatpush1.bf16.msra.mxu0 0
      %1009 = vmatprep.subr.bf16.mxu0 0
      %1010 = vmatpush1.bf16.msra.mxu0 0
      %1011 = vmatprep.subr.bf16.mxu0 0
      %1012 = vmatpush1.bf16.msra.mxu0 0
      %1013 = vmatprep.subr.bf16.mxu0 0
      %1014 = vmatpush1.bf16.msra.mxu0 0
      %1015 = vmatprep.subr.bf16.mxu0 0
      %1016 = vmatpush1.bf16.msra.mxu0 0
      %1017 = vmatprep.subr.bf16.mxu0 0
      %1018 = vmatpush1.bf16.msra.mxu0 0
      %1019 = vmatprep.subr.bf16.mxu0 0
      %1020 = vmatpush1.bf16.msra.mxu0 0
      %1021 = vmatprep.subr.bf16.mxu0 0
      %1022 = vmatpush1.bf16.msra.mxu0 0
      %1023 = vmatprep.mubr.bf16.mxu0 0
      %1024 = vmatmul.mubr.bf16.gmra.mrb[0].mxu0 %v989
      %v1025 = vpop.f32.mrb[0].mxu0
      %v1026 = vadd.f32 0.0, %v1025
      %v1027 = vpop.f32.mrb[0].mxu0
      %v1028 = vpop.f32.mrb[0].mxu0
      %v1029 = vadd.f32 0.0, %v1028
      %v1030 = vpop.f32.mrb[0].mxu0
      %1031 = vdwg.mxu0
      %v1032 = vpack.c.bf16 %v1029, %v1026
      %s1033 = scalar_lea.vmem %s5, 48
      %v1034 = vld [vmem:[%s1033] sm:$0xff]
      %v1035 = vld [vmem:[%s1033 + $0x8] sm:$0xff]
      %1037 = vset.pattern.permute.xlu0 0
      %1038 = vperm.xlu0 %1037, %v1034
      %v1039 = vpop.permute.xlu0 %1038
      %1042 = vset.pattern.permute.xlu0 0
      %1043 = vperm.xlu0 %1042, %v1035
      %v1044 = vpop.permute.xlu0 %1043
      %1046 = vmatprep.subr.bf16.mxu0 0
      %1047 = vmatpush1.bf16.msra.mxu0 %v513
      %1048 = vmatprep.subr.bf16.mxu0 0
      %1049 = vmatpush1.bf16.msra.mxu0 %v514
      %1050 = vmatprep.subr.bf16.mxu0 0
      %1051 = vmatpush1.bf16.msra.mxu0 %v515
      %1052 = vmatprep.subr.bf16.mxu0 0
      %1053 = vmatpush1.bf16.msra.mxu0 %v516
      %1054 = vmatprep.subr.bf16.mxu0 0
      %1055 = vmatpush1.bf16.msra.mxu0 %v517
      %1056 = vmatprep.subr.bf16.mxu0 0
      %1057 = vmatpush1.bf16.msra.mxu0 %v518
      %1058 = vmatprep.subr.bf16.mxu0 0
      %1059 = vmatpush1.bf16.msra.mxu0 %v519
      %1060 = vmatprep.subr.bf16.mxu0 0
      %1061 = vmatpush1.bf16.msra.mxu0 %v520
      %1062 = vmatprep.subr.bf16.mxu0 0
      %1063 = vmatpush1.bf16.msra.mxu0 0
      %1064 = vmatprep.subr.bf16.mxu0 0
      %1065 = vmatpush1.bf16.msra.mxu0 0
      %1066 = vmatprep.subr.bf16.mxu0 0
      %1067 = vmatpush1.bf16.msra.mxu0 0
      %1068 = vmatprep.subr.bf16.mxu0 0
      %1069 = vmatpush1.bf16.msra.mxu0 0
      %1070 = vmatprep.subr.bf16.mxu0 0
      %1071 = vmatpush1.bf16.msra.mxu0 0
      %1072 = vmatprep.subr.bf16.mxu0 0
      %1073 = vmatpush1.bf16.msra.mxu0 0
      %1074 = vmatprep.subr.bf16.mxu0 0
      %1075 = vmatpush1.bf16.msra.mxu0 0
      %1076 = vmatprep.subr.bf16.mxu0 0
      %1077 = vmatpush1.bf16.msra.mxu0 0
      %1078 = vmatprep.mubr.bf16.mxu0 0
      %1079 = vmatmul.mubr.bf16.gmra.mrb[0].mxu0 %v1032
      %v1080 = vpop.f32.mrb[0].mxu0
      %v1081 = vadd.f32 %v1039, %v1080
      %v1082 = vpop.f32.mrb[0].mxu0
      %v1083 = vpop.f32.mrb[0].mxu0
      %v1084 = vadd.f32 %v1044, %v1083
      %v1085 = vpop.f32.mrb[0].mxu0
      %1086 = vdwg.mxu0
      %v1087 = vmax.f32 %v1081, 0.0
      %v1088 = vmax.f32 %v1084, 0.0
      %v1089 = vadd.f32 %v1087, %v976
      %v1090 = vadd.f32 %v1088, %v977
      %v1091 = vpack.c.bf16 %v1090, %v1089
      %1092 = vst [vmem:[#allocation2 + $0x20] sm:$0xff] %v1091
      %v1093 = vld [vmem:[#allocation2] sm:$0xff]
      %v1094 = vld [vmem:[#allocation2 + $0x8] sm:$0xff]
      %v1095 = vld [vmem:[#allocation2 + $0x10] sm:$0xff]
      %v1096 = vld [vmem:[#allocation2 + $0x18] sm:$0xff]
      %v1097 = vld [vmem:[#allocation2 + $0x20] sm:$0xff]
      %v1098 = vld [vmem:[%s6] sm:$0xf]
      %v1099 = vld [vmem:[%s6 + $0x4] sm:$0xf]
      %v1100 = vld [vmem:[%s6 + $0x8] sm:$0xf]
      %v1101 = vld [vmem:[%s6 + $0xc] sm:$0xf]
      %v1102 = vld [vmem:[%s6 + $0x10] sm:$0xf]
      %v1103 = vld [vmem:[%s6 + $0x14] sm:$0xf]
      %v1104 = vld [vmem:[%s6 + $0x18] sm:$0xf]
      %v1105 = vld [vmem:[%s6 + $0x1c] sm:$0xf]
      %v1106 = vld [vmem:[%s6 + $0x20] sm:$0xf]
      %v1107 = vld [vmem:[%s6 + $0x24] sm:$0xf]
      %v1108 = vld [vmem:[%s6 + $0x28] sm:$0xf]
      %v1109 = vld [vmem:[%s6 + $0x2c] sm:$0xf]
      %v1110 = vld [vmem:[%s6 + $0x30] sm:$0xf]
      %v1111 = vld [vmem:[%s6 + $0x34] sm:$0xf]
      %v1112 = vld [vmem:[%s6 + $0x38] sm:$0xf]
      %v1113 = vld [vmem:[%s6 + $0x3c] sm:$0xf]
      %v1114 = vld [vmem:[%s6 + $0x40] sm:$0xf]
      %v1115 = vld [vmem:[%s6 + $0x44] sm:$0xf]
      %v1116 = vld [vmem:[%s6 + $0x48] sm:$0xf]
      %v1117 = vld [vmem:[%s6 + $0x4c] sm:$0xf]
      %v1118 = vld [vmem:[%s6 + $0x50] sm:$0xf]
      %v1119 = vld [vmem:[%s6 + $0x54] sm:$0xf]
      %v1120 = vld [vmem:[%s6 + $0x58] sm:$0xf]
      %v1121 = vld [vmem:[%s6 + $0x5c] sm:$0xf]
      %v1122 = vld [vmem:[%s6 + $0x60] sm:$0xf]
      %v1123 = vld [vmem:[%s6 + $0x64] sm:$0xf]
      %v1124 = vld [vmem:[%s6 + $0x68] sm:$0xf]
      %v1125 = vld [vmem:[%s6 + $0x6c] sm:$0xf]
      %v1126 = vld [vmem:[%s6 + $0x70] sm:$0xf]
      %v1127 = vld [vmem:[%s6 + $0x74] sm:$0xf]
      %v1128 = vld [vmem:[%s6 + $0x78] sm:$0xf]
      %v1129 = vld [vmem:[%s6 + $0x7c] sm:$0xf]
      %v1130 = vld [vmem:[%s6 + $0x80] sm:$0xf]
      %v1131 = vld [vmem:[%s6 + $0x84] sm:$0xf]
      %v1132 = vld [vmem:[%s6 + $0x88] sm:$0xf]
      %v1133 = vld [vmem:[%s6 + $0x8c] sm:$0xf]
      %v1134 = vld [vmem:[%s6 + $0x90] sm:$0xf]
      %v1135 = vld [vmem:[%s6 + $0x94] sm:$0xf]
      %v1136 = vld [vmem:[%s6 + $0x98] sm:$0xf]
      %v1137 = vld [vmem:[%s6 + $0x9c] sm:$0xf]
      %v1138 = vld [vmem:[%s6 + $0xa0] sm:$0xf]
      %v1139 = vld [vmem:[%s6 + $0xa4] sm:$0xf]
      %v1140 = vld [vmem:[%s6 + $0xa8] sm:$0xf]
      %v1141 = vld [vmem:[%s6 + $0xac] sm:$0xf]
      %v1142 = vld [vmem:[%s6 + $0xb0] sm:$0xf]
      %v1143 = vld [vmem:[%s6 + $0xb4] sm:$0xf]
      %v1144 = vld [vmem:[%s6 + $0xb8] sm:$0xf]
      %v1145 = vld [vmem:[%s6 + $0xbc] sm:$0xf]
      %v1146 = vld [vmem:[%s6 + $0xc0] sm:$0xf]
      %v1147 = vld [vmem:[%s6 + $0xc4] sm:$0xf]
      %v1148 = vld [vmem:[%s6 + $0xc8] sm:$0xf]
      %v1149 = vld [vmem:[%s6 + $0xcc] sm:$0xf]
      %v1150 = vld [vmem:[%s6 + $0xd0] sm:$0xf]
      %v1151 = vld [vmem:[%s6 + $0xd4] sm:$0xf]
      %v1152 = vld [vmem:[%s6 + $0xd8] sm:$0xf]
      %v1153 = vld [vmem:[%s6 + $0xdc] sm:$0xf]
      %v1154 = vld [vmem:[%s6 + $0xe0] sm:$0xf]
      %v1155 = vld [vmem:[%s6 + $0xe4] sm:$0xf]
      %v1156 = vld [vmem:[%s6 + $0xe8] sm:$0xf]
      %v1157 = vld [vmem:[%s6 + $0xec] sm:$0xf]
      %v1158 = vld [vmem:[%s6 + $0xf0] sm:$0xf]
      %v1159 = vld [vmem:[%s6 + $0xf4] sm:$0xf]
      %v1160 = vld [vmem:[%s6 + $0xf8] sm:$0xf]
      %v1161 = vld [vmem:[%s6 + $0xfc] sm:$0xf]
      %v1226 = vunpack.c.l.b16 %v1098
      %v1227 = vunpack.c.l.b16 %v1099
      %v1228 = vunpack.c.l.b16 %v1100
      %v1229 = vunpack.c.l.b16 %v1101
      %v1230 = vunpack.c.l.b16 %v1102
      %v1231 = vunpack.c.l.b16 %v1103
      %v1232 = vunpack.c.l.b16 %v1104
      %v1233 = vunpack.c.l.b16 %v1105
      %v1234 = vunpack.c.l.b16 %v1106
      %v1235 = vunpack.c.l.b16 %v1107
      %v1236 = vunpack.c.l.b16 %v1108
      %v1237 = vunpack.c.l.b16 %v1109
      %v1238 = vunpack.c.l.b16 %v1110
      %v1239 = vunpack.c.l.b16 %v1111
      %v1240 = vunpack.c.l.b16 %v1112
      %v1241 = vunpack.c.l.b16 %v1113
      %v1242 = vunpack.c.l.b16 %v1114
      %v1243 = vunpack.c.l.b16 %v1115
      %v1244 = vunpack.c.l.b16 %v1116
      %v1245 = vunpack.c.l.b16 %v1117
      %v1246 = vunpack.c.l.b16 %v1118
      %v1247 = vunpack.c.l.b16 %v1119
      %v1248 = vunpack.c.l.b16 %v1120
      %v1249 = vunpack.c.l.b16 %v1121
      %v1250 = vunpack.c.l.b16 %v1122
      %v1251 = vunpack.c.l.b16 %v1123
      %v1252 = vunpack.c.l.b16 %v1124
      %v1253 = vunpack.c.l.b16 %v1125
      %v1254 = vunpack.c.l.b16 %v1126
      %v1255 = vunpack.c.l.b16 %v1127
      %v1256 = vunpack.c.l.b16 %v1128
      %v1257 = vunpack.c.l.b16 %v1129
      %v1258 = vunpack.c.l.b16 %v1130
      %v1259 = vunpack.c.l.b16 %v1131
      %v1260 = vunpack.c.l.b16 %v1132
      %v1261 = vunpack.c.l.b16 %v1133
      %v1262 = vunpack.c.l.b16 %v1134
      %v1263 = vunpack.c.l.b16 %v1135
      %v1264 = vunpack.c.l.b16 %v1136
      %v1265 = vunpack.c.l.b16 %v1137
      %v1266 = vunpack.c.l.b16 %v1138
      %v1267 = vunpack.c.l.b16 %v1139
      %v1268 = vunpack.c.l.b16 %v1140
      %v1269 = vunpack.c.l.b16 %v1141
      %v1270 = vunpack.c.l.b16 %v1142
      %v1271 = vunpack.c.l.b16 %v1143
      %v1272 = vunpack.c.l.b16 %v1144
      %v1273 = vunpack.c.l.b16 %v1145
      %v1274 = vunpack.c.l.b16 %v1146
      %v1275 = vunpack.c.l.b16 %v1147
      %v1276 = vunpack.c.l.b16 %v1148
      %v1277 = vunpack.c.l.b16 %v1149
      %v1278 = vunpack.c.l.b16 %v1150
      %v1279 = vunpack.c.l.b16 %v1151
      %v1280 = vunpack.c.l.b16 %v1152
      %v1281 = vunpack.c.l.b16 %v1153
      %v1282 = vunpack.c.l.b16 %v1154
      %v1283 = vunpack.c.l.b16 %v1155
      %v1284 = vunpack.c.l.b16 %v1156
      %v1285 = vunpack.c.l.b16 %v1157
      %v1286 = vunpack.c.l.b16 %v1158
      %v1287 = vunpack.c.l.b16 %v1159
      %v1288 = vunpack.c.l.b16 %v1160
      %v1289 = vunpack.c.l.b16 %v1161
      %v1290 = vpack.c.b16 %v1227, %v1226
      %v1291 = vpack.c.b16 %v1229, %v1228
      %v1292 = vpack.c.b16 %v1231, %v1230
      %v1293 = vpack.c.b16 %v1233, %v1232
      %v1294 = vpack.c.b16 %v1235, %v1234
      %v1295 = vpack.c.b16 %v1237, %v1236
      %v1296 = vpack.c.b16 %v1239, %v1238
      %v1297 = vpack.c.b16 %v1241, %v1240
      %v1298 = vpack.c.b16 %v1243, %v1242
      %v1299 = vpack.c.b16 %v1245, %v1244
      %v1300 = vpack.c.b16 %v1247, %v1246
      %v1301 = vpack.c.b16 %v1249, %v1248
      %v1302 = vpack.c.b16 %v1251, %v1250
      %v1303 = vpack.c.b16 %v1253, %v1252
      %v1304 = vpack.c.b16 %v1255, %v1254
      %v1305 = vpack.c.b16 %v1257, %v1256
      %v1306 = vpack.c.b16 %v1259, %v1258
      %v1307 = vpack.c.b16 %v1261, %v1260
      %v1308 = vpack.c.b16 %v1263, %v1262
      %v1309 = vpack.c.b16 %v1265, %v1264
      %v1310 = vpack.c.b16 %v1267, %v1266
      %v1311 = vpack.c.b16 %v1269, %v1268
      %v1312 = vpack.c.b16 %v1271, %v1270
      %v1313 = vpack.c.b16 %v1273, %v1272
      %v1314 = vpack.c.b16 %v1275, %v1274
      %v1315 = vpack.c.b16 %v1277, %v1276
      %v1316 = vpack.c.b16 %v1279, %v1278
      %v1317 = vpack.c.b16 %v1281, %v1280
      %v1318 = vpack.c.b16 %v1283, %v1282
      %v1319 = vpack.c.b16 %v1285, %v1284
      %v1320 = vpack.c.b16 %v1287, %v1286
      %v1321 = vpack.c.b16 %v1289, %v1288
      %vm1322 = vcmask 654336
      %v1324 = vsel %vm1322, %v1290, 0
      %v1327 = vsel %vm1322, %v1291, 0
      %v1330 = vsel %vm1322, %v1292, 0
      %v1333 = vsel %vm1322, %v1293, 0
      %v1336 = vsel %vm1322, %v1294, 0
      %v1339 = vsel %vm1322, %v1295, 0
      %v1342 = vsel %vm1322, %v1296, 0
      %v1345 = vsel %vm1322, %v1297, 0
      %v1348 = vsel %vm1322, %v1298, 0
      %v1351 = vsel %vm1322, %v1299, 0
      %v1354 = vsel %vm1322, %v1300, 0
      %v1357 = vsel %vm1322, %v1301, 0
      %v1360 = vsel %vm1322, %v1302, 0
      %v1363 = vsel %vm1322, %v1303, 0
      %v1366 = vsel %vm1322, %v1304, 0
      %v1369 = vsel %vm1322, %v1305, 0
      %v1372 = vsel %vm1322, %v1306, 0
      %v1375 = vsel %vm1322, %v1307, 0
      %v1378 = vsel %vm1322, %v1308, 0
      %v1381 = vsel %vm1322, %v1309, 0
      %v1384 = vsel %vm1322, %v1310, 0
      %v1387 = vsel %vm1322, %v1311, 0
      %v1390 = vsel %vm1322, %v1312, 0
      %v1393 = vsel %vm1322, %v1313, 0
      %v1396 = vsel %vm1322, %v1314, 0
      %v1399 = vsel %vm1322, %v1315, 0
      %v1402 = vsel %vm1322, %v1316, 0
      %v1405 = vsel %vm1322, %v1317, 0
      %v1408 = vsel %vm1322, %v1318, 0
      %v1411 = vsel %vm1322, %v1319, 0
      %v1414 = vsel %vm1322, %v1320, 0
      %v1417 = vsel %vm1322, %v1321, 0
      %1419 = vmatprep.subr.bf16.mxu0 0
      %1420 = vmatpush1.bf16.msra.mxu0 %v1093
      %1421 = vmatprep.subr.bf16.mxu0 0
      %1422 = vmatpush1.bf16.msra.mxu0 %v1094
      %1423 = vmatprep.subr.bf16.mxu0 0
      %1424 = vmatpush1.bf16.msra.mxu0 %v1095
      %1425 = vmatprep.subr.bf16.mxu0 0
      %1426 = vmatpush1.bf16.msra.mxu0 %v1096
      %1427 = vmatprep.subr.bf16.mxu0 0
      %1428 = vmatpush1.bf16.msra.mxu0 %v1097
      %1429 = vmatprep.subr.bf16.mxu0 0
      %1430 = vmatpush1.bf16.msra.mxu0 0
      %1431 = vmatprep.subr.bf16.mxu0 0
      %1432 = vmatpush1.bf16.msra.mxu0 0
      %1433 = vmatprep.subr.bf16.mxu0 0
      %1434 = vmatpush1.bf16.msra.mxu0 0
      %1435 = vmatprep.subr.bf16.mxu0 0
      %1436 = vmatpush1.bf16.msra.mxu0 0
      %1437 = vmatprep.subr.bf16.mxu0 0
      %1438 = vmatpush1.bf16.msra.mxu0 0
      %1439 = vmatprep.subr.bf16.mxu0 0
      %1440 = vmatpush1.bf16.msra.mxu0 0
      %1441 = vmatprep.subr.bf16.mxu0 0
      %1442 = vmatpush1.bf16.msra.mxu0 0
      %1443 = vmatprep.subr.bf16.mxu0 0
      %1444 = vmatpush1.bf16.msra.mxu0 0
      %1445 = vmatprep.subr.bf16.mxu0 0
      %1446 = vmatpush1.bf16.msra.mxu0 0
      %1447 = vmatprep.subr.bf16.mxu0 0
      %1448 = vmatpush1.bf16.msra.mxu0 0
      %1449 = vmatprep.subr.bf16.mxu0 0
      %1450 = vmatpush1.bf16.msra.mxu0 0
      %1451 = vmatprep.mubr.bf16.mxu0 0
      %1452 = vmatmul.mubr.bf16.gmra.mrb[0].mxu0 %v1324
      %v1453 = vpop.f32.mrb[0].mxu0
      %v1454 = vadd.f32 0.0, %v1453
      %v1455 = vpop.f32.mrb[0].mxu0
      %v1456 = vpop.f32.mrb[0].mxu0
      %v1457 = vadd.f32 0.0, %v1456
      %v1458 = vpop.f32.mrb[0].mxu0
      %1459 = vmatprep.mubr.bf16.mxu0 0
      %1460 = vmatmul.mubr.bf16.gmra.mrb[0].mxu0 %v1327
      %v1461 = vpop.f32.mrb[0].mxu0
      %v1462 = vadd.f32 0.0, %v1461
      %v1463 = vpop.f32.mrb[0].mxu0
      %v1464 = vpop.f32.mrb[0].mxu0
      %v1465 = vadd.f32 0.0, %v1464
      %v1466 = vpop.f32.mrb[0].mxu0
      %1467 = vmatprep.mubr.bf16.mxu0 0
      %1468 = vmatmul.mubr.bf16.gmra.mrb[0].mxu0 %v1330
      %v1469 = vpop.f32.mrb[0].mxu0
      %v1470 = vadd.f32 0.0, %v1469
      %v1471 = vpop.f32.mrb[0].mxu0
      %v1472 = vpop.f32.mrb[0].mxu0
      %v1473 = vadd.f32 0.0, %v1472
      %v1474 = vpop.f32.mrb[0].mxu0
      %1475 = vmatprep.mubr.bf16.mxu0 0
      %1476 = vmatmul.mubr.bf16.gmra.mrb[0].mxu0 %v1333
      %v1477 = vpop.f32.mrb[0].mxu0
      %v1478 = vadd.f32 0.0, %v1477
      %v1479 = vpop.f32.mrb[0].mxu0
      %v1480 = vpop.f32.mrb[0].mxu0
      %v1481 = vadd.f32 0.0, %v1480
      %v1482 = vpop.f32.mrb[0].mxu0
      %1483 = vmatprep.mubr.bf16.mxu0 0
      %1484 = vmatmul.mubr.bf16.gmra.mrb[0].mxu0 %v1336
      %v1485 = vpop.f32.mrb[0].mxu0
      %v1486 = vadd.f32 0.0, %v1485
      %v1487 = vpop.f32.mrb[0].mxu0
      %v1488 = vpop.f32.mrb[0].mxu0
      %v1489 = vadd.f32 0.0, %v1488
      %v1490 = vpop.f32.mrb[0].mxu0
      %1491 = vmatprep.mubr.bf16.mxu0 0
      %1492 = vmatmul.mubr.bf16.gmra.mrb[0].mxu0 %v1339
      %v1493 = vpop.f32.mrb[0].mxu0
      %v1494 = vadd.f32 0.0, %v1493
      %v1495 = vpop.f32.mrb[0].mxu0
      %v1496 = vpop.f32.mrb[0].mxu0
      %v1497 = vadd.f32 0.0, %v1496
      %v1498 = vpop.f32.mrb[0].mxu0
      %1499 = vmatprep.mubr.bf16.mxu0 0
      %1500 = vmatmul.mubr.bf16.gmra.mrb[0].mxu0 %v1342
      %v1501 = vpop.f32.mrb[0].mxu0
      %v1502 = vadd.f32 0.0, %v1501
      %v1503 = vpop.f32.mrb[0].mxu0
      %v1504 = vpop.f32.mrb[0].mxu0
      %v1505 = vadd.f32 0.0, %v1504
      %v1506 = vpop.f32.mrb[0].mxu0
      %1507 = vmatprep.mubr.bf16.mxu0 0
      %1508 = vmatmul.mubr.bf16.gmra.mrb[0].mxu0 %v1345
      %v1509 = vpop.f32.mrb[0].mxu0
      %v1510 = vadd.f32 0.0, %v1509
      %v1511 = vpop.f32.mrb[0].mxu0
      %v1512 = vpop.f32.mrb[0].mxu0
      %v1513 = vadd.f32 0.0, %v1512
      %v1514 = vpop.f32.mrb[0].mxu0
      %1515 = vmatprep.mubr.bf16.mxu0 0
      %1516 = vmatmul.mubr.bf16.gmra.mrb[0].mxu0 %v1348
      %v1517 = vpop.f32.mrb[0].mxu0
      %v1518 = vadd.f32 0.0, %v1517
      %v1519 = vpop.f32.mrb[0].mxu0
      %v1520 = vpop.f32.mrb[0].mxu0
      %v1521 = vadd.f32 0.0, %v1520
      %v1522 = vpop.f32.mrb[0].mxu0
      %1523 = vmatprep.mubr.bf16.mxu0 0
      %1524 = vmatmul.mubr.bf16.gmra.mrb[0].mxu0 %v1351
      %v1525 = vpop.f32.mrb[0].mxu0
      %v1526 = vadd.f32 0.0, %v1525
      %v1527 = vpop.f32.mrb[0].mxu0
      %v1528 = vpop.f32.mrb[0].mxu0
      %v1529 = vadd.f32 0.0, %v1528
      %v1530 = vpop.f32.mrb[0].mxu0
      %1531 = vmatprep.mubr.bf16.mxu0 0
      %1532 = vmatmul.mubr.bf16.gmra.mrb[0].mxu0 %v1354
      %v1533 = vpop.f32.mrb[0].mxu0
      %v1534 = vadd.f32 0.0, %v1533
      %v1535 = vpop.f32.mrb[0].mxu0
      %v1536 = vpop.f32.mrb[0].mxu0
      %v1537 = vadd.f32 0.0, %v1536
      %v1538 = vpop.f32.mrb[0].mxu0
      %1539 = vmatprep.mubr.bf16.mxu0 0
      %1540 = vmatmul.mubr.bf16.gmra.mrb[0].mxu0 %v1357
      %v1541 = vpop.f32.mrb[0].mxu0
      %v1542 = vadd.f32 0.0, %v1541
      %v1543 = vpop.f32.mrb[0].mxu0
      %v1544 = vpop.f32.mrb[0].mxu0
      %v1545 = vadd.f32 0.0, %v1544
      %v1546 = vpop.f32.mrb[0].mxu0
      %1547 = vmatprep.mubr.bf16.mxu0 0
      %1548 = vmatmul.mubr.bf16.gmra.mrb[0].mxu0 %v1360
      %v1549 = vpop.f32.mrb[0].mxu0
      %v1550 = vadd.f32 0.0, %v1549
      %v1551 = vpop.f32.mrb[0].mxu0
      %v1552 = vpop.f32.mrb[0].mxu0
      %v1553 = vadd.f32 0.0, %v1552
      %v1554 = vpop.f32.mrb[0].mxu0
      %1555 = vmatprep.mubr.bf16.mxu0 0
      %1556 = vmatmul.mubr.bf16.gmra.mrb[0].mxu0 %v1363
      %v1557 = vpop.f32.mrb[0].mxu0
      %v1558 = vadd.f32 0.0, %v1557
      %v1559 = vpop.f32.mrb[0].mxu0
      %v1560 = vpop.f32.mrb[0].mxu0
      %v1561 = vadd.f32 0.0, %v1560
      %v1562 = vpop.f32.mrb[0].mxu0
      %1563 = vmatprep.mubr.bf16.mxu0 0
      %1564 = vmatmul.mubr.bf16.gmra.mrb[0].mxu0 %v1366
      %v1565 = vpop.f32.mrb[0].mxu0
      %v1566 = vadd.f32 0.0, %v1565
      %v1567 = vpop.f32.mrb[0].mxu0
      %v1568 = vpop.f32.mrb[0].mxu0
      %v1569 = vadd.f32 0.0, %v1568
      %v1570 = vpop.f32.mrb[0].mxu0
      %1571 = vmatprep.mubr.bf16.mxu0 0
      %1572 = vmatmul.mubr.bf16.gmra.mrb[0].mxu0 %v1369
      %v1573 = vpop.f32.mrb[0].mxu0
      %v1574 = vadd.f32 0.0, %v1573
      %v1575 = vpop.f32.mrb[0].mxu0
      %v1576 = vpop.f32.mrb[0].mxu0
      %v1577 = vadd.f32 0.0, %v1576
      %v1578 = vpop.f32.mrb[0].mxu0
      %1579 = vmatprep.mubr.bf16.mxu0 0
      %1580 = vmatmul.mubr.bf16.gmra.mrb[0].mxu0 %v1372
      %v1581 = vpop.f32.mrb[0].mxu0
      %v1582 = vadd.f32 0.0, %v1581
      %v1583 = vpop.f32.mrb[0].mxu0
      %v1584 = vpop.f32.mrb[0].mxu0
      %v1585 = vadd.f32 0.0, %v1584
      %v1586 = vpop.f32.mrb[0].mxu0
      %1587 = vmatprep.mubr.bf16.mxu0 0
      %1588 = vmatmul.mubr.bf16.gmra.mrb[0].mxu0 %v1375
      %v1589 = vpop.f32.mrb[0].mxu0
      %v1590 = vadd.f32 0.0, %v1589
      %v1591 = vpop.f32.mrb[0].mxu0
      %v1592 = vpop.f32.mrb[0].mxu0
      %v1593 = vadd.f32 0.0, %v1592
      %v1594 = vpop.f32.mrb[0].mxu0
      %1595 = vmatprep.mubr.bf16.mxu0 0
      %1596 = vmatmul.mubr.bf16.gmra.mrb[0].mxu0 %v1378
      %v1597 = vpop.f32.mrb[0].mxu0
      %v1598 = vadd.f32 0.0, %v1597
      %v1599 = vpop.f32.mrb[0].mxu0
      %v1600 = vpop.f32.mrb[0].mxu0
      %v1601 = vadd.f32 0.0, %v1600
      %v1602 = vpop.f32.mrb[0].mxu0
      %1603 = vmatprep.mubr.bf16.mxu0 0
      %1604 = vmatmul.mubr.bf16.gmra.mrb[0].mxu0 %v1381
      %v1605 = vpop.f32.mrb[0].mxu0
      %v1606 = vadd.f32 0.0, %v1605
      %v1607 = vpop.f32.mrb[0].mxu0
      %v1608 = vpop.f32.mrb[0].mxu0
      %v1609 = vadd.f32 0.0, %v1608
      %v1610 = vpop.f32.mrb[0].mxu0
      %1611 = vmatprep.mubr.bf16.mxu0 0
      %1612 = vmatmul.mubr.bf16.gmra.mrb[0].mxu0 %v1384
      %v1613 = vpop.f32.mrb[0].mxu0
      %v1614 = vadd.f32 0.0, %v1613
      %v1615 = vpop.f32.mrb[0].mxu0
      %v1616 = vpop.f32.mrb[0].mxu0
      %v1617 = vadd.f32 0.0, %v1616
      %v1618 = vpop.f32.mrb[0].mxu0
      %1619 = vmatprep.mubr.bf16.mxu0 0
      %1620 = vmatmul.mubr.bf16.gmra.mrb[0].mxu0 %v1387
      %v1621 = vpop.f32.mrb[0].mxu0
      %v1622 = vadd.f32 0.0, %v1621
      %v1623 = vpop.f32.mrb[0].mxu0
      %v1624 = vpop.f32.mrb[0].mxu0
      %v1625 = vadd.f32 0.0, %v1624
      %v1626 = vpop.f32.mrb[0].mxu0
      %1627 = vmatprep.mubr.bf16.mxu0 0
      %1628 = vmatmul.mubr.bf16.gmra.mrb[0].mxu0 %v1390
      %v1629 = vpop.f32.mrb[0].mxu0
      %v1630 = vadd.f32 0.0, %v1629
      %v1631 = vpop.f32.mrb[0].mxu0
      %v1632 = vpop.f32.mrb[0].mxu0
      %v1633 = vadd.f32 0.0, %v1632
      %v1634 = vpop.f32.mrb[0].mxu0
      %1635 = vmatprep.mubr.bf16.mxu0 0
      %1636 = vmatmul.mubr.bf16.gmra.mrb[0].mxu0 %v1393
      %v1637 = vpop.f32.mrb[0].mxu0
      %v1638 = vadd.f32 0.0, %v1637
      %v1639 = vpop.f32.mrb[0].mxu0
      %v1640 = vpop.f32.mrb[0].mxu0
      %v1641 = vadd.f32 0.0, %v1640
      %v1642 = vpop.f32.mrb[0].mxu0
      %1643 = vmatprep.mubr.bf16.mxu0 0
      %1644 = vmatmul.mubr.bf16.gmra.mrb[0].mxu0 %v1396
      %v1645 = vpop.f32.mrb[0].mxu0
      %v1646 = vadd.f32 0.0, %v1645
      %v1647 = vpop.f32.mrb[0].mxu0
      %v1648 = vpop.f32.mrb[0].mxu0
      %v1649 = vadd.f32 0.0, %v1648
      %v1650 = vpop.f32.mrb[0].mxu0
      %1651 = vmatprep.mubr.bf16.mxu0 0
      %1652 = vmatmul.mubr.bf16.gmra.mrb[0].mxu0 %v1399
      %v1653 = vpop.f32.mrb[0].mxu0
      %v1654 = vadd.f32 0.0, %v1653
      %v1655 = vpop.f32.mrb[0].mxu0
      %v1656 = vpop.f32.mrb[0].mxu0
      %v1657 = vadd.f32 0.0, %v1656
      %v1658 = vpop.f32.mrb[0].mxu0
      %1659 = vmatprep.mubr.bf16.mxu0 0
      %1660 = vmatmul.mubr.bf16.gmra.mrb[0].mxu0 %v1402
      %v1661 = vpop.f32.mrb[0].mxu0
      %v1662 = vadd.f32 0.0, %v1661
      %v1663 = vpop.f32.mrb[0].mxu0
      %v1664 = vpop.f32.mrb[0].mxu0
      %v1665 = vadd.f32 0.0, %v1664
      %v1666 = vpop.f32.mrb[0].mxu0
      %1667 = vmatprep.mubr.bf16.mxu0 0
      %1668 = vmatmul.mubr.bf16.gmra.mrb[0].mxu0 %v1405
      %v1669 = vpop.f32.mrb[0].mxu0
      %v1670 = vadd.f32 0.0, %v1669
      %v1671 = vpop.f32.mrb[0].mxu0
      %v1672 = vpop.f32.mrb[0].mxu0
      %v1673 = vadd.f32 0.0, %v1672
      %v1674 = vpop.f32.mrb[0].mxu0
      %1675 = vmatprep.mubr.bf16.mxu0 0
      %1676 = vmatmul.mubr.bf16.gmra.mrb[0].mxu0 %v1408
      %v1677 = vpop.f32.mrb[0].mxu0
      %v1678 = vadd.f32 0.0, %v1677
      %v1679 = vpop.f32.mrb[0].mxu0
      %v1680 = vpop.f32.mrb[0].mxu0
      %v1681 = vadd.f32 0.0, %v1680
      %v1682 = vpop.f32.mrb[0].mxu0
      %1683 = vmatprep.mubr.bf16.mxu0 0
      %1684 = vmatmul.mubr.bf16.gmra.mrb[0].mxu0 %v1411
      %v1685 = vpop.f32.mrb[0].mxu0
      %v1686 = vadd.f32 0.0, %v1685
      %v1687 = vpop.f32.mrb[0].mxu0
      %v1688 = vpop.f32.mrb[0].mxu0
      %v1689 = vadd.f32 0.0, %v1688
      %v1690 = vpop.f32.mrb[0].mxu0
      %1691 = vmatprep.mubr.bf16.mxu0 0
      %1692 = vmatmul.mubr.bf16.gmra.mrb[0].mxu0 %v1414
      %v1693 = vpop.f32.mrb[0].mxu0
      %v1694 = vadd.f32 0.0, %v1693
      %v1695 = vpop.f32.mrb[0].mxu0
      %v1696 = vpop.f32.mrb[0].mxu0
      %v1697 = vadd.f32 0.0, %v1696
      %v1698 = vpop.f32.mrb[0].mxu0
      %1699 = vmatprep.mubr.bf16.mxu0 0
      %1700 = vmatmul.mubr.bf16.gmra.mrb[0].mxu0 %v1417
      %v1701 = vpop.f32.mrb[0].mxu0
      %v1702 = vadd.f32 0.0, %v1701
      %v1703 = vpop.f32.mrb[0].mxu0
      %v1704 = vpop.f32.mrb[0].mxu0
      %v1705 = vadd.f32 0.0, %v1704
      %v1706 = vpop.f32.mrb[0].mxu0
      %1707 = vdwg.mxu0
      %v1708 = vld [vmem:[%s7] sm:$0xff]
      %v1709 = vld [vmem:[%s7 + $0x8] sm:$0xff]
      %v1710 = vld [vmem:[%s7 + $0x10] sm:$0xff]
      %v1711 = vld [vmem:[%s7 + $0x18] sm:$0xff]
      %v1712 = vld [vmem:[%s7 + $0x20] sm:$0xff]
      %v1713 = vld [vmem:[%s7 + $0x28] sm:$0xff]
      %v1714 = vld [vmem:[%s7 + $0x30] sm:$0xff]
      %v1715 = vld [vmem:[%s7 + $0x38] sm:$0xff]
      %v1716 = vld [vmem:[%s7 + $0x40] sm:$0xff]
      %v1717 = vld [vmem:[%s7 + $0x48] sm:$0xff]
      %v1718 = vld [vmem:[%s7 + $0x50] sm:$0xff]
      %v1719 = vld [vmem:[%s7 + $0x58] sm:$0xff]
      %v1720 = vld [vmem:[%s7 + $0x60] sm:$0xff]
      %v1721 = vld [vmem:[%s7 + $0x68] sm:$0xff]
      %v1722 = vld [vmem:[%s7 + $0x70] sm:$0xff]
      %v1723 = vld [vmem:[%s7 + $0x78] sm:$0xff]
      %v1724 = vld [vmem:[%s7 + $0x80] sm:$0xff]
      %v1725 = vld [vmem:[%s7 + $0x88] sm:$0xff]
      %v1726 = vld [vmem:[%s7 + $0x90] sm:$0xff]
      %v1727 = vld [vmem:[%s7 + $0x98] sm:$0xff]
      %v1728 = vld [vmem:[%s7 + $0xa0] sm:$0xff]
      %v1729 = vld [vmem:[%s7 + $0xa8] sm:$0xff]
      %v1730 = vld [vmem:[%s7 + $0xb0] sm:$0xff]
      %v1731 = vld [vmem:[%s7 + $0xb8] sm:$0xff]
      %v1732 = vld [vmem:[%s7 + $0xc0] sm:$0xff]
      %v1733 = vld [vmem:[%s7 + $0xc8] sm:$0xff]
      %v1734 = vld [vmem:[%s7 + $0xd0] sm:$0xff]
      %v1735 = vld [vmem:[%s7 + $0xd8] sm:$0xff]
      %v1736 = vld [vmem:[%s7 + $0xe0] sm:$0xff]
      %v1737 = vld [vmem:[%s7 + $0xe8] sm:$0xff]
      %v1738 = vld [vmem:[%s7 + $0xf0] sm:$0xff]
      %v1739 = vld [vmem:[%s7 + $0xf8] sm:$0xff]
      %1741 = vset.pattern.permute.xlu0 0
      %1742 = vperm.xlu0 %1741, %v1708
      %v1743 = vpop.permute.xlu0 %1742
      %1746 = vset.pattern.permute.xlu0 0
      %1747 = vperm.xlu0 %1746, %v1709
      %v1748 = vpop.permute.xlu0 %1747
      %1751 = vset.pattern.permute.xlu0 0
      %1752 = vperm.xlu0 %1751, %v1710
      %v1753 = vpop.permute.xlu0 %1752
      %1756 = vset.pattern.permute.xlu0 0
      %1757 = vperm.xlu0 %1756, %v1711
      %v1758 = vpop.permute.xlu0 %1757
      %1761 = vset.pattern.permute.xlu0 0
      %1762 = vperm.xlu0 %1761, %v1712
      %v1763 = vpop.permute.xlu0 %1762
      %1766 = vset.pattern.permute.xlu0 0
      %1767 = vperm.xlu0 %1766, %v1713
      %v1768 = vpop.permute.xlu0 %1767
      %1771 = vset.pattern.permute.xlu0 0
      %1772 = vperm.xlu0 %1771, %v1714
      %v1773 = vpop.permute.xlu0 %1772
      %1776 = vset.pattern.permute.xlu0 0
      %1777 = vperm.xlu0 %1776, %v1715
      %v1778 = vpop.permute.xlu0 %1777
      %1781 = vset.pattern.permute.xlu0 0
      %1782 = vperm.xlu0 %1781, %v1716
      %v1783 = vpop.permute.xlu0 %1782
      %1786 = vset.pattern.permute.xlu0 0
      %1787 = vperm.xlu0 %1786, %v1717
      %v1788 = vpop.permute.xlu0 %1787
      %1791 = vset.pattern.permute.xlu0 0
      %1792 = vperm.xlu0 %1791, %v1718
      %v1793 = vpop.permute.xlu0 %1792
      %1796 = vset.pattern.permute.xlu0 0
      %1797 = vperm.xlu0 %1796, %v1719
      %v1798 = vpop.permute.xlu0 %1797
      %1801 = vset.pattern.permute.xlu0 0
      %1802 = vperm.xlu0 %1801, %v1720
      %v1803 = vpop.permute.xlu0 %1802
      %1806 = vset.pattern.permute.xlu0 0
      %1807 = vperm.xlu0 %1806, %v1721
      %v1808 = vpop.permute.xlu0 %1807
      %1811 = vset.pattern.permute.xlu0 0
      %1812 = vperm.xlu0 %1811, %v1722
      %v1813 = vpop.permute.xlu0 %1812
      %1816 = vset.pattern.permute.xlu0 0
      %1817 = vperm.xlu0 %1816, %v1723
      %v1818 = vpop.permute.xlu0 %1817
      %1821 = vset.pattern.permute.xlu0 0
      %1822 = vperm.xlu0 %1821, %v1724
      %v1823 = vpop.permute.xlu0 %1822
      %1826 = vset.pattern.permute.xlu0 0
      %1827 = vperm.xlu0 %1826, %v1725
      %v1828 = vpop.permute.xlu0 %1827
      %1831 = vset.pattern.permute.xlu0 0
      %1832 = vperm.xlu0 %1831, %v1726
      %v1833 = vpop.permute.xlu0 %1832
      %1836 = vset.pattern.permute.xlu0 0
      %1837 = vperm.xlu0 %1836, %v1727
      %v1838 = vpop.permute.xlu0 %1837
      %1841 = vset.pattern.permute.xlu0 0
      %1842 = vperm.xlu0 %1841, %v1728
      %v1843 = vpop.permute.xlu0 %1842
      %1846 = vset.pattern.permute.xlu0 0
      %1847 = vperm.xlu0 %1846, %v1729
      %v1848 = vpop.permute.xlu0 %1847
      %1851 = vset.pattern.permute.xlu0 0
      %1852 = vperm.xlu0 %1851, %v1730
      %v1853 = vpop.permute.xlu0 %1852
      %1856 = vset.pattern.permute.xlu0 0
      %1857 = vperm.xlu0 %1856, %v1731
      %v1858 = vpop.permute.xlu0 %1857
      %1861 = vset.pattern.permute.xlu0 0
      %1862 = vperm.xlu0 %1861, %v1732
      %v1863 = vpop.permute.xlu0 %1862
      %1866 = vset.pattern.permute.xlu0 0
      %1867 = vperm.xlu0 %1866, %v1733
      %v1868 = vpop.permute.xlu0 %1867
      %1871 = vset.pattern.permute.xlu0 0
      %1872 = vperm.xlu0 %1871, %v1734
      %v1873 = vpop.permute.xlu0 %1872
      %1876 = vset.pattern.permute.xlu0 0
      %1877 = vperm.xlu0 %1876, %v1735
      %v1878 = vpop.permute.xlu0 %1877
      %1881 = vset.pattern.permute.xlu0 0
      %1882 = vperm.xlu0 %1881, %v1736
      %v1883 = vpop.permute.xlu0 %1882
      %1886 = vset.pattern.permute.xlu0 0
      %1887 = vperm.xlu0 %1886, %v1737
      %v1888 = vpop.permute.xlu0 %1887
      %1891 = vset.pattern.permute.xlu0 0
      %1892 = vperm.xlu0 %1891, %v1738
      %v1893 = vpop.permute.xlu0 %1892
      %1896 = vset.pattern.permute.xlu0 0
      %1897 = vperm.xlu0 %1896, %v1739
      %v1898 = vpop.permute.xlu0 %1897
      %v1900 = vadd.f32 %v1454, %v1743
      %v1901 = vadd.f32 %v1457, %v1748
      %v1902 = vadd.f32 %v1462, %v1753
      %v1903 = vadd.f32 %v1465, %v1758
      %v1904 = vadd.f32 %v1470, %v1763
      %v1905 = vadd.f32 %v1473, %v1768
      %v1906 = vadd.f32 %v1478, %v1773
      %v1907 = vadd.f32 %v1481, %v1778
      %v1908 = vadd.f32 %v1486, %v1783
      %v1909 = vadd.f32 %v1489, %v1788
      %v1910 = vadd.f32 %v1494, %v1793
      %v1911 = vadd.f32 %v1497, %v1798
      %v1912 = vadd.f32 %v1502, %v1803
      %v1913 = vadd.f32 %v1505, %v1808
      %v1914 = vadd.f32 %v1510, %v1813
      %v1915 = vadd.f32 %v1513, %v1818
      %v1916 = vadd.f32 %v1518, %v1823
      %v1917 = vadd.f32 %v1521, %v1828
      %v1918 = vadd.f32 %v1526, %v1833
      %v1919 = vadd.f32 %v1529, %v1838
      %v1920 = vadd.f32 %v1534, %v1843
      %v1921 = vadd.f32 %v1537, %v1848
      %v1922 = vadd.f32 %v1542, %v1853
      %v1923 = vadd.f32 %v1545, %v1858
      %v1924 = vadd.f32 %v1550, %v1863
      %v1925 = vadd.f32 %v1553, %v1868
      %v1926 = vadd.f32 %v1558, %v1873
      %v1927 = vadd.f32 %v1561, %v1878
      %v1928 = vadd.f32 %v1566, %v1883
      %v1929 = vadd.f32 %v1569, %v1888
      %v1930 = vadd.f32 %v1574, %v1893
      %v1931 = vadd.f32 %v1577, %v1898
      %v1932 = vlaneseq
      %v1933 = vand.u32 %v1932, 127
      %vm1934 = vcmp.lt.s32.totalorder %v1933, 16
      %v1935 = vsel %vm1934, %v1900, -3.4028235e+38
      %v1936 = vsel %vm1934, %v1901, -3.4028235e+38
      %v1937 = vsel %vm1934, %v1902, -3.4028235e+38
      %v1938 = vsel %vm1934, %v1903, -3.4028235e+38
      %v1939 = vsel %vm1934, %v1904, -3.4028235e+38
      %v1940 = vsel %vm1934, %v1905, -3.4028235e+38
      %v1941 = vsel %vm1934, %v1906, -3.4028235e+38
      %v1942 = vsel %vm1934, %v1907, -3.4028235e+38
      %v1943 = vsel %vm1934, %v1908, -3.4028235e+38
      %v1944 = vsel %vm1934, %v1909, -3.4028235e+38
      %v1945 = vsel %vm1934, %v1910, -3.4028235e+38
      %v1946 = vsel %vm1934, %v1911, -3.4028235e+38
      %v1947 = vsel %vm1934, %v1912, -3.4028235e+38
      %v1948 = vsel %vm1934, %v1913, -3.4028235e+38
      %v1949 = vsel %vm1934, %v1914, -3.4028235e+38
      %v1950 = vsel %vm1934, %v1915, -3.4028235e+38
      %v1951 = vsel %vm1934, %v1916, -3.4028235e+38
      %v1952 = vsel %vm1934, %v1917, -3.4028235e+38
      %v1953 = vsel %vm1934, %v1918, -3.4028235e+38
      %v1954 = vsel %vm1934, %v1919, -3.4028235e+38
      %v1955 = vsel %vm1934, %v1920, -3.4028235e+38
      %v1956 = vsel %vm1934, %v1921, -3.4028235e+38
      %v1957 = vsel %vm1934, %v1922, -3.4028235e+38
      %v1958 = vsel %vm1934, %v1923, -3.4028235e+38
      %v1959 = vsel %vm1934, %v1924, -3.4028235e+38
      %v1960 = vsel %vm1934, %v1925, -3.4028235e+38
      %v1961 = vsel %vm1934, %v1926, -3.4028235e+38
      %v1962 = vsel %vm1934, %v1927, -3.4028235e+38
      %v1963 = vsel %vm1934, %v1928, -3.4028235e+38
      %v1964 = vsel %vm1934, %v1929, -3.4028235e+38
      %v1965 = vsel %vm1934, %v1930, -3.4028235e+38
      %v1966 = vsel %vm1934, %v1931, -3.4028235e+38
      %1967 = vmax.xlane.f32.xlu0 %v1935
      %v1968 = vpop.xlane.xlu0 %1967
      %1969 = vmax.xlane.f32.xlu0 %v1936
      %v1970 = vpop.xlane.xlu0 %1969
      %1971 = vmax.xlane.f32.xlu0 %v1937
      %v1972 = vpop.xlane.xlu0 %1971
      %1973 = vmax.xlane.f32.xlu0 %v1938
      %v1974 = vpop.xlane.xlu0 %1973
      %1975 = vmax.xlane.f32.xlu0 %v1939
      %v1976 = vpop.xlane.xlu0 %1975
      %1977 = vmax.xlane.f32.xlu0 %v1940
      %v1978 = vpop.xlane.xlu0 %1977
      %1979 = vmax.xlane.f32.xlu0 %v1941
      %v1980 = vpop.xlane.xlu0 %1979
      %1981 = vmax.xlane.f32.xlu0 %v1942
      %v1982 = vpop.xlane.xlu0 %1981
      %1983 = vmax.xlane.f32.xlu0 %v1943
      %v1984 = vpop.xlane.xlu0 %1983
      %1985 = vmax.xlane.f32.xlu0 %v1944
      %v1986 = vpop.xlane.xlu0 %1985
      %1987 = vmax.xlane.f32.xlu0 %v1945
      %v1988 = vpop.xlane.xlu0 %1987
      %1989 = vmax.xlane.f32.xlu0 %v1946
      %v1990 = vpop.xlane.xlu0 %1989
      %1991 = vmax.xlane.f32.xlu0 %v1947
      %v1992 = vpop.xlane.xlu0 %1991
      %1993 = vmax.xlane.f32.xlu0 %v1948
      %v1994 = vpop.xlane.xlu0 %1993
      %1995 = vmax.xlane.f32.xlu0 %v1949
      %v1996 = vpop.xlane.xlu0 %1995
      %1997 = vmax.xlane.f32.xlu0 %v1950
      %v1998 = vpop.xlane.xlu0 %1997
      %1999 = vmax.xlane.f32.xlu0 %v1951
      %v2000 = vpop.xlane.xlu0 %1999
      %2001 = vmax.xlane.f32.xlu0 %v1952
      %v2002 = vpop.xlane.xlu0 %2001
      %2003 = vmax.xlane.f32.xlu0 %v1953
      %v2004 = vpop.xlane.xlu0 %2003
      %2005 = vmax.xlane.f32.xlu0 %v1954
      %v2006 = vpop.xlane.xlu0 %2005
      %2007 = vmax.xlane.f32.xlu0 %v1955
      %v2008 = vpop.xlane.xlu0 %2007
      %2009 = vmax.xlane.f32.xlu0 %v1956
      %v2010 = vpop.xlane.xlu0 %2009
      %2011 = vmax.xlane.f32.xlu0 %v1957
      %v2012 = vpop.xlane.xlu0 %2011
      %2013 = vmax.xlane.f32.xlu0 %v1958
      %v2014 = vpop.xlane.xlu0 %2013
      %2015 = vmax.xlane.f32.xlu0 %v1959
      %v2016 = vpop.xlane.xlu0 %2015
      %2017 = vmax.xlane.f32.xlu0 %v1960
      %v2018 = vpop.xlane.xlu0 %2017
      %2019 = vmax.xlane.f32.xlu0 %v1961
      %v2020 = vpop.xlane.xlu0 %2019
      %2021 = vmax.xlane.f32.xlu0 %v1962
      %v2022 = vpop.xlane.xlu0 %2021
      %2023 = vmax.xlane.f32.xlu0 %v1963
      %v2024 = vpop.xlane.xlu0 %2023
      %2025 = vmax.xlane.f32.xlu0 %v1964
      %v2026 = vpop.xlane.xlu0 %2025
      %2027 = vmax.xlane.f32.xlu0 %v1965
      %v2028 = vpop.xlane.xlu0 %2027
      %2029 = vmax.xlane.f32.xlu0 %v1966
      %v2030 = vpop.xlane.xlu0 %2029
      %v2031 = vld [vmem:[%s8] sm:$0xff]
      %v2032 = vld [vmem:[%s8 + $0x8] sm:$0xff]
      %v2033 = vld [vmem:[%s8 + $0x10] sm:$0xff]
      %v2034 = vld [vmem:[%s8 + $0x18] sm:$0xff]
      %v2035 = vld [vmem:[%s8 + $0x20] sm:$0xff]
      %v2036 = vld [vmem:[%s8 + $0x28] sm:$0xff]
      %v2037 = vld [vmem:[%s8 + $0x30] sm:$0xff]
      %v2038 = vld [vmem:[%s8 + $0x38] sm:$0xff]
      %v2039 = vld [vmem:[%s8 + $0x40] sm:$0xff]
      %v2040 = vld [vmem:[%s8 + $0x48] sm:$0xff]
      %v2041 = vld [vmem:[%s8 + $0x50] sm:$0xff]
      %v2042 = vld [vmem:[%s8 + $0x58] sm:$0xff]
      %v2043 = vld [vmem:[%s8 + $0x60] sm:$0xff]
      %v2044 = vld [vmem:[%s8 + $0x68] sm:$0xff]
      %v2045 = vld [vmem:[%s8 + $0x70] sm:$0xff]
      %v2046 = vld [vmem:[%s8 + $0x78] sm:$0xff]
      %v2047 = vld [vmem:[%s8 + $0x80] sm:$0xff]
      %v2048 = vld [vmem:[%s8 + $0x88] sm:$0xff]
      %v2049 = vld [vmem:[%s8 + $0x90] sm:$0xff]
      %v2050 = vld [vmem:[%s8 + $0x98] sm:$0xff]
      %v2051 = vld [vmem:[%s8 + $0xa0] sm:$0xff]
      %v2052 = vld [vmem:[%s8 + $0xa8] sm:$0xff]
      %v2053 = vld [vmem:[%s8 + $0xb0] sm:$0xff]
      %v2054 = vld [vmem:[%s8 + $0xb8] sm:$0xff]
      %v2055 = vld [vmem:[%s8 + $0xc0] sm:$0xff]
      %v2056 = vld [vmem:[%s8 + $0xc8] sm:$0xff]
      %v2057 = vld [vmem:[%s8 + $0xd0] sm:$0xff]
      %v2058 = vld [vmem:[%s8 + $0xd8] sm:$0xff]
      %v2059 = vld [vmem:[%s8 + $0xe0] sm:$0xff]
      %v2060 = vld [vmem:[%s8 + $0xe8] sm:$0xff]
      %v2061 = vld [vmem:[%s8 + $0xf0] sm:$0xff]
      %v2062 = vld [vmem:[%s8 + $0xf8] sm:$0xff]
      %v2063 = vpack.c.bf16 %v1970, %v1968
      %v2064 = vpack.c.bf16 %v1974, %v1972
      %v2065 = vpack.c.bf16 %v1978, %v1976
      %v2066 = vpack.c.bf16 %v1982, %v1980
      %v2067 = vpack.c.bf16 %v1986, %v1984
      %v2068 = vpack.c.bf16 %v1990, %v1988
      %v2069 = vpack.c.bf16 %v1994, %v1992
      %v2070 = vpack.c.bf16 %v1998, %v1996
      %v2071 = vpack.c.bf16 %v2002, %v2000
      %v2072 = vpack.c.bf16 %v2006, %v2004
      %v2073 = vpack.c.bf16 %v2010, %v2008
      %v2074 = vpack.c.bf16 %v2014, %v2012
      %v2075 = vpack.c.bf16 %v2018, %v2016
      %v2076 = vpack.c.bf16 %v2022, %v2020
      %v2077 = vpack.c.bf16 %v2026, %v2024
      %v2078 = vpack.c.bf16 %v2030, %v2028
      %v2111 = vunpack.c.l.b16 %v2031
      %v2112 = vunpack.c.h.b16 %v2031
      %v2113 = vunpack.c.l.b16 %v2032
      %v2114 = vunpack.c.h.b16 %v2032
      %v2115 = vunpack.c.l.b16 %v2033
      %v2116 = vunpack.c.h.b16 %v2033
      %v2117 = vunpack.c.l.b16 %v2034
      %v2118 = vunpack.c.h.b16 %v2034
      %v2119 = vunpack.c.l.b16 %v2035
      %v2120 = vunpack.c.h.b16 %v2035
      %v2121 = vunpack.c.l.b16 %v2036
      %v2122 = vunpack.c.h.b16 %v2036
      %v2123 = vunpack.c.l.b16 %v2037
      %v2124 = vunpack.c.h.b16 %v2037
      %v2125 = vunpack.c.l.b16 %v2038
      %v2126 = vunpack.c.h.b16 %v2038
      %v2127 = vunpack.c.l.b16 %v2039
      %v2128 = vunpack.c.h.b16 %v2039
      %v2129 = vunpack.c.l.b16 %v2040
      %v2130 = vunpack.c.h.b16 %v2040
      %v2131 = vunpack.c.l.b16 %v2041
      %v2132 = vunpack.c.h.b16 %v2041
      %v2133 = vunpack.c.l.b16 %v2042
      %v2134 = vunpack.c.h.b16 %v2042
      %v2135 = vunpack.c.l.b16 %v2043
      %v2136 = vunpack.c.h.b16 %v2043
      %v2137 = vunpack.c.l.b16 %v2044
      %v2138 = vunpack.c.h.b16 %v2044
      %v2139 = vunpack.c.l.b16 %v2045
      %v2140 = vunpack.c.h.b16 %v2045
      %v2141 = vunpack.c.l.b16 %v2046
      %v2142 = vunpack.c.h.b16 %v2046
      %v2143 = vunpack.c.l.b16 %v2047
      %v2144 = vunpack.c.h.b16 %v2047
      %v2145 = vunpack.c.l.b16 %v2048
      %v2146 = vunpack.c.h.b16 %v2048
      %v2147 = vunpack.c.l.b16 %v2049
      %v2148 = vunpack.c.h.b16 %v2049
      %v2149 = vunpack.c.l.b16 %v2050
      %v2150 = vunpack.c.h.b16 %v2050
      %v2151 = vunpack.c.l.b16 %v2051
      %v2152 = vunpack.c.h.b16 %v2051
      %v2153 = vunpack.c.l.b16 %v2052
      %v2154 = vunpack.c.h.b16 %v2052
      %v2155 = vunpack.c.l.b16 %v2053
      %v2156 = vunpack.c.h.b16 %v2053
      %v2157 = vunpack.c.l.b16 %v2054
      %v2158 = vunpack.c.h.b16 %v2054
      %v2159 = vunpack.c.l.b16 %v2055
      %v2160 = vunpack.c.h.b16 %v2055
      %v2161 = vunpack.c.l.b16 %v2056
      %v2162 = vunpack.c.h.b16 %v2056
      %v2163 = vunpack.c.l.b16 %v2057
      %v2164 = vunpack.c.h.b16 %v2057
      %v2165 = vunpack.c.l.b16 %v2058
      %v2166 = vunpack.c.h.b16 %v2058
      %v2167 = vunpack.c.l.b16 %v2059
      %v2168 = vunpack.c.h.b16 %v2059
      %v2169 = vunpack.c.l.b16 %v2060
      %v2170 = vunpack.c.h.b16 %v2060
      %v2171 = vunpack.c.l.b16 %v2061
      %v2172 = vunpack.c.h.b16 %v2061
      %v2173 = vunpack.c.l.b16 %v2062
      %v2174 = vunpack.c.h.b16 %v2062
      %v2175 = vpack.c.b16 %v2113, %v2111
      %v2176 = vpack.c.b16 %v2114, %v2112
      %v2177 = vpack.c.b16 %v2117, %v2115
      %v2178 = vpack.c.b16 %v2118, %v2116
      %v2179 = vpack.c.b16 %v2121, %v2119
      %v2180 = vpack.c.b16 %v2122, %v2120
      %v2181 = vpack.c.b16 %v2125, %v2123
      %v2182 = vpack.c.b16 %v2126, %v2124
      %v2183 = vpack.c.b16 %v2129, %v2127
      %v2184 = vpack.c.b16 %v2130, %v2128
      %v2185 = vpack.c.b16 %v2133, %v2131
      %v2186 = vpack.c.b16 %v2134, %v2132
      %v2187 = vpack.c.b16 %v2137, %v2135
      %v2188 = vpack.c.b16 %v2138, %v2136
      %v2189 = vpack.c.b16 %v2141, %v2139
      %v2190 = vpack.c.b16 %v2142, %v2140
      %v2191 = vpack.c.b16 %v2145, %v2143
      %v2192 = vpack.c.b16 %v2146, %v2144
      %v2193 = vpack.c.b16 %v2149, %v2147
      %v2194 = vpack.c.b16 %v2150, %v2148
      %v2195 = vpack.c.b16 %v2153, %v2151
      %v2196 = vpack.c.b16 %v2154, %v2152
      %v2197 = vpack.c.b16 %v2157, %v2155
      %v2198 = vpack.c.b16 %v2158, %v2156
      %v2199 = vpack.c.b16 %v2161, %v2159
      %v2200 = vpack.c.b16 %v2162, %v2160
      %v2201 = vpack.c.b16 %v2165, %v2163
      %v2202 = vpack.c.b16 %v2166, %v2164
      %v2203 = vpack.c.b16 %v2169, %v2167
      %v2204 = vpack.c.b16 %v2170, %v2168
      %v2205 = vpack.c.b16 %v2173, %v2171
      %v2206 = vpack.c.b16 %v2174, %v2172
      %2239 = vmatprep.subr.bf16.mxu0 0
      %2240 = vmatpush1.bf16.msra.mxu0 %v2063
      %2241 = vmatprep.subr.bf16.mxu0 0
      %2242 = vmatpush1.bf16.msra.mxu0 %v2064
      %2243 = vmatprep.subr.bf16.mxu0 0
      %2244 = vmatpush1.bf16.msra.mxu0 %v2065
      %2245 = vmatprep.subr.bf16.mxu0 0
      %2246 = vmatpush1.bf16.msra.mxu0 %v2066
      %2247 = vmatprep.subr.bf16.mxu0 0
      %2248 = vmatpush1.bf16.msra.mxu0 %v2067
      %2249 = vmatprep.subr.bf16.mxu0 0
      %2250 = vmatpush1.bf16.msra.mxu0 %v2068
      %2251 = vmatprep.subr.bf16.mxu0 0
      %2252 = vmatpush1.bf16.msra.mxu0 %v2069
      %2253 = vmatprep.subr.bf16.mxu0 0
      %2254 = vmatpush1.bf16.msra.mxu0 %v2070
      %2255 = vmatprep.subr.bf16.mxu0 0
      %2256 = vmatpush1.bf16.msra.mxu0 %v2071
      %2257 = vmatprep.subr.bf16.mxu0 0
      %2258 = vmatpush1.bf16.msra.mxu0 %v2072
      %2259 = vmatprep.subr.bf16.mxu0 0
      %2260 = vmatpush1.bf16.msra.mxu0 %v2073
      %2261 = vmatprep.subr.bf16.mxu0 0
      %2262 = vmatpush1.bf16.msra.mxu0 %v2074
      %2263 = vmatprep.subr.bf16.mxu0 0
      %2264 = vmatpush1.bf16.msra.mxu0 %v2075
      %2265 = vmatprep.subr.bf16.mxu0 0
      %2266 = vmatpush1.bf16.msra.mxu0 %v2076
      %2267 = vmatprep.subr.bf16.mxu0 0
      %2268 = vmatpush1.bf16.msra.mxu0 %v2077
      %2269 = vmatprep.subr.bf16.mxu0 0
      %2270 = vmatpush1.bf16.msra.mxu0 %v2078
      %2271 = vmatprep.mubr.bf16.mxu0 %v2176
      %2272 = vmatmul.mubr.bf16.gmra.mrb[0].mxu0 %v2175
      %v2273 = vpop.f32.mrb[0].mxu0
      %v2274 = vadd.f32 0.0, %v2273
      %v2275 = vpop.f32.mrb[0].mxu0
      %v2276 = vpop.f32.mrb[0].mxu0
      %v2277 = vadd.f32 0.0, %v2276
      %v2278 = vpop.f32.mrb[0].mxu0
      %2279 = vmatprep.mubr.bf16.mxu0 %v2178
      %2280 = vmatmul.mubr.bf16.gmra.mrb[0].mxu0 %v2177
      %v2281 = vpop.f32.mrb[0].mxu0
      %v2282 = vadd.f32 0.0, %v2281
      %v2283 = vpop.f32.mrb[0].mxu0
      %v2284 = vpop.f32.mrb[0].mxu0
      %v2285 = vadd.f32 0.0, %v2284
      %v2286 = vpop.f32.mrb[0].mxu0
      %2287 = vmatprep.mubr.bf16.mxu0 %v2180
      %2288 = vmatmul.mubr.bf16.gmra.mrb[0].mxu0 %v2179
      %v2289 = vpop.f32.mrb[0].mxu0
      %v2290 = vadd.f32 0.0, %v2289
      %v2291 = vpop.f32.mrb[0].mxu0
      %v2292 = vpop.f32.mrb[0].mxu0
      %v2293 = vadd.f32 0.0, %v2292
      %v2294 = vpop.f32.mrb[0].mxu0
      %2295 = vmatprep.mubr.bf16.mxu0 %v2182
      %2296 = vmatmul.mubr.bf16.gmra.mrb[0].mxu0 %v2181
      %v2297 = vpop.f32.mrb[0].mxu0
      %v2298 = vadd.f32 0.0, %v2297
      %v2299 = vpop.f32.mrb[0].mxu0
      %v2300 = vpop.f32.mrb[0].mxu0
      %v2301 = vadd.f32 0.0, %v2300
      %v2302 = vpop.f32.mrb[0].mxu0
      %2303 = vmatprep.mubr.bf16.mxu0 %v2184
      %2304 = vmatmul.mubr.bf16.gmra.mrb[0].mxu0 %v2183
      %v2305 = vpop.f32.mrb[0].mxu0
      %v2306 = vadd.f32 0.0, %v2305
      %v2307 = vpop.f32.mrb[0].mxu0
      %v2308 = vpop.f32.mrb[0].mxu0
      %v2309 = vadd.f32 0.0, %v2308
      %v2310 = vpop.f32.mrb[0].mxu0
      %2311 = vmatprep.mubr.bf16.mxu0 %v2186
      %2312 = vmatmul.mubr.bf16.gmra.mrb[0].mxu0 %v2185
      %v2313 = vpop.f32.mrb[0].mxu0
      %v2314 = vadd.f32 0.0, %v2313
      %v2315 = vpop.f32.mrb[0].mxu0
      %v2316 = vpop.f32.mrb[0].mxu0
      %v2317 = vadd.f32 0.0, %v2316
      %v2318 = vpop.f32.mrb[0].mxu0
      %2319 = vmatprep.mubr.bf16.mxu0 %v2188
      %2320 = vmatmul.mubr.bf16.gmra.mrb[0].mxu0 %v2187
      %v2321 = vpop.f32.mrb[0].mxu0
      %v2322 = vadd.f32 0.0, %v2321
      %v2323 = vpop.f32.mrb[0].mxu0
      %v2324 = vpop.f32.mrb[0].mxu0
      %v2325 = vadd.f32 0.0, %v2324
      %v2326 = vpop.f32.mrb[0].mxu0
      %2327 = vmatprep.mubr.bf16.mxu0 %v2190
      %2328 = vmatmul.mubr.bf16.gmra.mrb[0].mxu0 %v2189
      %v2329 = vpop.f32.mrb[0].mxu0
      %v2330 = vadd.f32 0.0, %v2329
      %v2331 = vpop.f32.mrb[0].mxu0
      %v2332 = vpop.f32.mrb[0].mxu0
      %v2333 = vadd.f32 0.0, %v2332
      %v2334 = vpop.f32.mrb[0].mxu0
      %2335 = vmatprep.mubr.bf16.mxu0 %v2192
      %2336 = vmatmul.mubr.bf16.gmra.mrb[0].mxu0 %v2191
      %v2337 = vpop.f32.mrb[0].mxu0
      %v2338 = vadd.f32 0.0, %v2337
      %v2339 = vpop.f32.mrb[0].mxu0
      %v2340 = vpop.f32.mrb[0].mxu0
      %v2341 = vadd.f32 0.0, %v2340
      %v2342 = vpop.f32.mrb[0].mxu0
      %2343 = vmatprep.mubr.bf16.mxu0 %v2194
      %2344 = vmatmul.mubr.bf16.gmra.mrb[0].mxu0 %v2193
      %v2345 = vpop.f32.mrb[0].mxu0
      %v2346 = vadd.f32 0.0, %v2345
      %v2347 = vpop.f32.mrb[0].mxu0
      %v2348 = vpop.f32.mrb[0].mxu0
      %v2349 = vadd.f32 0.0, %v2348
      %v2350 = vpop.f32.mrb[0].mxu0
      %2351 = vmatprep.mubr.bf16.mxu0 %v2196
      %2352 = vmatmul.mubr.bf16.gmra.mrb[0].mxu0 %v2195
      %v2353 = vpop.f32.mrb[0].mxu0
      %v2354 = vadd.f32 0.0, %v2353
      %v2355 = vpop.f32.mrb[0].mxu0
      %v2356 = vpop.f32.mrb[0].mxu0
      %v2357 = vadd.f32 0.0, %v2356
      %v2358 = vpop.f32.mrb[0].mxu0
      %2359 = vmatprep.mubr.bf16.mxu0 %v2198
      %2360 = vmatmul.mubr.bf16.gmra.mrb[0].mxu0 %v2197
      %v2361 = vpop.f32.mrb[0].mxu0
      %v2362 = vadd.f32 0.0, %v2361
      %v2363 = vpop.f32.mrb[0].mxu0
      %v2364 = vpop.f32.mrb[0].mxu0
      %v2365 = vadd.f32 0.0, %v2364
      %v2366 = vpop.f32.mrb[0].mxu0
      %2367 = vmatprep.mubr.bf16.mxu0 %v2200
      %2368 = vmatmul.mubr.bf16.gmra.mrb[0].mxu0 %v2199
      %v2369 = vpop.f32.mrb[0].mxu0
      %v2370 = vadd.f32 0.0, %v2369
      %v2371 = vpop.f32.mrb[0].mxu0
      %v2372 = vpop.f32.mrb[0].mxu0
      %v2373 = vadd.f32 0.0, %v2372
      %v2374 = vpop.f32.mrb[0].mxu0
      %2375 = vmatprep.mubr.bf16.mxu0 %v2202
      %2376 = vmatmul.mubr.bf16.gmra.mrb[0].mxu0 %v2201
      %v2377 = vpop.f32.mrb[0].mxu0
      %v2378 = vadd.f32 0.0, %v2377
      %v2379 = vpop.f32.mrb[0].mxu0
      %v2380 = vpop.f32.mrb[0].mxu0
      %v2381 = vadd.f32 0.0, %v2380
      %v2382 = vpop.f32.mrb[0].mxu0
      %2383 = vmatprep.mubr.bf16.mxu0 %v2204
      %2384 = vmatmul.mubr.bf16.gmra.mrb[0].mxu0 %v2203
      %v2385 = vpop.f32.mrb[0].mxu0
      %v2386 = vadd.f32 0.0, %v2385
      %v2387 = vpop.f32.mrb[0].mxu0
      %v2388 = vpop.f32.mrb[0].mxu0
      %v2389 = vadd.f32 0.0, %v2388
      %v2390 = vpop.f32.mrb[0].mxu0
      %2391 = vmatprep.mubr.bf16.mxu0 %v2206
      %2392 = vmatmul.mubr.bf16.gmra.mrb[0].mxu0 %v2205
      %v2393 = vpop.f32.mrb[0].mxu0
      %v2394 = vadd.f32 0.0, %v2393
      %v2395 = vpop.f32.mrb[0].mxu0
      %v2396 = vpop.f32.mrb[0].mxu0
      %v2397 = vadd.f32 0.0, %v2396
      %v2398 = vpop.f32.mrb[0].mxu0
      %2399 = vdwg.mxu0
      %2401 = vset.pattern.permute.xlu0 0
      %2402 = vperm.xlu0 %2401, %v2274
      %v2403 = vpop.permute.xlu0 %2402
      %2406 = vset.pattern.permute.xlu0 0
      %2407 = vperm.xlu0 %2406, %v2277
      %v2408 = vpop.permute.xlu0 %2407
      %2411 = vset.pattern.permute.xlu0 0
      %2412 = vperm.xlu0 %2411, %v2282
      %v2413 = vpop.permute.xlu0 %2412
      %2416 = vset.pattern.permute.xlu0 0
      %2417 = vperm.xlu0 %2416, %v2285
      %v2418 = vpop.permute.xlu0 %2417
      %2421 = vset.pattern.permute.xlu0 0
      %2422 = vperm.xlu0 %2421, %v2290
      %v2423 = vpop.permute.xlu0 %2422
      %2426 = vset.pattern.permute.xlu0 0
      %2427 = vperm.xlu0 %2426, %v2293
      %v2428 = vpop.permute.xlu0 %2427
      %2431 = vset.pattern.permute.xlu0 0
      %2432 = vperm.xlu0 %2431, %v2298
      %v2433 = vpop.permute.xlu0 %2432
      %2436 = vset.pattern.permute.xlu0 0
      %2437 = vperm.xlu0 %2436, %v2301
      %v2438 = vpop.permute.xlu0 %2437
      %2441 = vset.pattern.permute.xlu0 0
      %2442 = vperm.xlu0 %2441, %v2306
      %v2443 = vpop.permute.xlu0 %2442
      %2446 = vset.pattern.permute.xlu0 0
      %2447 = vperm.xlu0 %2446, %v2309
      %v2448 = vpop.permute.xlu0 %2447
      %2451 = vset.pattern.permute.xlu0 0
      %2452 = vperm.xlu0 %2451, %v2314
      %v2453 = vpop.permute.xlu0 %2452
      %2456 = vset.pattern.permute.xlu0 0
      %2457 = vperm.xlu0 %2456, %v2317
      %v2458 = vpop.permute.xlu0 %2457
      %2461 = vset.pattern.permute.xlu0 0
      %2462 = vperm.xlu0 %2461, %v2322
      %v2463 = vpop.permute.xlu0 %2462
      %2466 = vset.pattern.permute.xlu0 0
      %2467 = vperm.xlu0 %2466, %v2325
      %v2468 = vpop.permute.xlu0 %2467
      %2471 = vset.pattern.permute.xlu0 0
      %2472 = vperm.xlu0 %2471, %v2330
      %v2473 = vpop.permute.xlu0 %2472
      %2476 = vset.pattern.permute.xlu0 0
      %2477 = vperm.xlu0 %2476, %v2333
      %v2478 = vpop.permute.xlu0 %2477
      %2481 = vset.pattern.permute.xlu0 0
      %2482 = vperm.xlu0 %2481, %v2338
      %v2483 = vpop.permute.xlu0 %2482
      %2486 = vset.pattern.permute.xlu0 0
      %2487 = vperm.xlu0 %2486, %v2341
      %v2488 = vpop.permute.xlu0 %2487
      %2491 = vset.pattern.permute.xlu0 0
      %2492 = vperm.xlu0 %2491, %v2346
      %v2493 = vpop.permute.xlu0 %2492
      %2496 = vset.pattern.permute.xlu0 0
      %2497 = vperm.xlu0 %2496, %v2349
      %v2498 = vpop.permute.xlu0 %2497
      %2501 = vset.pattern.permute.xlu0 0
      %2502 = vperm.xlu0 %2501, %v2354
      %v2503 = vpop.permute.xlu0 %2502
      %2506 = vset.pattern.permute.xlu0 0
      %2507 = vperm.xlu0 %2506, %v2357
      %v2508 = vpop.permute.xlu0 %2507
      %2511 = vset.pattern.permute.xlu0 0
      %2512 = vperm.xlu0 %2511, %v2362
      %v2513 = vpop.permute.xlu0 %2512
      %2516 = vset.pattern.permute.xlu0 0
      %2517 = vperm.xlu0 %2516, %v2365
      %v2518 = vpop.permute.xlu0 %2517
      %2521 = vset.pattern.permute.xlu0 0
      %2522 = vperm.xlu0 %2521, %v2370
      %v2523 = vpop.permute.xlu0 %2522
      %2526 = vset.pattern.permute.xlu0 0
      %2527 = vperm.xlu0 %2526, %v2373
      %v2528 = vpop.permute.xlu0 %2527
      %2531 = vset.pattern.permute.xlu0 0
      %2532 = vperm.xlu0 %2531, %v2378
      %v2533 = vpop.permute.xlu0 %2532
      %2536 = vset.pattern.permute.xlu0 0
      %2537 = vperm.xlu0 %2536, %v2381
      %v2538 = vpop.permute.xlu0 %2537
      %2541 = vset.pattern.permute.xlu0 0
      %2542 = vperm.xlu0 %2541, %v2386
      %v2543 = vpop.permute.xlu0 %2542
      %2546 = vset.pattern.permute.xlu0 0
      %2547 = vperm.xlu0 %2546, %v2389
      %v2548 = vpop.permute.xlu0 %2547
      %2551 = vset.pattern.permute.xlu0 0
      %2552 = vperm.xlu0 %2551, %v2394
      %v2553 = vpop.permute.xlu0 %2552
      %2556 = vset.pattern.permute.xlu0 0
      %2557 = vperm.xlu0 %2556, %v2397
      %v2558 = vpop.permute.xlu0 %2557
      %v2560 = vadd.f32 %v1582, %v2403
      %v2561 = vadd.f32 %v1585, %v2408
      %v2562 = vadd.f32 %v1590, %v2413
      %v2563 = vadd.f32 %v1593, %v2418
      %v2564 = vadd.f32 %v1598, %v2423
      %v2565 = vadd.f32 %v1601, %v2428
      %v2566 = vadd.f32 %v1606, %v2433
      %v2567 = vadd.f32 %v1609, %v2438
      %v2568 = vadd.f32 %v1614, %v2443
      %v2569 = vadd.f32 %v1617, %v2448
      %v2570 = vadd.f32 %v1622, %v2453
      %v2571 = vadd.f32 %v1625, %v2458
      %v2572 = vadd.f32 %v1630, %v2463
      %v2573 = vadd.f32 %v1633, %v2468
      %v2574 = vadd.f32 %v1638, %v2473
      %v2575 = vadd.f32 %v1641, %v2478
      %v2576 = vadd.f32 %v1646, %v2483
      %v2577 = vadd.f32 %v1649, %v2488
      %v2578 = vadd.f32 %v1654, %v2493
      %v2579 = vadd.f32 %v1657, %v2498
      %v2580 = vadd.f32 %v1662, %v2503
      %v2581 = vadd.f32 %v1665, %v2508
      %v2582 = vadd.f32 %v1670, %v2513
      %v2583 = vadd.f32 %v1673, %v2518
      %v2584 = vadd.f32 %v1678, %v2523
      %v2585 = vadd.f32 %v1681, %v2528
      %v2586 = vadd.f32 %v1686, %v2533
      %v2587 = vadd.f32 %v1689, %v2538
      %v2588 = vadd.f32 %v1694, %v2543
      %v2589 = vadd.f32 %v1697, %v2548
      %v2590 = vadd.f32 %v1702, %v2553
      %v2591 = vadd.f32 %v1705, %v2558
      %v2592 = vld [vmem:[%s9] sm:$0xff]
      %v2593 = vld [vmem:[%s9 + $0x8] sm:$0xff]
      %v2594 = vld [vmem:[%s9 + $0x10] sm:$0xff]
      %v2595 = vld [vmem:[%s9 + $0x18] sm:$0xff]
      %v2596 = vld [vmem:[%s9 + $0x20] sm:$0xff]
      %v2597 = vld [vmem:[%s9 + $0x28] sm:$0xff]
      %v2598 = vld [vmem:[%s9 + $0x30] sm:$0xff]
      %v2599 = vld [vmem:[%s9 + $0x38] sm:$0xff]
      %v2600 = vld [vmem:[%s9 + $0x40] sm:$0xff]
      %v2601 = vld [vmem:[%s9 + $0x48] sm:$0xff]
      %v2602 = vld [vmem:[%s9 + $0x50] sm:$0xff]
      %v2603 = vld [vmem:[%s9 + $0x58] sm:$0xff]
      %v2604 = vld [vmem:[%s9 + $0x60] sm:$0xff]
      %v2605 = vld [vmem:[%s9 + $0x68] sm:$0xff]
      %v2606 = vld [vmem:[%s9 + $0x70] sm:$0xff]
      %v2607 = vld [vmem:[%s9 + $0x78] sm:$0xff]
      %v2608 = vld [vmem:[%s9 + $0x80] sm:$0xff]
      %v2609 = vld [vmem:[%s9 + $0x88] sm:$0xff]
      %v2610 = vld [vmem:[%s9 + $0x90] sm:$0xff]
      %v2611 = vld [vmem:[%s9 + $0x98] sm:$0xff]
      %v2612 = vld [vmem:[%s9 + $0xa0] sm:$0xff]
      %v2613 = vld [vmem:[%s9 + $0xa8] sm:$0xff]
      %v2614 = vld [vmem:[%s9 + $0xb0] sm:$0xff]
      %v2615 = vld [vmem:[%s9 + $0xb8] sm:$0xff]
      %v2616 = vld [vmem:[%s9 + $0xc0] sm:$0xff]
      %v2617 = vld [vmem:[%s9 + $0xc8] sm:$0xff]
      %v2618 = vld [vmem:[%s9 + $0xd0] sm:$0xff]
      %v2619 = vld [vmem:[%s9 + $0xd8] sm:$0xff]
      %v2620 = vld [vmem:[%s9 + $0xe0] sm:$0xff]
      %v2621 = vld [vmem:[%s9 + $0xe8] sm:$0xff]
      %v2622 = vld [vmem:[%s9 + $0xf0] sm:$0xff]
      %v2623 = vld [vmem:[%s9 + $0xf8] sm:$0xff]
      %2625 = vset.pattern.permute.xlu0 0
      %2626 = vperm.xlu0 %2625, %v2592
      %v2627 = vpop.permute.xlu0 %2626
      %2630 = vset.pattern.permute.xlu0 0
      %2631 = vperm.xlu0 %2630, %v2593
      %v2632 = vpop.permute.xlu0 %2631
      %2635 = vset.pattern.permute.xlu0 0
      %2636 = vperm.xlu0 %2635, %v2594
      %v2637 = vpop.permute.xlu0 %2636
      %2640 = vset.pattern.permute.xlu0 0
      %2641 = vperm.xlu0 %2640, %v2595
      %v2642 = vpop.permute.xlu0 %2641
      %2645 = vset.pattern.permute.xlu0 0
      %2646 = vperm.xlu0 %2645, %v2596
      %v2647 = vpop.permute.xlu0 %2646
      %2650 = vset.pattern.permute.xlu0 0
      %2651 = vperm.xlu0 %2650, %v2597
      %v2652 = vpop.permute.xlu0 %2651
      %2655 = vset.pattern.permute.xlu0 0
      %2656 = vperm.xlu0 %2655, %v2598
      %v2657 = vpop.permute.xlu0 %2656
      %2660 = vset.pattern.permute.xlu0 0
      %2661 = vperm.xlu0 %2660, %v2599
      %v2662 = vpop.permute.xlu0 %2661
      %2665 = vset.pattern.permute.xlu0 0
      %2666 = vperm.xlu0 %2665, %v2600
      %v2667 = vpop.permute.xlu0 %2666
      %2670 = vset.pattern.permute.xlu0 0
      %2671 = vperm.xlu0 %2670, %v2601
      %v2672 = vpop.permute.xlu0 %2671
      %2675 = vset.pattern.permute.xlu0 0
      %2676 = vperm.xlu0 %2675, %v2602
      %v2677 = vpop.permute.xlu0 %2676
      %2680 = vset.pattern.permute.xlu0 0
      %2681 = vperm.xlu0 %2680, %v2603
      %v2682 = vpop.permute.xlu0 %2681
      %2685 = vset.pattern.permute.xlu0 0
      %2686 = vperm.xlu0 %2685, %v2604
      %v2687 = vpop.permute.xlu0 %2686
      %2690 = vset.pattern.permute.xlu0 0
      %2691 = vperm.xlu0 %2690, %v2605
      %v2692 = vpop.permute.xlu0 %2691
      %2695 = vset.pattern.permute.xlu0 0
      %2696 = vperm.xlu0 %2695, %v2606
      %v2697 = vpop.permute.xlu0 %2696
      %2700 = vset.pattern.permute.xlu0 0
      %2701 = vperm.xlu0 %2700, %v2607
      %v2702 = vpop.permute.xlu0 %2701
      %2705 = vset.pattern.permute.xlu0 0
      %2706 = vperm.xlu0 %2705, %v2608
      %v2707 = vpop.permute.xlu0 %2706
      %2710 = vset.pattern.permute.xlu0 0
      %2711 = vperm.xlu0 %2710, %v2609
      %v2712 = vpop.permute.xlu0 %2711
      %2715 = vset.pattern.permute.xlu0 0
      %2716 = vperm.xlu0 %2715, %v2610
      %v2717 = vpop.permute.xlu0 %2716
      %2720 = vset.pattern.permute.xlu0 0
      %2721 = vperm.xlu0 %2720, %v2611
      %v2722 = vpop.permute.xlu0 %2721
      %2725 = vset.pattern.permute.xlu0 0
      %2726 = vperm.xlu0 %2725, %v2612
      %v2727 = vpop.permute.xlu0 %2726
      %2730 = vset.pattern.permute.xlu0 0
      %2731 = vperm.xlu0 %2730, %v2613
      %v2732 = vpop.permute.xlu0 %2731
      %2735 = vset.pattern.permute.xlu0 0
      %2736 = vperm.xlu0 %2735, %v2614
      %v2737 = vpop.permute.xlu0 %2736
      %2740 = vset.pattern.permute.xlu0 0
      %2741 = vperm.xlu0 %2740, %v2615
      %v2742 = vpop.permute.xlu0 %2741
      %2745 = vset.pattern.permute.xlu0 0
      %2746 = vperm.xlu0 %2745, %v2616
      %v2747 = vpop.permute.xlu0 %2746
      %2750 = vset.pattern.permute.xlu0 0
      %2751 = vperm.xlu0 %2750, %v2617
      %v2752 = vpop.permute.xlu0 %2751
      %2755 = vset.pattern.permute.xlu0 0
      %2756 = vperm.xlu0 %2755, %v2618
      %v2757 = vpop.permute.xlu0 %2756
      %2760 = vset.pattern.permute.xlu0 0
      %2761 = vperm.xlu0 %2760, %v2619
      %v2762 = vpop.permute.xlu0 %2761
      %2765 = vset.pattern.permute.xlu0 0
      %2766 = vperm.xlu0 %2765, %v2620
      %v2767 = vpop.permute.xlu0 %2766
      %2770 = vset.pattern.permute.xlu0 0
      %2771 = vperm.xlu0 %2770, %v2621
      %v2772 = vpop.permute.xlu0 %2771
      %2775 = vset.pattern.permute.xlu0 0
      %2776 = vperm.xlu0 %2775, %v2622
      %v2777 = vpop.permute.xlu0 %2776
      %2780 = vset.pattern.permute.xlu0 0
      %2781 = vperm.xlu0 %2780, %v2623
      %v2782 = vpop.permute.xlu0 %2781
      %v2784 = vadd.f32 %v2560, %v2627
      %v2785 = vadd.f32 %v2561, %v2632
      %v2786 = vadd.f32 %v2562, %v2637
      %v2787 = vadd.f32 %v2563, %v2642
      %v2788 = vadd.f32 %v2564, %v2647
      %v2789 = vadd.f32 %v2565, %v2652
      %v2790 = vadd.f32 %v2566, %v2657
      %v2791 = vadd.f32 %v2567, %v2662
      %v2792 = vadd.f32 %v2568, %v2667
      %v2793 = vadd.f32 %v2569, %v2672
      %v2794 = vadd.f32 %v2570, %v2677
      %v2795 = vadd.f32 %v2571, %v2682
      %v2796 = vadd.f32 %v2572, %v2687
      %v2797 = vadd.f32 %v2573, %v2692
      %v2798 = vadd.f32 %v2574, %v2697
      %v2799 = vadd.f32 %v2575, %v2702
      %v2800 = vadd.f32 %v2576, %v2707
      %v2801 = vadd.f32 %v2577, %v2712
      %v2802 = vadd.f32 %v2578, %v2717
      %v2803 = vadd.f32 %v2579, %v2722
      %v2804 = vadd.f32 %v2580, %v2727
      %v2805 = vadd.f32 %v2581, %v2732
      %v2806 = vadd.f32 %v2582, %v2737
      %v2807 = vadd.f32 %v2583, %v2742
      %v2808 = vadd.f32 %v2584, %v2747
      %v2809 = vadd.f32 %v2585, %v2752
      %v2810 = vadd.f32 %v2586, %v2757
      %v2811 = vadd.f32 %v2587, %v2762
      %v2812 = vadd.f32 %v2588, %v2767
      %v2813 = vadd.f32 %v2589, %v2772
      %v2814 = vadd.f32 %v2590, %v2777
      %v2815 = vadd.f32 %v2591, %v2782
      %v2816 = vmax.f32 %v2784, 0.0
      %v2817 = vmax.f32 %v2785, 0.0
      %v2818 = vmax.f32 %v2786, 0.0
      %v2819 = vmax.f32 %v2787, 0.0
      %v2820 = vmax.f32 %v2788, 0.0
      %v2821 = vmax.f32 %v2789, 0.0
      %v2822 = vmax.f32 %v2790, 0.0
      %v2823 = vmax.f32 %v2791, 0.0
      %v2824 = vmax.f32 %v2792, 0.0
      %v2825 = vmax.f32 %v2793, 0.0
      %v2826 = vmax.f32 %v2794, 0.0
      %v2827 = vmax.f32 %v2795, 0.0
      %v2828 = vmax.f32 %v2796, 0.0
      %v2829 = vmax.f32 %v2797, 0.0
      %v2830 = vmax.f32 %v2798, 0.0
      %v2831 = vmax.f32 %v2799, 0.0
      %v2832 = vmax.f32 %v2800, 0.0
      %v2833 = vmax.f32 %v2801, 0.0
      %v2834 = vmax.f32 %v2802, 0.0
      %v2835 = vmax.f32 %v2803, 0.0
      %v2836 = vmax.f32 %v2804, 0.0
      %v2837 = vmax.f32 %v2805, 0.0
      %v2838 = vmax.f32 %v2806, 0.0
      %v2839 = vmax.f32 %v2807, 0.0
      %v2840 = vmax.f32 %v2808, 0.0
      %v2841 = vmax.f32 %v2809, 0.0
      %v2842 = vmax.f32 %v2810, 0.0
      %v2843 = vmax.f32 %v2811, 0.0
      %v2844 = vmax.f32 %v2812, 0.0
      %v2845 = vmax.f32 %v2813, 0.0
      %v2846 = vmax.f32 %v2814, 0.0
      %v2847 = vmax.f32 %v2815, 0.0
      %v2848 = vld [vmem:[%s10] sm:$0xff]
      %v2849 = vld [vmem:[%s10 + $0x8] sm:$0xff]
      %v2850 = vld [vmem:[%s10 + $0x10] sm:$0xff]
      %v2851 = vld [vmem:[%s10 + $0x18] sm:$0xff]
      %v2852 = vld [vmem:[%s10 + $0x20] sm:$0xff]
      %v2853 = vld [vmem:[%s10 + $0x28] sm:$0xff]
      %v2854 = vld [vmem:[%s10 + $0x30] sm:$0xff]
      %v2855 = vld [vmem:[%s10 + $0x38] sm:$0xff]
      %v2856 = vpack.c.bf16 %v2817, %v2816
      %v2857 = vpack.c.bf16 %v2819, %v2818
      %v2858 = vpack.c.bf16 %v2821, %v2820
      %v2859 = vpack.c.bf16 %v2823, %v2822
      %v2860 = vpack.c.bf16 %v2825, %v2824
      %v2861 = vpack.c.bf16 %v2827, %v2826
      %v2862 = vpack.c.bf16 %v2829, %v2828
      %v2863 = vpack.c.bf16 %v2831, %v2830
      %v2864 = vpack.c.bf16 %v2833, %v2832
      %v2865 = vpack.c.bf16 %v2835, %v2834
      %v2866 = vpack.c.bf16 %v2837, %v2836
      %v2867 = vpack.c.bf16 %v2839, %v2838
      %v2868 = vpack.c.bf16 %v2841, %v2840
      %v2869 = vpack.c.bf16 %v2843, %v2842
      %v2870 = vpack.c.bf16 %v2845, %v2844
      %v2871 = vpack.c.bf16 %v2847, %v2846
      %v2872 = vld [vmem:[%s11] sm:$0xff]
      %v2873 = vld [vmem:[%s11 + $0x8] sm:$0xff]
      %v2874 = vld [vmem:[%s11 + $0x10] sm:$0xff]
      %v2875 = vld [vmem:[%s11 + $0x18] sm:$0xff]
      %v2876 = vld [vmem:[%s11 + $0x20] sm:$0xff]
      %v2877 = vld [vmem:[%s11 + $0x28] sm:$0xff]
      %v2878 = vld [vmem:[%s11 + $0x30] sm:$0xff]
      %v2879 = vld [vmem:[%s11 + $0x38] sm:$0xff]
      %2881 = vset.pattern.permute.xlu0 0
      %2882 = vperm.xlu0 %2881, %v2872
      %v2883 = vpop.permute.xlu0 %2882
      %2886 = vset.pattern.permute.xlu0 0
      %2887 = vperm.xlu0 %2886, %v2873
      %v2888 = vpop.permute.xlu0 %2887
      %2891 = vset.pattern.permute.xlu0 0
      %2892 = vperm.xlu0 %2891, %v2874
      %v2893 = vpop.permute.xlu0 %2892
      %2896 = vset.pattern.permute.xlu0 0
      %2897 = vperm.xlu0 %2896, %v2875
      %v2898 = vpop.permute.xlu0 %2897
      %2901 = vset.pattern.permute.xlu0 0
      %2902 = vperm.xlu0 %2901, %v2876
      %v2903 = vpop.permute.xlu0 %2902
      %2906 = vset.pattern.permute.xlu0 0
      %2907 = vperm.xlu0 %2906, %v2877
      %v2908 = vpop.permute.xlu0 %2907
      %2911 = vset.pattern.permute.xlu0 0
      %2912 = vperm.xlu0 %2911, %v2878
      %v2913 = vpop.permute.xlu0 %2912
      %2916 = vset.pattern.permute.xlu0 0
      %2917 = vperm.xlu0 %2916, %v2879
      %v2918 = vpop.permute.xlu0 %2917
      %v2928 = vunpack.c.l.b16 %v2848
      %v2929 = vunpack.c.h.b16 %v2848
      %v2930 = vunpack.c.l.b16 %v2849
      %v2931 = vunpack.c.h.b16 %v2849
      %v2932 = vunpack.c.l.b16 %v2850
      %v2933 = vunpack.c.h.b16 %v2850
      %v2934 = vunpack.c.l.b16 %v2851
      %v2935 = vunpack.c.h.b16 %v2851
      %v2936 = vunpack.c.l.b16 %v2852
      %v2937 = vunpack.c.h.b16 %v2852
      %v2938 = vunpack.c.l.b16 %v2853
      %v2939 = vunpack.c.h.b16 %v2853
      %v2940 = vunpack.c.l.b16 %v2854
      %v2941 = vunpack.c.h.b16 %v2854
      %v2942 = vunpack.c.l.b16 %v2855
      %v2943 = vunpack.c.h.b16 %v2855
      %v2944 = vpack.c.b16 %v2930, %v2928
      %v2945 = vpack.c.b16 %v2931, %v2929
      %v2946 = vpack.c.b16 %v2934, %v2932
      %v2947 = vpack.c.b16 %v2935, %v2933
      %v2948 = vpack.c.b16 %v2938, %v2936
      %v2949 = vpack.c.b16 %v2939, %v2937
      %v2950 = vpack.c.b16 %v2942, %v2940
      %v2951 = vpack.c.b16 %v2943, %v2941
      %2960 = vmatprep.subr.bf16.mxu0 0
      %2961 = vmatpush1.bf16.msra.mxu0 %v2856
      %2962 = vmatprep.subr.bf16.mxu0 0
      %2963 = vmatpush1.bf16.msra.mxu0 %v2857
      %2964 = vmatprep.subr.bf16.mxu0 0
      %2965 = vmatpush1.bf16.msra.mxu0 %v2858
      %2966 = vmatprep.subr.bf16.mxu0 0
      %2967 = vmatpush1.bf16.msra.mxu0 %v2859
      %2968 = vmatprep.subr.bf16.mxu0 0
      %2969 = vmatpush1.bf16.msra.mxu0 %v2860
      %2970 = vmatprep.subr.bf16.mxu0 0
      %2971 = vmatpush1.bf16.msra.mxu0 %v2861
      %2972 = vmatprep.subr.bf16.mxu0 0
      %2973 = vmatpush1.bf16.msra.mxu0 %v2862
      %2974 = vmatprep.subr.bf16.mxu0 0
      %2975 = vmatpush1.bf16.msra.mxu0 %v2863
      %2976 = vmatprep.subr.bf16.mxu0 0
      %2977 = vmatpush1.bf16.msra.mxu0 %v2864
      %2978 = vmatprep.subr.bf16.mxu0 0
      %2979 = vmatpush1.bf16.msra.mxu0 %v2865
      %2980 = vmatprep.subr.bf16.mxu0 0
      %2981 = vmatpush1.bf16.msra.mxu0 %v2866
      %2982 = vmatprep.subr.bf16.mxu0 0
      %2983 = vmatpush1.bf16.msra.mxu0 %v2867
      %2984 = vmatprep.subr.bf16.mxu0 0
      %2985 = vmatpush1.bf16.msra.mxu0 %v2868
      %2986 = vmatprep.subr.bf16.mxu0 0
      %2987 = vmatpush1.bf16.msra.mxu0 %v2869
      %2988 = vmatprep.subr.bf16.mxu0 0
      %2989 = vmatpush1.bf16.msra.mxu0 %v2870
      %2990 = vmatprep.subr.bf16.mxu0 0
      %2991 = vmatpush1.bf16.msra.mxu0 %v2871
      %2992 = vmatprep.mubr.bf16.mxu0 %v2945
      %2993 = vmatmul.mubr.bf16.gmra.mrb[0].mxu0 %v2944
      %v2994 = vpop.f32.mrb[0].mxu0
      %v2995 = vadd.f32 %v2883, %v2994
      %v2996 = vpop.f32.mrb[0].mxu0
      %v2997 = vpop.f32.mrb[0].mxu0
      %v2998 = vadd.f32 %v2888, %v2997
      %v2999 = vpop.f32.mrb[0].mxu0
      %3000 = vmatprep.mubr.bf16.mxu0 %v2947
      %3001 = vmatmul.mubr.bf16.gmra.mrb[0].mxu0 %v2946
      %v3002 = vpop.f32.mrb[0].mxu0
      %v3003 = vadd.f32 %v2893, %v3002
      %v3004 = vpop.f32.mrb[0].mxu0
      %v3005 = vpop.f32.mrb[0].mxu0
      %v3006 = vadd.f32 %v2898, %v3005
      %v3007 = vpop.f32.mrb[0].mxu0
      %3008 = vmatprep.mubr.bf16.mxu0 %v2949
      %3009 = vmatmul.mubr.bf16.gmra.mrb[0].mxu0 %v2948
      %v3010 = vpop.f32.mrb[0].mxu0
      %v3011 = vadd.f32 %v2903, %v3010
      %v3012 = vpop.f32.mrb[0].mxu0
      %v3013 = vpop.f32.mrb[0].mxu0
      %v3014 = vadd.f32 %v2908, %v3013
      %v3015 = vpop.f32.mrb[0].mxu0
      %3016 = vmatprep.mubr.bf16.mxu0 %v2951
      %3017 = vmatmul.mubr.bf16.gmra.mrb[0].mxu0 %v2950
      %v3018 = vpop.f32.mrb[0].mxu0
      %v3019 = vadd.f32 %v2913, %v3018
      %v3020 = vpop.f32.mrb[0].mxu0
      %v3021 = vpop.f32.mrb[0].mxu0
      %v3022 = vadd.f32 %v2918, %v3021
      %v3023 = vpop.f32.mrb[0].mxu0
      %3024 = vdwg.mxu0
      %v3025 = vmax.f32 %v2995, 0.0
      %v3026 = vmax.f32 %v2998, 0.0
      %v3027 = vmax.f32 %v3003, 0.0
      %v3028 = vmax.f32 %v3006, 0.0
      %v3029 = vmax.f32 %v3011, 0.0
      %v3030 = vmax.f32 %v3014, 0.0
      %v3031 = vmax.f32 %v3019, 0.0
      %v3032 = vmax.f32 %v3022, 0.0
      %v3033 = vld [vmem:[%s12] sm:$0xf]
      %v3034 = vpack.c.bf16 %v3026, %v3025
      %v3035 = vpack.c.bf16 %v3028, %v3027
      %v3036 = vpack.c.bf16 %v3030, %v3029
      %v3037 = vpack.c.bf16 %v3032, %v3031
      %v3038 = vld [vmem:[%s13] sm:$0xff]
      %3040 = vset.pattern.permute.xlu0 0
      %3041 = vperm.xlu0 %3040, %v3038
      %v3042 = vpop.permute.xlu0 %3041
      %vm3044 = vcmask 523264
      %v3046 = vsel %vm3044, %v3033, 0
      %3048 = vmatprep.subr.bf16.mxu0 0
      %3049 = vmatpush1.bf16.msra.mxu0 %v3034
      %3050 = vmatprep.subr.bf16.mxu0 0
      %3051 = vmatpush1.bf16.msra.mxu0 %v3035
      %3052 = vmatprep.subr.bf16.mxu0 0
      %3053 = vmatpush1.bf16.msra.mxu0 %v3036
      %3054 = vmatprep.subr.bf16.mxu0 0
      %3055 = vmatpush1.bf16.msra.mxu0 %v3037
      %3056 = vmatprep.subr.bf16.mxu0 0
      %3057 = vmatpush1.bf16.msra.mxu0 0
      %3058 = vmatprep.subr.bf16.mxu0 0
      %3059 = vmatpush1.bf16.msra.mxu0 0
      %3060 = vmatprep.subr.bf16.mxu0 0
      %3061 = vmatpush1.bf16.msra.mxu0 0
      %3062 = vmatprep.subr.bf16.mxu0 0
      %3063 = vmatpush1.bf16.msra.mxu0 0
      %3064 = vmatprep.subr.bf16.mxu0 0
      %3065 = vmatpush1.bf16.msra.mxu0 0
      %3066 = vmatprep.subr.bf16.mxu0 0
      %3067 = vmatpush1.bf16.msra.mxu0 0
      %3068 = vmatprep.subr.bf16.mxu0 0
      %3069 = vmatpush1.bf16.msra.mxu0 0
      %3070 = vmatprep.subr.bf16.mxu0 0
      %3071 = vmatpush1.bf16.msra.mxu0 0
      %3072 = vmatprep.subr.bf16.mxu0 0
      %3073 = vmatpush1.bf16.msra.mxu0 0
      %3074 = vmatprep.subr.bf16.mxu0 0
      %3075 = vmatpush1.bf16.msra.mxu0 0
      %3076 = vmatprep.subr.bf16.mxu0 0
      %3077 = vmatpush1.bf16.msra.mxu0 0
      %3078 = vmatprep.subr.bf16.mxu0 0
      %3079 = vmatpush1.bf16.msra.mxu0 0
      %3080 = vmatprep.mubr.bf16.mxu0 0
      %3081 = vmatmul.mubr.bf16.gmra.mrb[0].mxu0 %v3046
      %v3082 = vpop.f32.mrb[0].mxu0
      %v3083 = vadd.f32 %v3042, %v3082
      %v3084 = vpop.f32.mrb[0].mxu0
      %v3085 = vpop.f32.mrb[0].mxu0
      %v3086 = vpop.f32.mrb[0].mxu0
      %3087 = vdwg.mxu0
      %3088 = vst [vmem:[%s462] sm:$0xff] %v3083
      %p3089 = scmp.lt.s32.totalorder %s25, 1
      %s3090 = scalar_select %p3089, %s25, 1
      %s3091 = smul.addr %s3090, 8
      %s3092 = scalar_lea.vmem %s14, %s3091
      // Predicated region
      $region77: #{gcn_forward.1} parent=75 // pred_check
        %p3093 = pneg %p342
      $region78: #{gcn_forward.1} parent=75 // pred_check_branch
        %3095 = sbr.rel (%p3093) target = $region80
      $region79: #{gcn_forward.1} parent=75 // pred_region
        _
      $region80: #{gcn_forward.1} parent=75 // pred_fallthru
        _
    $region76: #{gcn_forward.1} parent=5 // pred_fallthru
      _
    %p3096 = scmp.le.s32.totalorder 2, %s20
    // Predicated region
    $region81: #{gcn_forward.1} parent=5 // pred_check
      %p3097 = pneg %p3096
    $region82: #{gcn_forward.1} parent=5 // pred_check_branch
      %3099 = sbr.rel (%p3097) target = $region84
    $region83: #{gcn_forward.1} parent=5 // pred_region
      %s3100 = ssub.s32 %s20, 2
      // Predicated region
      $region85: #{gcn_forward.1} parent=83 // pred_check
        %p3101 = pneg %p348
      $region86: #{gcn_forward.1} parent=83 // pred_check_branch
        %3103 = sbr.rel (%p3101) target = $region88
      $region87: #{gcn_forward.1} parent=83 // pred_region
        %p3104 = scmp.lt.s32.totalorder %s26, 1
        %s3105 = scalar_select %p3104, %s26, 1
        %s3106 = smul.addr %s3105, 8
        %s3107 = scalar_lea.vmem %s14, %s3106
      $region88: #{gcn_forward.1} parent=83 // pred_fallthru
        _
    $region84: #{gcn_forward.1} parent=5 // pred_fallthru
      _
  $region6: #{gcn_forward.1} parent=0 // loop_footer
    %s24 = sadd.s32 1, %s20
  $region7: #{gcn_forward.1} parent=0 // loop_footer_branch
    %19 = sbr.rel target = $region3
  $region8: #{gcn_forward.1} parent=0 // loop_exit
    _

</llo_original>
